<compile_context>
chip_gen: v5e
topology: v5e:2x2
jax: 0.10.0
libtpu: 0.0.40
codegen_flags: <defaults>
</compile_context>

<pallas_src>
import jax
import jax.numpy as jnp
from jax.experimental import pallas as pl
from jax.experimental.pallas import tpu as pltpu


# ----------------------------- kernel helpers --------------------------------

def _reflect_pad1(t):
    """ReflectionPad2d(1) on a (H, W, C) channels-last tensor."""
    H, W = t.shape[0], t.shape[1]
    t = jnp.concatenate([t[1:2], t, t[H - 2:H - 1]], axis=0)          # rows
    t = jnp.concatenate([t[:, 1:2], t, t[:, W - 2:W - 1]], axis=1)    # cols
    return t


def _instance_norm(y, eps=1e-5):
    """InstanceNorm2d (affine=False, biased var, eps=1e-5) on (H*W, C)."""
    mu = jnp.mean(y, axis=0, keepdims=True)
    yc = y - mu
    var = jnp.mean(yc * yc, axis=0, keepdims=True)
    return yc * jax.lax.rsqrt(var + eps)


def _conv3x3(t, w_ref, b_ref):
    """Reflection-padded 3x3 conv: (H, W, C) -> (H*W, C_out), f32 accumulate."""
    H, W, C = t.shape
    tp = _reflect_pad1(t).astype(jnp.bfloat16)        # (H+2, W+2, C) bf16
    acc = jnp.zeros((H * W, w_ref.shape[-1]), jnp.float32)
    for di in range(3):                               # static unroll: 9 taps,
        for dj in range(3):                           # each a full-width matmul
            patch = tp[di:di + H, dj:dj + W, :].reshape(H * W, C)
            acc = acc + jnp.dot(patch, w_ref[di * 3 + dj],
                                preferred_element_type=jnp.float32)
    return acc + b_ref[0]


# --------------------------------- kernel ------------------------------------

def resblock_kernel(x_ref, w1_ref, b1_ref, w2_ref, b2_ref, o_ref):
    x = x_ref[0]                                      # (H, W, C) f32
    H, W, C = x.shape

    h = _instance_norm(_conv3x3(x, w1_ref, b1_ref))                   # conv1+IN1
    h = jnp.maximum(h, 0.0)                                           # ReLU
    h = _instance_norm(_conv3x3(h.reshape(H, W, C), w2_ref, b2_ref))  # conv2+IN2

    o_ref[0] = x + h.reshape(H, W, C)                                 # residual


# -------------------------------- wrapper -------------------------------------

def _residual_block_nhwc(x, w1, b1, w2, b2):
    B, H, W, C = x.shape

    def w_spec(a):
        # Constant-index weight/bias blocks, resident for the whole grid.
        # TODO(synk): at real model scale, add pipeline_mode=pl.Buffered(1) to
        # drop the useless double-buffering of these constant blocks.
        return pl.BlockSpec(a.shape, lambda b: (0,) * a.ndim)

    return pl.pallas_call(
        resblock_kernel,
        out_shape=jax.ShapeDtypeStruct((B, H, W, C), jnp.float32),
        grid_spec=pltpu.PrefetchScalarGridSpec(
            num_scalar_prefetch=0,
            grid=(B,),
            in_specs=[pl.BlockSpec((1, H, W, C), lambda b: (b, 0, 0, 0)),
                      w_spec(w1), w_spec(b1), w_spec(w2), w_spec(b2)],
            out_specs=pl.BlockSpec((1, H, W, C), lambda b: (b, 0, 0, 0))),
        compiler_params=pltpu.CompilerParams(
            dimension_semantics=("parallel",),          # batch across TCs (v7x)
            vmem_limit_bytes=64 * 1024 * 1024),
    )(x, w1, b1, w2, b2)


@jax.jit
def residual_block_forward(x_nchw, w1, b1, w2, b2):
    # PyTorch layout (B, C, H, W) in/out; kernel works channels-last so C is
    # the lane dim (the transposes are wrapper-side layout plumbing only).
    x = jnp.transpose(x_nchw, (0, 2, 3, 1))
    y = _residual_block_nhwc(x, w1, b1, w2, b2)
    return jnp.transpose(y, (0, 3, 1, 2))


# ------------------------------ parameter setup -------------------------------

def init_params(key, c):
    """Synthetic init in PyTorch OIHW layout, then pre-reshaped to
    (9, C_in, C_out) bf16 so each conv tap is a plain x @ W matmul."""
    k1, k2, k3, k4 = jax.random.split(key, 4)
    s = (9 * c) ** -0.5
    w1 = jax.random.normal(k1, (c, c, 3, 3), jnp.float32) * s   # OIHW
    b1 = jax.random.normal(k2, (c,), jnp.float32) * s
    w2 = jax.random.normal(k3, (c, c, 3, 3), jnp.float32) * s
    b2 = jax.random.normal(k4, (c,), jnp.float32) * s

    def prep(w):                                      # OIHW -> (9, I, O) bf16
        return jnp.transpose(w, (2, 3, 1, 0)).reshape(9, c, c).astype(jnp.bfloat16)

    return prep(w1), b1.reshape(1, c), prep(w2), b2.reshape(1, c)


# ----------------------------- pure-JAX reference -----------------------------

def reference_forward(x_nchw, w1, b1, w2, b2):
    """f32 reference of the PyTorch ResidualBlock (same bf16-derived weights)."""
    x = jnp.transpose(x_nchw, (0, 2, 3, 1))
    C = x.shape[-1]

    def conv_in(h, w, b):
        hp = jnp.pad(h, ((0, 0), (1, 1), (1, 1), (0, 0)), mode='reflect')
        wk = w.astype(jnp.float32).reshape(3, 3, C, C)            # HWIO
        y = jax.lax.conv_general_dilated(
            hp, wk, window_strides=(1, 1), padding='VALID',
            dimension_numbers=('NHWC', 'HWIO', 'NHWC'),
            precision=jax.lax.Precision.HIGHEST) + b[0]
        mu = jnp.mean(y, axis=(1, 2), keepdims=True)
        var = jnp.mean((y - mu) ** 2, axis=(1, 2), keepdims=True)
        return (y - mu) * jax.lax.rsqrt(var + 1e-5)

    h = jax.nn.relu(conv_in(x, w1, b1))
    h = conv_in(h, w2, b2)
    return jnp.transpose(x + h, (0, 3, 1, 2))


# ---------------------------------- main ---------------------------------------

if __name__ == "__main__":
    # Small but vreg/MXU-friendly: M = H*W = 256 rows, lane dim C = 128.
    B, C, H, W = 2, 128, 16, 16

    key = jax.random.PRNGKey(0)
    kx, kp = jax.random.split(key)
    x = jax.random.normal(kx, (B, C, H, W), jnp.float32)
    w1, b1, w2, b2 = init_params(kp, C)

    out = jax.block_until_ready(residual_block_forward(x, w1, b1, w2, b2))
    ref = jax.block_until_ready(reference_forward(x, w1, b1, w2, b2))

    assert out.shape == (B, C, H, W)
    assert bool(jnp.all(jnp.isfinite(out)))
    max_err = float(jnp.max(jnp.abs(out - ref)))
    assert jnp.allclose(out, ref, atol=2e-2, rtol=2e-2), f"max abs err {max_err}"
    print("KERNEL_OK")
</pallas_src>

<mosaic_0001>
module attributes {stable_mosaic.version = 11 : i64} {
  func.func @resblock_kernel(%arg0: i32, %arg1: memref<1x16x16x128xf32, #tpu.memory_space<vmem>>, %arg2: memref<9x128x128xbf16, #tpu.memory_space<vmem>>, %arg3: memref<1x128xf32, #tpu.memory_space<vmem>>, %arg4: memref<9x128x128xbf16, #tpu.memory_space<vmem>>, %arg5: memref<1x128xf32, #tpu.memory_space<vmem>>, %arg6: memref<1x16x16x128xf32, #tpu.memory_space<vmem>>) attributes {dimension_semantics = [#tpu.dimension_semantics<parallel>], iteration_bounds = array<i64: 2>, scalar_prefetch = 0 : i64, scratch_operands = 0 : i64, tpu.core_type = #tpu.core_type<tc>, window_params = [{transform_indices = @transform_0, window_bounds = array<i64: 1, 16, 16, 128>}, {pipeline_mode = #tpu.pipeline_mode<synchronous>, transform_indices = @transform_1, window_bounds = array<i64: 9, 128, 128>}, {pipeline_mode = #tpu.pipeline_mode<synchronous>, transform_indices = @transform_2, window_bounds = array<i64: 1, 128>}, {pipeline_mode = #tpu.pipeline_mode<synchronous>, transform_indices = @transform_3, window_bounds = array<i64: 9, 128, 128>}, {pipeline_mode = #tpu.pipeline_mode<synchronous>, transform_indices = @transform_4, window_bounds = array<i64: 1, 128>}, {transform_indices = @transform_5, window_bounds = array<i64: 1, 16, 16, 128>}]} {
    %c0 = arith.constant 0 : index
    %c0_0 = arith.constant 0 : index
    %c0_1 = arith.constant 0 : index
    %c0_2 = arith.constant 0 : index
    %0 = vector.load %arg1[%c0, %c0_0, %c0_1, %c0_2] : memref<1x16x16x128xf32, #tpu.memory_space<vmem>>, vector<1x16x16x128xf32>
    %1 = vector.shape_cast %0 : vector<1x16x16x128xf32> to vector<16x16x128xf32>
    %2 = vector.extract_strided_slice %1 {offsets = [1, 0, 0], sizes = [1, 16, 128], strides = [1, 1, 1]} : vector<16x16x128xf32> to vector<1x16x128xf32>
    %3 = vector.extract_strided_slice %1 {offsets = [14, 0, 0], sizes = [1, 16, 128], strides = [1, 1, 1]} : vector<16x16x128xf32> to vector<1x16x128xf32>
    %4 = tpu.concatenate %2, %1, %3 in 0 : vector<1x16x128xf32>, vector<16x16x128xf32>, vector<1x16x128xf32> -> vector<18x16x128xf32>
    %5 = vector.extract_strided_slice %4 {offsets = [0, 1, 0], sizes = [18, 1, 128], strides = [1, 1, 1]} : vector<18x16x128xf32> to vector<18x1x128xf32>
    %6 = vector.extract_strided_slice %4 {offsets = [0, 14, 0], sizes = [18, 1, 128], strides = [1, 1, 1]} : vector<18x16x128xf32> to vector<18x1x128xf32>
    %7 = tpu.concatenate %5, %4, %6 in 1 : vector<18x1x128xf32>, vector<18x16x128xf32>, vector<18x1x128xf32> -> vector<18x18x128xf32>
    %8 = arith.truncf %7 : vector<18x18x128xf32> to vector<18x18x128xbf16>
    %cst = arith.constant 0.000000e+00 : f32
    %9 = vector.broadcast %cst : f32 to vector<256x128xf32>
    %10 = vector.extract_strided_slice %8 {offsets = [0, 0, 0], sizes = [16, 16, 128], strides = [1, 1, 1]} : vector<18x18x128xbf16> to vector<16x16x128xbf16>
    %11 = vector.shape_cast %10 : vector<16x16x128xbf16> to vector<256x128xbf16>
    %c0_3 = arith.constant 0 : index
    %c0_4 = arith.constant 0 : index
    %c0_5 = arith.constant 0 : index
    %12 = vector.load %arg2[%c0_3, %c0_4, %c0_5] : memref<9x128x128xbf16, #tpu.memory_space<vmem>>, vector<1x128x128xbf16>
    %13 = vector.shape_cast %12 : vector<1x128x128xbf16> to vector<128x128xbf16>
    %cst_6 = arith.constant dense<0.000000e+00> : vector<256x128xf32>
    %14 = tpu.matmul %11, %13, %cst_6 {dimension_numbers = #tpu.dot_dimension_numbers<[1], [0], [0], [1], [0, 0, 1, 1], [], []>} : vector<256x128xbf16>, vector<128x128xbf16>, vector<256x128xf32> -> vector<256x128xf32>
    %15 = arith.addf %9, %14 : vector<256x128xf32>
    %16 = vector.extract_strided_slice %8 {offsets = [0, 1, 0], sizes = [16, 16, 128], strides = [1, 1, 1]} : vector<18x18x128xbf16> to vector<16x16x128xbf16>
    %17 = vector.shape_cast %16 : vector<16x16x128xbf16> to vector<256x128xbf16>
    %c1 = arith.constant 1 : index
    %c0_7 = arith.constant 0 : index
    %c0_8 = arith.constant 0 : index
    %18 = vector.load %arg2[%c1, %c0_7, %c0_8] : memref<9x128x128xbf16, #tpu.memory_space<vmem>>, vector<1x128x128xbf16>
    %19 = vector.shape_cast %18 : vector<1x128x128xbf16> to vector<128x128xbf16>
    %cst_9 = arith.constant dense<0.000000e+00> : vector<256x128xf32>
    %20 = tpu.matmul %17, %19, %cst_9 {dimension_numbers = #tpu.dot_dimension_numbers<[1], [0], [0], [1], [0, 0, 1, 1], [], []>} : vector<256x128xbf16>, vector<128x128xbf16>, vector<256x128xf32> -> vector<256x128xf32>
    %21 = arith.addf %15, %20 : vector<256x128xf32>
    %22 = vector.extract_strided_slice %8 {offsets = [0, 2, 0], sizes = [16, 16, 128], strides = [1, 1, 1]} : vector<18x18x128xbf16> to vector<16x16x128xbf16>
    %23 = vector.shape_cast %22 : vector<16x16x128xbf16> to vector<256x128xbf16>
    %c2 = arith.constant 2 : index
    %c0_10 = arith.constant 0 : index
    %c0_11 = arith.constant 0 : index
    %24 = vector.load %arg2[%c2, %c0_10, %c0_11] : memref<9x128x128xbf16, #tpu.memory_space<vmem>>, vector<1x128x128xbf16>
    %25 = vector.shape_cast %24 : vector<1x128x128xbf16> to vector<128x128xbf16>
    %cst_12 = arith.constant dense<0.000000e+00> : vector<256x128xf32>
    %26 = tpu.matmul %23, %25, %cst_12 {dimension_numbers = #tpu.dot_dimension_numbers<[1], [0], [0], [1], [0, 0, 1, 1], [], []>} : vector<256x128xbf16>, vector<128x128xbf16>, vector<256x128xf32> -> vector<256x128xf32>
    %27 = arith.addf %21, %26 : vector<256x128xf32>
    %28 = vector.extract_strided_slice %8 {offsets = [1, 0, 0], sizes = [16, 16, 128], strides = [1, 1, 1]} : vector<18x18x128xbf16> to vector<16x16x128xbf16>
    %29 = vector.shape_cast %28 : vector<16x16x128xbf16> to vector<256x128xbf16>
    %c3 = arith.constant 3 : index
    %c0_13 = arith.constant 0 : index
    %c0_14 = arith.constant 0 : index
    %30 = vector.load %arg2[%c3, %c0_13, %c0_14] : memref<9x128x128xbf16, #tpu.memory_space<vmem>>, vector<1x128x128xbf16>
    %31 = vector.shape_cast %30 : vector<1x128x128xbf16> to vector<128x128xbf16>
    %cst_15 = arith.constant dense<0.000000e+00> : vector<256x128xf32>
    %32 = tpu.matmul %29, %31, %cst_15 {dimension_numbers = #tpu.dot_dimension_numbers<[1], [0], [0], [1], [0, 0, 1, 1], [], []>} : vector<256x128xbf16>, vector<128x128xbf16>, vector<256x128xf32> -> vector<256x128xf32>
    %33 = arith.addf %27, %32 : vector<256x128xf32>
    %34 = vector.extract_strided_slice %8 {offsets = [1, 1, 0], sizes = [16, 16, 128], strides = [1, 1, 1]} : vector<18x18x128xbf16> to vector<16x16x128xbf16>
    %35 = vector.shape_cast %34 : vector<16x16x128xbf16> to vector<256x128xbf16>
    %c4 = arith.constant 4 : index
    %c0_16 = arith.constant 0 : index
    %c0_17 = arith.constant 0 : index
    %36 = vector.load %arg2[%c4, %c0_16, %c0_17] : memref<9x128x128xbf16, #tpu.memory_space<vmem>>, vector<1x128x128xbf16>
    %37 = vector.shape_cast %36 : vector<1x128x128xbf16> to vector<128x128xbf16>
    %cst_18 = arith.constant dense<0.000000e+00> : vector<256x128xf32>
    %38 = tpu.matmul %35, %37, %cst_18 {dimension_numbers = #tpu.dot_dimension_numbers<[1], [0], [0], [1], [0, 0, 1, 1], [], []>} : vector<256x128xbf16>, vector<128x128xbf16>, vector<256x128xf32> -> vector<256x128xf32>
    %39 = arith.addf %33, %38 : vector<256x128xf32>
    %40 = vector.extract_strided_slice %8 {offsets = [1, 2, 0], sizes = [16, 16, 128], strides = [1, 1, 1]} : vector<18x18x128xbf16> to vector<16x16x128xbf16>
    %41 = vector.shape_cast %40 : vector<16x16x128xbf16> to vector<256x128xbf16>
    %c5 = arith.constant 5 : index
    %c0_19 = arith.constant 0 : index
    %c0_20 = arith.constant 0 : index
    %42 = vector.load %arg2[%c5, %c0_19, %c0_20] : memref<9x128x128xbf16, #tpu.memory_space<vmem>>, vector<1x128x128xbf16>
    %43 = vector.shape_cast %42 : vector<1x128x128xbf16> to vector<128x128xbf16>
    %cst_21 = arith.constant dense<0.000000e+00> : vector<256x128xf32>
    %44 = tpu.matmul %41, %43, %cst_21 {dimension_numbers = #tpu.dot_dimension_numbers<[1], [0], [0], [1], [0, 0, 1, 1], [], []>} : vector<256x128xbf16>, vector<128x128xbf16>, vector<256x128xf32> -> vector<256x128xf32>
    %45 = arith.addf %39, %44 : vector<256x128xf32>
    %46 = vector.extract_strided_slice %8 {offsets = [2, 0, 0], sizes = [16, 16, 128], strides = [1, 1, 1]} : vector<18x18x128xbf16> to vector<16x16x128xbf16>
    %47 = vector.shape_cast %46 : vector<16x16x128xbf16> to vector<256x128xbf16>
    %c6 = arith.constant 6 : index
    %c0_22 = arith.constant 0 : index
    %c0_23 = arith.constant 0 : index
    %48 = vector.load %arg2[%c6, %c0_22, %c0_23] : memref<9x128x128xbf16, #tpu.memory_space<vmem>>, vector<1x128x128xbf16>
    %49 = vector.shape_cast %48 : vector<1x128x128xbf16> to vector<128x128xbf16>
    %cst_24 = arith.constant dense<0.000000e+00> : vector<256x128xf32>
    %50 = tpu.matmul %47, %49, %cst_24 {dimension_numbers = #tpu.dot_dimension_numbers<[1], [0], [0], [1], [0, 0, 1, 1], [], []>} : vector<256x128xbf16>, vector<128x128xbf16>, vector<256x128xf32> -> vector<256x128xf32>
    %51 = arith.addf %45, %50 : vector<256x128xf32>
    %52 = vector.extract_strided_slice %8 {offsets = [2, 1, 0], sizes = [16, 16, 128], strides = [1, 1, 1]} : vector<18x18x128xbf16> to vector<16x16x128xbf16>
    %53 = vector.shape_cast %52 : vector<16x16x128xbf16> to vector<256x128xbf16>
    %c7 = arith.constant 7 : index
    %c0_25 = arith.constant 0 : index
    %c0_26 = arith.constant 0 : index
    %54 = vector.load %arg2[%c7, %c0_25, %c0_26] : memref<9x128x128xbf16, #tpu.memory_space<vmem>>, vector<1x128x128xbf16>
    %55 = vector.shape_cast %54 : vector<1x128x128xbf16> to vector<128x128xbf16>
    %cst_27 = arith.constant dense<0.000000e+00> : vector<256x128xf32>
    %56 = tpu.matmul %53, %55, %cst_27 {dimension_numbers = #tpu.dot_dimension_numbers<[1], [0], [0], [1], [0, 0, 1, 1], [], []>} : vector<256x128xbf16>, vector<128x128xbf16>, vector<256x128xf32> -> vector<256x128xf32>
    %57 = arith.addf %51, %56 : vector<256x128xf32>
    %58 = vector.extract_strided_slice %8 {offsets = [2, 2, 0], sizes = [16, 16, 128], strides = [1, 1, 1]} : vector<18x18x128xbf16> to vector<16x16x128xbf16>
    %59 = vector.shape_cast %58 : vector<16x16x128xbf16> to vector<256x128xbf16>
    %c8 = arith.constant 8 : index
    %c0_28 = arith.constant 0 : index
    %c0_29 = arith.constant 0 : index
    %60 = vector.load %arg2[%c8, %c0_28, %c0_29] : memref<9x128x128xbf16, #tpu.memory_space<vmem>>, vector<1x128x128xbf16>
    %61 = vector.shape_cast %60 : vector<1x128x128xbf16> to vector<128x128xbf16>
    %cst_30 = arith.constant dense<0.000000e+00> : vector<256x128xf32>
    %62 = tpu.matmul %59, %61, %cst_30 {dimension_numbers = #tpu.dot_dimension_numbers<[1], [0], [0], [1], [0, 0, 1, 1], [], []>} : vector<256x128xbf16>, vector<128x128xbf16>, vector<256x128xf32> -> vector<256x128xf32>
    %63 = arith.addf %57, %62 : vector<256x128xf32>
    %c0_31 = arith.constant 0 : index
    %c0_32 = arith.constant 0 : index
    %64 = vector.load %arg3[%c0_31, %c0_32] : memref<1x128xf32, #tpu.memory_space<vmem>>, vector<1x128xf32>
    %65 = vector.shape_cast %64 : vector<1x128xf32> to vector<128xf32>
    %66 = vector.shape_cast %65 : vector<128xf32> to vector<1x128xf32>
    %67 = vector.broadcast %66 : vector<1x128xf32> to vector<256x128xf32>
    %68 = arith.addf %63, %67 : vector<256x128xf32>
    %cst_33 = arith.constant dense<0.000000e+00> : vector<128xf32>
    %69 = vector.multi_reduction <add>, %68, %cst_33 [0] : vector<256x128xf32> to vector<128xf32>
    %70 = vector.shape_cast %69 : vector<128xf32> to vector<1x128xf32>
    %cst_34 = arith.constant 2.560000e+02 : f32
    %71 = vector.broadcast %cst_34 : f32 to vector<1x128xf32>
    %72 = arith.divf %70, %71 : vector<1x128xf32>
    %73 = vector.broadcast %72 : vector<1x128xf32> to vector<256x128xf32>
    %74 = arith.subf %68, %73 : vector<256x128xf32>
    %75 = arith.mulf %74, %74 : vector<256x128xf32>
    %cst_35 = arith.constant dense<0.000000e+00> : vector<128xf32>
    %76 = vector.multi_reduction <add>, %75, %cst_35 [0] : vector<256x128xf32> to vector<128xf32>
    %77 = vector.shape_cast %76 : vector<128xf32> to vector<1x128xf32>
    %cst_36 = arith.constant 2.560000e+02 : f32
    %78 = vector.broadcast %cst_36 : f32 to vector<1x128xf32>
    %79 = arith.divf %77, %78 : vector<1x128xf32>
    %cst_37 = arith.constant 9.99999974E-6 : f32
    %80 = vector.broadcast %cst_37 : f32 to vector<1x128xf32>
    %81 = arith.addf %79, %80 : vector<1x128xf32>
    %82 = math.rsqrt %81 : vector<1x128xf32>
    %83 = vector.broadcast %82 : vector<1x128xf32> to vector<256x128xf32>
    %84 = arith.mulf %74, %83 : vector<256x128xf32>
    %cst_38 = arith.constant 0.000000e+00 : f32
    %85 = vector.broadcast %cst_38 : f32 to vector<256x128xf32>
    %86 = arith.maximumf %84, %85 : vector<256x128xf32>
    %87 = vector.shape_cast %86 : vector<256x128xf32> to vector<16x16x128xf32>
    %88 = vector.extract_strided_slice %87 {offsets = [1, 0, 0], sizes = [1, 16, 128], strides = [1, 1, 1]} : vector<16x16x128xf32> to vector<1x16x128xf32>
    %89 = vector.extract_strided_slice %87 {offsets = [14, 0, 0], sizes = [1, 16, 128], strides = [1, 1, 1]} : vector<16x16x128xf32> to vector<1x16x128xf32>
    %90 = tpu.concatenate %88, %87, %89 in 0 : vector<1x16x128xf32>, vector<16x16x128xf32>, vector<1x16x128xf32> -> vector<18x16x128xf32>
    %91 = vector.extract_strided_slice %90 {offsets = [0, 1, 0], sizes = [18, 1, 128], strides = [1, 1, 1]} : vector<18x16x128xf32> to vector<18x1x128xf32>
    %92 = vector.extract_strided_slice %90 {offsets = [0, 14, 0], sizes = [18, 1, 128], strides = [1, 1, 1]} : vector<18x16x128xf32> to vector<18x1x128xf32>
    %93 = tpu.concatenate %91, %90, %92 in 1 : vector<18x1x128xf32>, vector<18x16x128xf32>, vector<18x1x128xf32> -> vector<18x18x128xf32>
    %94 = arith.truncf %93 : vector<18x18x128xf32> to vector<18x18x128xbf16>
    %cst_39 = arith.constant 0.000000e+00 : f32
    %95 = vector.broadcast %cst_39 : f32 to vector<256x128xf32>
    %96 = vector.extract_strided_slice %94 {offsets = [0, 0, 0], sizes = [16, 16, 128], strides = [1, 1, 1]} : vector<18x18x128xbf16> to vector<16x16x128xbf16>
    %97 = vector.shape_cast %96 : vector<16x16x128xbf16> to vector<256x128xbf16>
    %c0_40 = arith.constant 0 : index
    %c0_41 = arith.constant 0 : index
    %c0_42 = arith.constant 0 : index
    %98 = vector.load %arg4[%c0_40, %c0_41, %c0_42] : memref<9x128x128xbf16, #tpu.memory_space<vmem>>, vector<1x128x128xbf16>
    %99 = vector.shape_cast %98 : vector<1x128x128xbf16> to vector<128x128xbf16>
    %cst_43 = arith.constant dense<0.000000e+00> : vector<256x128xf32>
    %100 = tpu.matmul %97, %99, %cst_43 {dimension_numbers = #tpu.dot_dimension_numbers<[1], [0], [0], [1], [0, 0, 1, 1], [], []>} : vector<256x128xbf16>, vector<128x128xbf16>, vector<256x128xf32> -> vector<256x128xf32>
    %101 = arith.addf %95, %100 : vector<256x128xf32>
    %102 = vector.extract_strided_slice %94 {offsets = [0, 1, 0], sizes = [16, 16, 128], strides = [1, 1, 1]} : vector<18x18x128xbf16> to vector<16x16x128xbf16>
    %103 = vector.shape_cast %102 : vector<16x16x128xbf16> to vector<256x128xbf16>
    %c1_44 = arith.constant 1 : index
    %c0_45 = arith.constant 0 : index
    %c0_46 = arith.constant 0 : index
    %104 = vector.load %arg4[%c1_44, %c0_45, %c0_46] : memref<9x128x128xbf16, #tpu.memory_space<vmem>>, vector<1x128x128xbf16>
    %105 = vector.shape_cast %104 : vector<1x128x128xbf16> to vector<128x128xbf16>
    %cst_47 = arith.constant dense<0.000000e+00> : vector<256x128xf32>
    %106 = tpu.matmul %103, %105, %cst_47 {dimension_numbers = #tpu.dot_dimension_numbers<[1], [0], [0], [1], [0, 0, 1, 1], [], []>} : vector<256x128xbf16>, vector<128x128xbf16>, vector<256x128xf32> -> vector<256x128xf32>
    %107 = arith.addf %101, %106 : vector<256x128xf32>
    %108 = vector.extract_strided_slice %94 {offsets = [0, 2, 0], sizes = [16, 16, 128], strides = [1, 1, 1]} : vector<18x18x128xbf16> to vector<16x16x128xbf16>
    %109 = vector.shape_cast %108 : vector<16x16x128xbf16> to vector<256x128xbf16>
    %c2_48 = arith.constant 2 : index
    %c0_49 = arith.constant 0 : index
    %c0_50 = arith.constant 0 : index
    %110 = vector.load %arg4[%c2_48, %c0_49, %c0_50] : memref<9x128x128xbf16, #tpu.memory_space<vmem>>, vector<1x128x128xbf16>
    %111 = vector.shape_cast %110 : vector<1x128x128xbf16> to vector<128x128xbf16>
    %cst_51 = arith.constant dense<0.000000e+00> : vector<256x128xf32>
    %112 = tpu.matmul %109, %111, %cst_51 {dimension_numbers = #tpu.dot_dimension_numbers<[1], [0], [0], [1], [0, 0, 1, 1], [], []>} : vector<256x128xbf16>, vector<128x128xbf16>, vector<256x128xf32> -> vector<256x128xf32>
    %113 = arith.addf %107, %112 : vector<256x128xf32>
    %114 = vector.extract_strided_slice %94 {offsets = [1, 0, 0], sizes = [16, 16, 128], strides = [1, 1, 1]} : vector<18x18x128xbf16> to vector<16x16x128xbf16>
    %115 = vector.shape_cast %114 : vector<16x16x128xbf16> to vector<256x128xbf16>
    %c3_52 = arith.constant 3 : index
    %c0_53 = arith.constant 0 : index
    %c0_54 = arith.constant 0 : index
    %116 = vector.load %arg4[%c3_52, %c0_53, %c0_54] : memref<9x128x128xbf16, #tpu.memory_space<vmem>>, vector<1x128x128xbf16>
    %117 = vector.shape_cast %116 : vector<1x128x128xbf16> to vector<128x128xbf16>
    %cst_55 = arith.constant dense<0.000000e+00> : vector<256x128xf32>
    %118 = tpu.matmul %115, %117, %cst_55 {dimension_numbers = #tpu.dot_dimension_numbers<[1], [0], [0], [1], [0, 0, 1, 1], [], []>} : vector<256x128xbf16>, vector<128x128xbf16>, vector<256x128xf32> -> vector<256x128xf32>
    %119 = arith.addf %113, %118 : vector<256x128xf32>
    %120 = vector.extract_strided_slice %94 {offsets = [1, 1, 0], sizes = [16, 16, 128], strides = [1, 1, 1]} : vector<18x18x128xbf16> to vector<16x16x128xbf16>
    %121 = vector.shape_cast %120 : vector<16x16x128xbf16> to vector<256x128xbf16>
    %c4_56 = arith.constant 4 : index
    %c0_57 = arith.constant 0 : index
    %c0_58 = arith.constant 0 : index
    %122 = vector.load %arg4[%c4_56, %c0_57, %c0_58] : memref<9x128x128xbf16, #tpu.memory_space<vmem>>, vector<1x128x128xbf16>
    %123 = vector.shape_cast %122 : vector<1x128x128xbf16> to vector<128x128xbf16>
    %cst_59 = arith.constant dense<0.000000e+00> : vector<256x128xf32>
    %124 = tpu.matmul %121, %123, %cst_59 {dimension_numbers = #tpu.dot_dimension_numbers<[1], [0], [0], [1], [0, 0, 1, 1], [], []>} : vector<256x128xbf16>, vector<128x128xbf16>, vector<256x128xf32> -> vector<256x128xf32>
    %125 = arith.addf %119, %124 : vector<256x128xf32>
    %126 = vector.extract_strided_slice %94 {offsets = [1, 2, 0], sizes = [16, 16, 128], strides = [1, 1, 1]} : vector<18x18x128xbf16> to vector<16x16x128xbf16>
    %127 = vector.shape_cast %126 : vector<16x16x128xbf16> to vector<256x128xbf16>
    %c5_60 = arith.constant 5 : index
    %c0_61 = arith.constant 0 : index
    %c0_62 = arith.constant 0 : index
    %128 = vector.load %arg4[%c5_60, %c0_61, %c0_62] : memref<9x128x128xbf16, #tpu.memory_space<vmem>>, vector<1x128x128xbf16>
    %129 = vector.shape_cast %128 : vector<1x128x128xbf16> to vector<128x128xbf16>
    %cst_63 = arith.constant dense<0.000000e+00> : vector<256x128xf32>
    %130 = tpu.matmul %127, %129, %cst_63 {dimension_numbers = #tpu.dot_dimension_numbers<[1], [0], [0], [1], [0, 0, 1, 1], [], []>} : vector<256x128xbf16>, vector<128x128xbf16>, vector<256x128xf32> -> vector<256x128xf32>
    %131 = arith.addf %125, %130 : vector<256x128xf32>
    %132 = vector.extract_strided_slice %94 {offsets = [2, 0, 0], sizes = [16, 16, 128], strides = [1, 1, 1]} : vector<18x18x128xbf16> to vector<16x16x128xbf16>
    %133 = vector.shape_cast %132 : vector<16x16x128xbf16> to vector<256x128xbf16>
    %c6_64 = arith.constant 6 : index
    %c0_65 = arith.constant 0 : index
    %c0_66 = arith.constant 0 : index
    %134 = vector.load %arg4[%c6_64, %c0_65, %c0_66] : memref<9x128x128xbf16, #tpu.memory_space<vmem>>, vector<1x128x128xbf16>
    %135 = vector.shape_cast %134 : vector<1x128x128xbf16> to vector<128x128xbf16>
    %cst_67 = arith.constant dense<0.000000e+00> : vector<256x128xf32>
    %136 = tpu.matmul %133, %135, %cst_67 {dimension_numbers = #tpu.dot_dimension_numbers<[1], [0], [0], [1], [0, 0, 1, 1], [], []>} : vector<256x128xbf16>, vector<128x128xbf16>, vector<256x128xf32> -> vector<256x128xf32>
    %137 = arith.addf %131, %136 : vector<256x128xf32>
    %138 = vector.extract_strided_slice %94 {offsets = [2, 1, 0], sizes = [16, 16, 128], strides = [1, 1, 1]} : vector<18x18x128xbf16> to vector<16x16x128xbf16>
    %139 = vector.shape_cast %138 : vector<16x16x128xbf16> to vector<256x128xbf16>
    %c7_68 = arith.constant 7 : index
    %c0_69 = arith.constant 0 : index
    %c0_70 = arith.constant 0 : index
    %140 = vector.load %arg4[%c7_68, %c0_69, %c0_70] : memref<9x128x128xbf16, #tpu.memory_space<vmem>>, vector<1x128x128xbf16>
    %141 = vector.shape_cast %140 : vector<1x128x128xbf16> to vector<128x128xbf16>
    %cst_71 = arith.constant dense<0.000000e+00> : vector<256x128xf32>
    %142 = tpu.matmul %139, %141, %cst_71 {dimension_numbers = #tpu.dot_dimension_numbers<[1], [0], [0], [1], [0, 0, 1, 1], [], []>} : vector<256x128xbf16>, vector<128x128xbf16>, vector<256x128xf32> -> vector<256x128xf32>
    %143 = arith.addf %137, %142 : vector<256x128xf32>
    %144 = vector.extract_strided_slice %94 {offsets = [2, 2, 0], sizes = [16, 16, 128], strides = [1, 1, 1]} : vector<18x18x128xbf16> to vector<16x16x128xbf16>
    %145 = vector.shape_cast %144 : vector<16x16x128xbf16> to vector<256x128xbf16>
    %c8_72 = arith.constant 8 : index
    %c0_73 = arith.constant 0 : index
    %c0_74 = arith.constant 0 : index
    %146 = vector.load %arg4[%c8_72, %c0_73, %c0_74] : memref<9x128x128xbf16, #tpu.memory_space<vmem>>, vector<1x128x128xbf16>
    %147 = vector.shape_cast %146 : vector<1x128x128xbf16> to vector<128x128xbf16>
    %cst_75 = arith.constant dense<0.000000e+00> : vector<256x128xf32>
    %148 = tpu.matmul %145, %147, %cst_75 {dimension_numbers = #tpu.dot_dimension_numbers<[1], [0], [0], [1], [0, 0, 1, 1], [], []>} : vector<256x128xbf16>, vector<128x128xbf16>, vector<256x128xf32> -> vector<256x128xf32>
    %149 = arith.addf %143, %148 : vector<256x128xf32>
    %c0_76 = arith.constant 0 : index
    %c0_77 = arith.constant 0 : index
    %150 = vector.load %arg5[%c0_76, %c0_77] : memref<1x128xf32, #tpu.memory_space<vmem>>, vector<1x128xf32>
    %151 = vector.shape_cast %150 : vector<1x128xf32> to vector<128xf32>
    %152 = vector.shape_cast %151 : vector<128xf32> to vector<1x128xf32>
    %153 = vector.broadcast %152 : vector<1x128xf32> to vector<256x128xf32>
    %154 = arith.addf %149, %153 : vector<256x128xf32>
    %cst_78 = arith.constant dense<0.000000e+00> : vector<128xf32>
    %155 = vector.multi_reduction <add>, %154, %cst_78 [0] : vector<256x128xf32> to vector<128xf32>
    %156 = vector.shape_cast %155 : vector<128xf32> to vector<1x128xf32>
    %cst_79 = arith.constant 2.560000e+02 : f32
    %157 = vector.broadcast %cst_79 : f32 to vector<1x128xf32>
    %158 = arith.divf %156, %157 : vector<1x128xf32>
    %159 = vector.broadcast %158 : vector<1x128xf32> to vector<256x128xf32>
    %160 = arith.subf %154, %159 : vector<256x128xf32>
    %161 = arith.mulf %160, %160 : vector<256x128xf32>
    %cst_80 = arith.constant dense<0.000000e+00> : vector<128xf32>
    %162 = vector.multi_reduction <add>, %161, %cst_80 [0] : vector<256x128xf32> to vector<128xf32>
    %163 = vector.shape_cast %162 : vector<128xf32> to vector<1x128xf32>
    %cst_81 = arith.constant 2.560000e+02 : f32
    %164 = vector.broadcast %cst_81 : f32 to vector<1x128xf32>
    %165 = arith.divf %163, %164 : vector<1x128xf32>
    %cst_82 = arith.constant 9.99999974E-6 : f32
    %166 = vector.broadcast %cst_82 : f32 to vector<1x128xf32>
    %167 = arith.addf %165, %166 : vector<1x128xf32>
    %168 = math.rsqrt %167 : vector<1x128xf32>
    %169 = vector.broadcast %168 : vector<1x128xf32> to vector<256x128xf32>
    %170 = arith.mulf %160, %169 : vector<256x128xf32>
    %171 = vector.shape_cast %170 : vector<256x128xf32> to vector<16x16x128xf32>
    %172 = arith.addf %1, %171 : vector<16x16x128xf32>
    %c0_83 = arith.constant 0 : index
    %c0_84 = arith.constant 0 : index
    %c0_85 = arith.constant 0 : index
    %c0_86 = arith.constant 0 : index
    %173 = vector.load %arg6[%c0_83, %c0_84, %c0_85, %c0_86] : memref<1x16x16x128xf32, #tpu.memory_space<vmem>>, vector<1x16x16x128xf32>
    %174 = vector.shape_cast %173 : vector<1x16x16x128xf32> to vector<16x16x128xf32>
    %175 = vector.shape_cast %172 : vector<16x16x128xf32> to vector<1x16x16x128xf32>
    tpu.vector_store %arg6[%c0_83, %c0_84, %c0_85, %c0_86], %175 {strides = array<i32>} : memref<1x16x16x128xf32, #tpu.memory_space<vmem>>, vector<1x16x16x128xf32>,
    return
  }
  func.func @transform_0(%arg0: i32) -> (i32, i32, i32, i32) {
    %c0_i32 = arith.constant 0 : i32
    %c0_i32_0 = arith.constant 0 : i32
    %c0_i32_1 = arith.constant 0 : i32
    %c0_i32_2 = arith.constant 0 : i32
    return %arg0, %c0_i32, %c0_i32_0, %c0_i32_1 : i32, i32, i32, i32
  }
  func.func @transform_1(%arg0: i32) -> (i32, i32, i32) {
    %c0_i32 = arith.constant 0 : i32
    %c0_i32_0 = arith.constant 0 : i32
    %c0_i32_1 = arith.constant 0 : i32
    %c0_i32_2 = arith.constant 0 : i32
    return %c0_i32, %c0_i32_0, %c0_i32_1 : i32, i32, i32
  }
  func.func @transform_2(%arg0: i32) -> (i32, i32) {
    %c0_i32 = arith.constant 0 : i32
    %c0_i32_0 = arith.constant 0 : i32
    %c0_i32_1 = arith.constant 0 : i32
    return %c0_i32, %c0_i32_0 : i32, i32
  }
  func.func @transform_3(%arg0: i32) -> (i32, i32, i32) {
    %c0_i32 = arith.constant 0 : i32
    %c0_i32_0 = arith.constant 0 : i32
    %c0_i32_1 = arith.constant 0 : i32
    %c0_i32_2 = arith.constant 0 : i32
    return %c0_i32, %c0_i32_0, %c0_i32_1 : i32, i32, i32
  }
  func.func @transform_4(%arg0: i32) -> (i32, i32) {
    %c0_i32 = arith.constant 0 : i32
    %c0_i32_0 = arith.constant 0 : i32
    %c0_i32_1 = arith.constant 0 : i32
    return %c0_i32, %c0_i32_0 : i32, i32
  }
  func.func @transform_5(%arg0: i32) -> (i32, i32, i32, i32) {
    %c0_i32 = arith.constant 0 : i32
    %c0_i32_0 = arith.constant 0 : i32
    %c0_i32_1 = arith.constant 0 : i32
    %c0_i32_2 = arith.constant 0 : i32
    return %arg0, %c0_i32, %c0_i32_0, %c0_i32_1 : i32, i32, i32, i32
  }
}

</mosaic_0001>

<llo_original>
// kernel: residual_block_forward.1
$region0: #{residual_block_forward.1}
  #allocation0 [shape = 'u32[]', space=smem, size = 0x4, offset = 0x4, fixed_abs, tag = 'smem constant byte address 0x4 - core index']
  #allocation1 [shape = 'u32[72,128]{1,0:T(1,128)}', space=vmem, size = 0x9000, scoped, tag = 'internal scratch']
  %s0 = inlined_call_operand.hbm [shape: f32[2,16,16,128], index: 0, kind: input, shape index: {}]
  %s1 = inlined_call_operand.hbm [shape: bf16[9,128,128], index: 1, kind: input, shape index: {}]
  %s2 = inlined_call_operand.vmem [shape: f32[1,128], index: 2, kind: input, shape index: {}]
  %s3 = inlined_call_operand.hbm [shape: bf16[9,128,128], index: 3, kind: input, shape index: {}]
  %s4 = inlined_call_operand.vmem [shape: f32[1,128], index: 4, kind: input, shape index: {}]
  %s5 = inlined_call_operand.hbm [shape: f32[2,16,16,128], index: 5, kind: output, shape index: {}]
  %s6 = sld [smem:[#allocation0]]
  $region65: #{residual_block_forward.1} parent=0
    _
  %s8 = ssub.s32 1, %s6
  %s9 = scalar_select 0, %s8, %s6
  $region1: #{residual_block_forward.1} parent=0
    #allocation2 [shape = 'u8[262144]{0}', space=vmem, size = 0x40000, scoped, tag = 'input window, operand 0']
    #allocation3 [shape = 's32[2]{0}', space=sflag, size = 0x8, scoped, tag = 'scoped memory for residual_block_forward.1']
    #allocation4 [shape = 's32[2]{0}', space=sflag, size = 0x8, scoped, tag = 'scoped memory for residual_block_forward.1']
    #allocation5 [shape = 'u8[294912]{0}', space=vmem, size = 0x48000, scoped, tag = 'input window, operand 1, single buffered']
    #allocation6 [shape = 's32[1]{0}', space=sflag, size = 0x4, scoped, tag = 'scoped memory for residual_block_forward.1']
    #allocation7 [shape = 'u8[294912]{0}', space=vmem, size = 0x48000, scoped, tag = 'input window, operand 3, single buffered']
    #allocation8 [shape = 'u8[262144]{0}', space=vmem, size = 0x40000, scoped, tag = 'output window, operand 0']
    %10 = vsyncpa [#allocation3], 0
    %s11 = scalar_lea.sflag [#allocation3], 1
    %12 = vsyncpa %s11, 0
    %13 = vsyncpa [#allocation6], 0
    %14 = vsyncpa [#allocation4], 0
    %s15 = scalar_lea.sflag [#allocation4], 1
    %16 = vsyncpa %s15, 0
    loop: start=0, step=1, limit=4
    $region2: #{residual_block_forward.1} parent=1 // loop_pre_header
      _
    $region3: #{residual_block_forward.1} parent=1 // loop_header
      %s18 = sphi 0, %s22
      %p19 = scmp.ge.s32.totalorder %s18, 4
      %s28 = sphi 0, %s30
      %s31 = sphi 0, %s28
      %s32 = sphi 0, %s31
      %s48 = sphi 0, %s32
      %s52 = sphi 0, %s52
      %s54 = sphi 0, %s52
      %s55 = sphi 0, %s54
      %s69 = sphi 0, %s55
      %s73 = sphi 0, %s73
      %s75 = sphi 0, %s73
      %s76 = sphi 0, %s75
      %s90 = sphi 0, %s76
      %s94 = sphi 0, %s94
      %s96 = sphi 0, %s94
      %s97 = sphi 0, %s96
      %s111 = sphi 0, %s97
      %s115 = sphi 0, %s115
      %s117 = sphi 0, %s115
      %s118 = sphi 0, %s117
      %s132 = sphi 0, %s118
      %s138 = sphi 0, %s140
      %s141 = sphi 0, %s138
      %s142 = sphi 0, %s141
      %s158 = sphi 0, %s142
    $region4: #{residual_block_forward.1} parent=1 // loop_header_branch
      %21 = sbr.rel (%p19) target = $region8
    $region5: #{residual_block_forward.1} parent=1 // loop_body
      %s23 = ssub.s32 %s18, 1
      %s24 = ssub.s32 %s18, 2
      %s25 = sadd.s32 %s18, 1
      %s26 = ssub.s32 %s18, %s25
      %p27 = scmp.eq.s32.totalorder %s26, 0
      %s29 = sadd.s32 %s28, 1
      %s30 = scalar_select %p27, %s28, %s29
      %p33 = pneg %p27
      %p34 = scmp.eq.s32.totalorder %s18, 1
      %p35 = por %p33, %p34
      %p36 = scmp.ne.s32.totalorder %s28, %s31
      %p37 = scmp.eq.s32.totalorder %s18, 0
      %p38 = por %p36, %p37
      %p39 = scmp.ne.s32.totalorder %s28, %s31
      %p40 = scmp.eq.s32.totalorder %s23, 1
      %p41 = por %p39, %p40
      %p42 = scmp.ne.s32.totalorder %s31, %s32
      %p43 = scmp.eq.s32.totalorder %s23, 0
      %p44 = por %p42, %p43
      %p45 = scmp.ne.s32.totalorder %s31, %s32
      %p46 = scmp.eq.s32.totalorder %s24, 1
      %p47 = por %p45, %p46
      %p49 = scmp.ne.s32.totalorder %s32, %s48
      %p50 = scmp.eq.s32.totalorder %s24, 0
      %p51 = por %p49, %p50
      %s53 = sadd.s32 %s52, 1
      %p56 = scmp.eq.s32.totalorder %s18, 1
      %p57 = scmp.ne.s32.totalorder %s52, %s54
      %p58 = scmp.eq.s32.totalorder %s18, 0
      %p59 = por %p57, %p58
      %p60 = scmp.ne.s32.totalorder %s52, %s54
      %p61 = scmp.eq.s32.totalorder %s23, 1
      %p62 = por %p60, %p61
      %p63 = scmp.ne.s32.totalorder %s54, %s55
      %p64 = scmp.eq.s32.totalorder %s23, 0
      %p65 = por %p63, %p64
      %p66 = scmp.ne.s32.totalorder %s54, %s55
      %p67 = scmp.eq.s32.totalorder %s24, 1
      %p68 = por %p66, %p67
      %p70 = scmp.ne.s32.totalorder %s55, %s69
      %p71 = scmp.eq.s32.totalorder %s24, 0
      %p72 = por %p70, %p71
      %s74 = sadd.s32 %s73, 1
      %p77 = scmp.eq.s32.totalorder %s18, 1
      %p78 = scmp.ne.s32.totalorder %s73, %s75
      %p79 = scmp.eq.s32.totalorder %s18, 0
      %p80 = por %p78, %p79
      %p81 = scmp.ne.s32.totalorder %s73, %s75
      %p82 = scmp.eq.s32.totalorder %s23, 1
      %p83 = por %p81, %p82
      %p84 = scmp.ne.s32.totalorder %s75, %s76
      %p85 = scmp.eq.s32.totalorder %s23, 0
      %p86 = por %p84, %p85
      %p87 = scmp.ne.s32.totalorder %s75, %s76
      %p88 = scmp.eq.s32.totalorder %s24, 1
      %p89 = por %p87, %p88
      %p91 = scmp.ne.s32.totalorder %s76, %s90
      %p92 = scmp.eq.s32.totalorder %s24, 0
      %p93 = por %p91, %p92
      %s95 = sadd.s32 %s94, 1
      %p98 = scmp.eq.s32.totalorder %s18, 1
      %p99 = scmp.ne.s32.totalorder %s94, %s96
      %p100 = scmp.eq.s32.totalorder %s18, 0
      %p101 = por %p99, %p100
      %p102 = scmp.ne.s32.totalorder %s94, %s96
      %p103 = scmp.eq.s32.totalorder %s23, 1
      %p104 = por %p102, %p103
      %p105 = scmp.ne.s32.totalorder %s96, %s97
      %p106 = scmp.eq.s32.totalorder %s23, 0
      %p107 = por %p105, %p106
      %p108 = scmp.ne.s32.totalorder %s96, %s97
      %p109 = scmp.eq.s32.totalorder %s24, 1
      %p110 = por %p108, %p109
      %p112 = scmp.ne.s32.totalorder %s97, %s111
      %p113 = scmp.eq.s32.totalorder %s24, 0
      %p114 = por %p112, %p113
      %s116 = sadd.s32 %s115, 1
      %p119 = scmp.eq.s32.totalorder %s18, 1
      %p120 = scmp.ne.s32.totalorder %s115, %s117
      %p121 = scmp.eq.s32.totalorder %s18, 0
      %p122 = por %p120, %p121
      %p123 = scmp.ne.s32.totalorder %s115, %s117
      %p124 = scmp.eq.s32.totalorder %s23, 1
      %p125 = por %p123, %p124
      %p126 = scmp.ne.s32.totalorder %s117, %s118
      %p127 = scmp.eq.s32.totalorder %s23, 0
      %p128 = por %p126, %p127
      %p129 = scmp.ne.s32.totalorder %s117, %s118
      %p130 = scmp.eq.s32.totalorder %s24, 1
      %p131 = por %p129, %p130
      %p133 = scmp.ne.s32.totalorder %s118, %s132
      %p134 = scmp.eq.s32.totalorder %s24, 0
      %p135 = por %p133, %p134
      %s136 = ssub.s32 %s18, %s25
      %p137 = scmp.eq.s32.totalorder %s136, 0
      %s139 = sadd.s32 %s138, 1
      %s140 = scalar_select %p137, %s138, %s139
      %p143 = pneg %p137
      %p144 = scmp.eq.s32.totalorder %s18, 1
      %p145 = por %p143, %p144
      %p146 = scmp.ne.s32.totalorder %s138, %s141
      %p147 = scmp.eq.s32.totalorder %s18, 0
      %p148 = por %p146, %p147
      %p149 = scmp.ne.s32.totalorder %s138, %s141
      %p150 = scmp.eq.s32.totalorder %s23, 1
      %p151 = por %p149, %p150
      %p152 = scmp.ne.s32.totalorder %s141, %s142
      %p153 = scmp.eq.s32.totalorder %s23, 0
      %p154 = por %p152, %p153
      %p155 = scmp.ne.s32.totalorder %s141, %s142
      %p156 = scmp.eq.s32.totalorder %s24, 1
      %p157 = por %p155, %p156
      %p159 = scmp.ne.s32.totalorder %s142, %s158
      %p160 = scmp.eq.s32.totalorder %s24, 0
      %p161 = por %p159, %p160
      %p162 = scmp.le.s32.totalorder 1, %s18
      %p163 = scmp.lt.s32.totalorder %s18, 3
      %p164 = pnand %p162, %p163
      %p165 = pneg %p164
      // Predicated region
      $region9: #{residual_block_forward.1} parent=5 // pred_check
        _
      $region10: #{residual_block_forward.1} parent=5 // pred_check_branch
        %167 = sbr.rel (%p164) target = $region12
      $region11: #{residual_block_forward.1} parent=5 // pred_region
        %s168 = ssub.s32 %s18, 1
        // Predicated region
        $region13: #{residual_block_forward.1} parent=11 // pred_check
          %p169 = pneg %p65
        $region14: #{residual_block_forward.1} parent=11 // pred_check_branch
          %171 = sbr.rel (%p169) target = $region16
        $region15: #{residual_block_forward.1} parent=11 // pred_region
          %173 = vsyncadd [#allocation6], 0
          %s174 = sshll.u32 %s1, 4
          %s175 = int_to_ptr.hbm [resolvable:$true] %s174
          %s176 = sshll.u32 [#allocation5], 4
          %s177 = int_to_ptr.vmem [resolvable:$true] %s176
          %182 = dma.hbm_to_vmem [thread:$0]  %s175, 9216, %s177, [#allocation6], 64, 64, 4
        $region16: #{residual_block_forward.1} parent=11 // pred_fallthru
          _
        // Predicated region
        $region17: #{residual_block_forward.1} parent=11 // pred_check
          %p183 = pneg %p86
        $region18: #{residual_block_forward.1} parent=11 // pred_check_branch
          %185 = sbr.rel (%p183) target = $region20
        $region19: #{residual_block_forward.1} parent=11 // pred_region
          _
        $region20: #{residual_block_forward.1} parent=11 // pred_fallthru
          _
        // Predicated region
        $region21: #{residual_block_forward.1} parent=11 // pred_check
          %p186 = pneg %p107
        $region22: #{residual_block_forward.1} parent=11 // pred_check_branch
          %188 = sbr.rel (%p186) target = $region24
        $region23: #{residual_block_forward.1} parent=11 // pred_region
          %190 = vsyncadd [#allocation6], 0
          %s191 = sshll.u32 %s3, 4
          %s192 = int_to_ptr.hbm [resolvable:$true] %s191
          %s193 = sshll.u32 [#allocation7], 4
          %s194 = int_to_ptr.vmem [resolvable:$true] %s193
          %199 = dma.hbm_to_vmem [thread:$0]  %s192, 9216, %s194, [#allocation6], 64, 64, 4
        $region24: #{residual_block_forward.1} parent=11 // pred_fallthru
          _
        // Predicated region
        $region25: #{residual_block_forward.1} parent=11 // pred_check
          %p200 = pneg %p128
        $region26: #{residual_block_forward.1} parent=11 // pred_check_branch
          %202 = sbr.rel (%p200) target = $region28
        $region27: #{residual_block_forward.1} parent=11 // pred_region
          _
        $region28: #{residual_block_forward.1} parent=11 // pred_fallthru
          _
      $region12: #{residual_block_forward.1} parent=5 // pred_fallthru
        _
      %p203 = scmp.lt.s32.totalorder %s18, 2
      // Predicated region
      $region29: #{residual_block_forward.1} parent=5 // pred_check
        %p204 = pneg %p203
      $region30: #{residual_block_forward.1} parent=5 // pred_check_branch
        %206 = sbr.rel (%p204) target = $region32
      $region31: #{residual_block_forward.1} parent=5 // pred_region
        // Predicated region
        $region33: #{residual_block_forward.1} parent=31 // pred_check
          %p207 = pneg %p38
        $region34: #{residual_block_forward.1} parent=31 // pred_check_branch
          %209 = sbr.rel (%p207) target = $region36
        $region35: #{residual_block_forward.1} parent=31 // pred_region
          %s210 = sand.u32 %s28, 1
          %s211 = scalar_lea.sflag [#allocation3], %s210
          %s212 = sand.u32 %s28, 1
          %s213 = smul.addr %s212, 256
          %s214 = scalar_lea.vmem [#allocation2], %s213
          %216 = vsyncadd %s211, 0
          %s217 = smul.addr %s18, 32
          %s218 = smul.addr %s217, 8
          %s219 = scalar_lea.hbm %s0, %s218
          %s220 = sshll.u32 %s219, 4
          %s221 = int_to_ptr.hbm [resolvable:$true] %s220
          %s222 = sshll.u32 %s214, 4
          %s223 = int_to_ptr.vmem [resolvable:$true] %s222
          %228 = dma.hbm_to_vmem [thread:$0]  %s221, 4096, %s223, %s211, 128, 128, 8
        $region36: #{residual_block_forward.1} parent=31 // pred_fallthru
          _
      $region32: #{residual_block_forward.1} parent=5 // pred_fallthru
        _
      %p229 = scmp.le.s32.totalorder 1, %s18
      %p230 = scmp.lt.s32.totalorder %s18, 3
      %p231 = pnand %p229, %p230
      %p232 = pneg %p231
      // Predicated region
      $region37: #{residual_block_forward.1} parent=5 // pred_check
        _
      $region38: #{residual_block_forward.1} parent=5 // pred_check_branch
        %234 = sbr.rel (%p231) target = $region40
      $region39: #{residual_block_forward.1} parent=5 // pred_region
        %s235 = ssub.s32 %s18, 1
        %s236 = sand.u32 %s31, 1
        %s237 = scalar_lea.sflag [#allocation3], %s236
        %s238 = sand.u32 %s31, 1
        %s239 = smul.addr %s238, 256
        %s240 = scalar_lea.vmem [#allocation2], %s239
        // Predicated region
        $region41: #{residual_block_forward.1} parent=39 // pred_check
          %p241 = pneg %p44
        $region42: #{residual_block_forward.1} parent=39 // pred_check_branch
          %243 = sbr.rel (%p241) target = $region44
        $region43: #{residual_block_forward.1} parent=39 // pred_region
          %245 = dma.done %s237, 4096
        $region44: #{residual_block_forward.1} parent=39 // pred_fallthru
          _
        // Predicated region
        $region45: #{residual_block_forward.1} parent=39 // pred_check
          %p246 = pneg %p65
        $region46: #{residual_block_forward.1} parent=39 // pred_check_branch
          %248 = sbr.rel (%p246) target = $region48
        $region47: #{residual_block_forward.1} parent=39 // pred_region
          %250 = dma.done [#allocation6], 9216
        $region48: #{residual_block_forward.1} parent=39 // pred_fallthru
          _
        // Predicated region
        $region49: #{residual_block_forward.1} parent=39 // pred_check
          %p251 = pneg %p107
        $region50: #{residual_block_forward.1} parent=39 // pred_check_branch
          %253 = sbr.rel (%p251) target = $region52
        $region51: #{residual_block_forward.1} parent=39 // pred_region
          %255 = dma.done [#allocation6], 9216
        $region52: #{residual_block_forward.1} parent=39 // pred_fallthru
          _
        %s256 = sand.u32 %s31, 1
        %s257 = scalar_lea.sflag [#allocation3], %s256
        %s258 = sand.u32 %s31, 1
        %s259 = smul.addr %s258, 256
        %s260 = scalar_lea.vmem [#allocation2], %s259
        %p261 = pneg %p44
        %p262 = pneg %p41
        %p263 = pneg %p65
        %p264 = pneg %p62
        %p265 = pneg %p86
        %p266 = pneg %p83
        %p267 = pneg %p107
        %p268 = pneg %p104
        %p269 = pneg %p128
        %p270 = pneg %p125
        %p271 = pneg %p154
        %p272 = pneg %p151
        %s273 = sand.u32 %s141, 1
        %s274 = scalar_lea.sflag [#allocation4], %s273
        %s275 = sand.u32 %s141, 1
        %s276 = smul.addr %s275, 256
        %s277 = scalar_lea.vmem [#allocation8], %s276
        %v278 = vld [vmem:[%s240] sm:$0xff]
        %v279 = vld [vmem:[%s240 + $0x8] sm:$0xff]
        %v280 = vld [vmem:[%s240 + $0x10] sm:$0xff]
        %v281 = vld [vmem:[%s240 + $0x18] sm:$0xff]
        %v282 = vld [vmem:[%s240 + $0x20] sm:$0xff]
        %v283 = vld [vmem:[%s240 + $0x28] sm:$0xff]
        %v284 = vld [vmem:[%s240 + $0x30] sm:$0xff]
        %v285 = vld [vmem:[%s240 + $0x38] sm:$0xff]
        %v286 = vld [vmem:[%s240 + $0x40] sm:$0xff]
        %v287 = vld [vmem:[%s240 + $0x48] sm:$0xff]
        %v288 = vld [vmem:[%s240 + $0x50] sm:$0xff]
        %v289 = vld [vmem:[%s240 + $0x58] sm:$0xff]
        %v290 = vld [vmem:[%s240 + $0x60] sm:$0xff]
        %v291 = vld [vmem:[%s240 + $0x68] sm:$0xff]
        %v292 = vld [vmem:[%s240 + $0x70] sm:$0xff]
        %v293 = vld [vmem:[%s240 + $0x78] sm:$0xff]
        %v294 = vld [vmem:[%s240 + $0x80] sm:$0xff]
        %v295 = vld [vmem:[%s240 + $0x88] sm:$0xff]
        %v296 = vld [vmem:[%s240 + $0x90] sm:$0xff]
        %v297 = vld [vmem:[%s240 + $0x98] sm:$0xff]
        %v298 = vld [vmem:[%s240 + $0xa0] sm:$0xff]
        %v299 = vld [vmem:[%s240 + $0xa8] sm:$0xff]
        %v300 = vld [vmem:[%s240 + $0xb0] sm:$0xff]
        %v301 = vld [vmem:[%s240 + $0xb8] sm:$0xff]
        %v302 = vld [vmem:[%s240 + $0xc0] sm:$0xff]
        %v303 = vld [vmem:[%s240 + $0xc8] sm:$0xff]
        %v304 = vld [vmem:[%s240 + $0xd0] sm:$0xff]
        %v305 = vld [vmem:[%s240 + $0xd8] sm:$0xff]
        %v306 = vld [vmem:[%s240 + $0xe0] sm:$0xff]
        %v307 = vld [vmem:[%s240 + $0xe8] sm:$0xff]
        %v308 = vld [vmem:[%s240 + $0xf0] sm:$0xff]
        %v309 = vld [vmem:[%s240 + $0xf8] sm:$0xff]
        %v326 = vrot.slane %v280, 1
        %v327 = vrot.slane %v278, 1
        %v328 = vrot.slane %v282, 1
        %v329 = vrot.slane %v284, 1
        %v330 = vrot.slane %v286, 1
        %v331 = vrot.slane %v288, 1
        %v332 = vrot.slane %v290, 1
        %v333 = vrot.slane %v292, 1
        %v334 = vrot.slane %v294, 1
        %v335 = vrot.slane %v296, 1
        %v336 = vrot.slane %v298, 1
        %v337 = vrot.slane %v300, 1
        %v338 = vrot.slane %v302, 1
        %v339 = vrot.slane %v304, 1
        %v340 = vrot.slane %v306, 1
        %v341 = vrot.slane %v308, 1
        %vm374 = vcmask 1040384
        %v375 = vrot.slane %v280, 7
        %v376 = vrot.slane %v281, 7
        %v377 = vsel %vm374, %v375, %v376
        %v378 = vrot.slane %v278, 7
        %v379 = vrot.slane %v279, 7
        %v380 = vsel %vm374, %v378, %v379
        %v381 = vrot.slane %v282, 7
        %v382 = vrot.slane %v283, 7
        %v383 = vsel %vm374, %v381, %v382
        %v384 = vrot.slane %v284, 7
        %v385 = vrot.slane %v285, 7
        %v386 = vsel %vm374, %v384, %v385
        %v387 = vrot.slane %v286, 7
        %v388 = vrot.slane %v287, 7
        %v389 = vsel %vm374, %v387, %v388
        %v390 = vrot.slane %v288, 7
        %v391 = vrot.slane %v289, 7
        %v392 = vsel %vm374, %v390, %v391
        %v393 = vrot.slane %v290, 7
        %v394 = vrot.slane %v291, 7
        %v395 = vsel %vm374, %v393, %v394
        %v396 = vrot.slane %v292, 7
        %v397 = vrot.slane %v293, 7
        %v398 = vsel %vm374, %v396, %v397
        %v399 = vrot.slane %v294, 7
        %v400 = vrot.slane %v295, 7
        %v401 = vsel %vm374, %v399, %v400
        %v402 = vrot.slane %v296, 7
        %v403 = vrot.slane %v297, 7
        %v404 = vsel %vm374, %v402, %v403
        %v405 = vrot.slane %v298, 7
        %v406 = vrot.slane %v299, 7
        %v407 = vsel %vm374, %v405, %v406
        %v408 = vrot.slane %v300, 7
        %v409 = vrot.slane %v301, 7
        %v410 = vsel %vm374, %v408, %v409
        %v411 = vrot.slane %v302, 7
        %v412 = vrot.slane %v303, 7
        %v413 = vsel %vm374, %v411, %v412
        %v414 = vrot.slane %v304, 7
        %v415 = vrot.slane %v305, 7
        %v416 = vsel %vm374, %v414, %v415
        %v417 = vrot.slane %v306, 7
        %v418 = vrot.slane %v307, 7
        %v419 = vsel %vm374, %v417, %v418
        %v420 = vrot.slane %v308, 7
        %v421 = vrot.slane %v309, 7
        %v422 = vsel %vm374, %v420, %v421
        %v471 = vrot.slane %v281, 5
        %v472 = vrot.slane %v279, 5
        %v473 = vrot.slane %v283, 5
        %v474 = vrot.slane %v285, 5
        %v475 = vrot.slane %v287, 5
        %v476 = vrot.slane %v289, 5
        %v477 = vrot.slane %v291, 5
        %v478 = vrot.slane %v293, 5
        %v479 = vrot.slane %v295, 5
        %v480 = vrot.slane %v297, 5
        %v481 = vrot.slane %v299, 5
        %v482 = vrot.slane %v301, 5
        %v483 = vrot.slane %v303, 5
        %v484 = vrot.slane %v305, 5
        %v485 = vrot.slane %v307, 5
        %v486 = vrot.slane %v309, 5
        %v503 = vsel %vm374, %v326, %v375
        %v504 = vsel %vm374, %v327, %v378
        %v505 = vsel %vm374, %v328, %v381
        %v506 = vsel %vm374, %v329, %v384
        %v507 = vsel %vm374, %v330, %v387
        %v508 = vsel %vm374, %v331, %v390
        %v509 = vsel %vm374, %v332, %v393
        %v510 = vsel %vm374, %v333, %v396
        %v511 = vsel %vm374, %v334, %v399
        %v512 = vsel %vm374, %v335, %v402
        %v513 = vsel %vm374, %v336, %v405
        %v514 = vsel %vm374, %v337, %v408
        %v515 = vsel %vm374, %v338, %v411
        %v516 = vsel %vm374, %v339, %v414
        %v517 = vsel %vm374, %v340, %v417
        %v518 = vsel %vm374, %v341, %v420
        %v519 = vsel %vm374, %v376, %v471
        %v520 = vsel %vm374, %v379, %v472
        %v521 = vsel %vm374, %v382, %v473
        %v522 = vsel %vm374, %v385, %v474
        %v523 = vsel %vm374, %v388, %v475
        %v524 = vsel %vm374, %v391, %v476
        %v525 = vsel %vm374, %v394, %v477
        %v526 = vsel %vm374, %v397, %v478
        %v527 = vsel %vm374, %v400, %v479
        %v528 = vsel %vm374, %v403, %v480
        %v529 = vsel %vm374, %v406, %v481
        %v530 = vsel %vm374, %v409, %v482
        %v531 = vsel %vm374, %v412, %v483
        %v532 = vsel %vm374, %v415, %v484
        %v533 = vsel %vm374, %v418, %v485
        %v534 = vsel %vm374, %v421, %v486
        %v535 = vpack.c.bf16 %v503, %v503
        %v536 = vpack.c.bf16 %v377, %v377
        %v537 = vpack.c.bf16 %v519, %v519
        %v538 = vpack.c.bf16 %v504, %v504
        %v539 = vpack.c.bf16 %v380, %v380
        %v540 = vpack.c.bf16 %v520, %v520
        %v541 = vpack.c.bf16 %v505, %v505
        %v542 = vpack.c.bf16 %v383, %v383
        %v543 = vpack.c.bf16 %v521, %v521
        %v544 = vpack.c.bf16 %v506, %v506
        %v545 = vpack.c.bf16 %v386, %v386
        %v546 = vpack.c.bf16 %v522, %v522
        %v547 = vpack.c.bf16 %v507, %v507
        %v548 = vpack.c.bf16 %v389, %v389
        %v549 = vpack.c.bf16 %v523, %v523
        %v550 = vpack.c.bf16 %v508, %v508
        %v551 = vpack.c.bf16 %v392, %v392
        %v552 = vpack.c.bf16 %v524, %v524
        %v553 = vpack.c.bf16 %v509, %v509
        %v554 = vpack.c.bf16 %v395, %v395
        %v555 = vpack.c.bf16 %v525, %v525
        %v556 = vpack.c.bf16 %v510, %v510
        %v557 = vpack.c.bf16 %v398, %v398
        %v558 = vpack.c.bf16 %v526, %v526
        %v559 = vpack.c.bf16 %v511, %v511
        %v560 = vpack.c.bf16 %v401, %v401
        %v561 = vpack.c.bf16 %v527, %v527
        %v562 = vpack.c.bf16 %v512, %v512
        %v563 = vpack.c.bf16 %v404, %v404
        %v564 = vpack.c.bf16 %v528, %v528
        %v565 = vpack.c.bf16 %v513, %v513
        %v566 = vpack.c.bf16 %v407, %v407
        %v567 = vpack.c.bf16 %v529, %v529
        %v568 = vpack.c.bf16 %v514, %v514
        %v569 = vpack.c.bf16 %v410, %v410
        %v570 = vpack.c.bf16 %v530, %v530
        %v571 = vpack.c.bf16 %v515, %v515
        %v572 = vpack.c.bf16 %v413, %v413
        %v573 = vpack.c.bf16 %v531, %v531
        %v574 = vpack.c.bf16 %v516, %v516
        %v575 = vpack.c.bf16 %v416, %v416
        %v576 = vpack.c.bf16 %v532, %v532
        %v577 = vpack.c.bf16 %v517, %v517
        %v578 = vpack.c.bf16 %v419, %v419
        %v579 = vpack.c.bf16 %v533, %v533
        %v580 = vpack.c.bf16 %v518, %v518
        %v581 = vpack.c.bf16 %v422, %v422
        %v582 = vpack.c.bf16 %v534, %v534
        %v583 = vld [vmem:[#allocation5] sm:$0xf]
        %v584 = vld [vmem:[#allocation5 + $0x4] sm:$0xf]
        %v585 = vld [vmem:[#allocation5 + $0x8] sm:$0xf]
        %v586 = vld [vmem:[#allocation5 + $0xc] sm:$0xf]
        %v587 = vld [vmem:[#allocation5 + $0x10] sm:$0xf]
        %v588 = vld [vmem:[#allocation5 + $0x14] sm:$0xf]
        %v589 = vld [vmem:[#allocation5 + $0x18] sm:$0xf]
        %v590 = vld [vmem:[#allocation5 + $0x1c] sm:$0xf]
        %v591 = vld [vmem:[#allocation5 + $0x20] sm:$0xf]
        %v592 = vld [vmem:[#allocation5 + $0x24] sm:$0xf]
        %v593 = vld [vmem:[#allocation5 + $0x28] sm:$0xf]
        %v594 = vld [vmem:[#allocation5 + $0x2c] sm:$0xf]
        %v595 = vld [vmem:[#allocation5 + $0x30] sm:$0xf]
        %v596 = vld [vmem:[#allocation5 + $0x34] sm:$0xf]
        %v597 = vld [vmem:[#allocation5 + $0x38] sm:$0xf]
        %v598 = vld [vmem:[#allocation5 + $0x3c] sm:$0xf]
        %vm599 = vsmask.f32 3328
        %vm600 = vsmask.f32 7440
        %vm601 = vmor %vm599, %vm600
        %v603 = vshrl.u32 %v535, 16
        %v605 = vrot.slane %v603, 4
        %v606 = vshll.u32 %v535, 16
        %v608 = vrot.slane %v606, 5
        %v609 = vor.u32 %v605, %v608
        %v610 = vrot.slane %v609, 4
        %v612 = vshll.u32 %v536, 16
        %v614 = vrot.slane %v612, 5
        %v615 = vsel %vm601, %v610, %v614
        %v616 = vshrl.u32 %v536, 16
        %v618 = vrot.slane %v616, 4
        %v619 = vor.u32 %v618, %v614
        %v620 = vrot.slane %v619, 4
        %v622 = vshll.u32 %v537, 16
        %v624 = vrot.slane %v622, 5
        %v625 = vsel %vm601, %v620, %v624
        %v627 = vshrl.u32 %v538, 16
        %v629 = vrot.slane %v627, 4
        %v630 = vshll.u32 %v538, 16
        %v632 = vrot.slane %v630, 5
        %v633 = vor.u32 %v629, %v632
        %v634 = vrot.slane %v633, 4
        %v636 = vshll.u32 %v539, 16
        %v638 = vrot.slane %v636, 5
        %v639 = vsel %vm601, %v634, %v638
        %v640 = vshrl.u32 %v539, 16
        %v642 = vrot.slane %v640, 4
        %v643 = vor.u32 %v642, %v638
        %v644 = vrot.slane %v643, 4
        %v646 = vshll.u32 %v540, 16
        %v648 = vrot.slane %v646, 5
        %v649 = vsel %vm601, %v644, %v648
        %v651 = vshrl.u32 %v541, 16
        %v653 = vrot.slane %v651, 4
        %v654 = vshll.u32 %v541, 16
        %v656 = vrot.slane %v654, 5
        %v657 = vor.u32 %v653, %v656
        %v658 = vrot.slane %v657, 4
        %v660 = vshll.u32 %v542, 16
        %v662 = vrot.slane %v660, 5
        %v663 = vsel %vm601, %v658, %v662
        %v664 = vshrl.u32 %v542, 16
        %v666 = vrot.slane %v664, 4
        %v667 = vor.u32 %v666, %v662
        %v668 = vrot.slane %v667, 4
        %v670 = vshll.u32 %v543, 16
        %v672 = vrot.slane %v670, 5
        %v673 = vsel %vm601, %v668, %v672
        %v675 = vshrl.u32 %v544, 16
        %v677 = vrot.slane %v675, 4
        %v678 = vshll.u32 %v544, 16
        %v680 = vrot.slane %v678, 5
        %v681 = vor.u32 %v677, %v680
        %v682 = vrot.slane %v681, 4
        %v684 = vshll.u32 %v545, 16
        %v686 = vrot.slane %v684, 5
        %v687 = vsel %vm601, %v682, %v686
        %v688 = vshrl.u32 %v545, 16
        %v690 = vrot.slane %v688, 4
        %v691 = vor.u32 %v690, %v686
        %v692 = vrot.slane %v691, 4
        %v694 = vshll.u32 %v546, 16
        %v696 = vrot.slane %v694, 5
        %v697 = vsel %vm601, %v692, %v696
        %v699 = vshrl.u32 %v547, 16
        %v701 = vrot.slane %v699, 4
        %v702 = vshll.u32 %v547, 16
        %v704 = vrot.slane %v702, 5
        %v705 = vor.u32 %v701, %v704
        %v706 = vrot.slane %v705, 4
        %v708 = vshll.u32 %v548, 16
        %v710 = vrot.slane %v708, 5
        %v711 = vsel %vm601, %v706, %v710
        %v712 = vshrl.u32 %v548, 16
        %v714 = vrot.slane %v712, 4
        %v715 = vor.u32 %v714, %v710
        %v716 = vrot.slane %v715, 4
        %v718 = vshll.u32 %v549, 16
        %v720 = vrot.slane %v718, 5
        %v721 = vsel %vm601, %v716, %v720
        %v723 = vshrl.u32 %v550, 16
        %v725 = vrot.slane %v723, 4
        %v726 = vshll.u32 %v550, 16
        %v728 = vrot.slane %v726, 5
        %v729 = vor.u32 %v725, %v728
        %v730 = vrot.slane %v729, 4
        %v732 = vshll.u32 %v551, 16
        %v734 = vrot.slane %v732, 5
        %v735 = vsel %vm601, %v730, %v734
        %v736 = vshrl.u32 %v551, 16
        %v738 = vrot.slane %v736, 4
        %v739 = vor.u32 %v738, %v734
        %v740 = vrot.slane %v739, 4
        %v742 = vshll.u32 %v552, 16
        %v744 = vrot.slane %v742, 5
        %v745 = vsel %vm601, %v740, %v744
        %v747 = vshrl.u32 %v553, 16
        %v749 = vrot.slane %v747, 4
        %v750 = vshll.u32 %v553, 16
        %v752 = vrot.slane %v750, 5
        %v753 = vor.u32 %v749, %v752
        %v754 = vrot.slane %v753, 4
        %v756 = vshll.u32 %v554, 16
        %v758 = vrot.slane %v756, 5
        %v759 = vsel %vm601, %v754, %v758
        %v760 = vshrl.u32 %v554, 16
        %v762 = vrot.slane %v760, 4
        %v763 = vor.u32 %v762, %v758
        %v764 = vrot.slane %v763, 4
        %v766 = vshll.u32 %v555, 16
        %v768 = vrot.slane %v766, 5
        %v769 = vsel %vm601, %v764, %v768
        %v771 = vshrl.u32 %v556, 16
        %v773 = vrot.slane %v771, 4
        %v774 = vshll.u32 %v556, 16
        %v776 = vrot.slane %v774, 5
        %v777 = vor.u32 %v773, %v776
        %v778 = vrot.slane %v777, 4
        %v780 = vshll.u32 %v557, 16
        %v782 = vrot.slane %v780, 5
        %v783 = vsel %vm601, %v778, %v782
        %v784 = vshrl.u32 %v557, 16
        %v786 = vrot.slane %v784, 4
        %v787 = vor.u32 %v786, %v782
        %v788 = vrot.slane %v787, 4
        %v790 = vshll.u32 %v558, 16
        %v792 = vrot.slane %v790, 5
        %v793 = vsel %vm601, %v788, %v792
        %v795 = vshrl.u32 %v559, 16
        %v797 = vrot.slane %v795, 4
        %v798 = vshll.u32 %v559, 16
        %v800 = vrot.slane %v798, 5
        %v801 = vor.u32 %v797, %v800
        %v802 = vrot.slane %v801, 4
        %v804 = vshll.u32 %v560, 16
        %v806 = vrot.slane %v804, 5
        %v807 = vsel %vm601, %v802, %v806
        %v808 = vshrl.u32 %v560, 16
        %v810 = vrot.slane %v808, 4
        %v811 = vor.u32 %v810, %v806
        %v812 = vrot.slane %v811, 4
        %v814 = vshll.u32 %v561, 16
        %v816 = vrot.slane %v814, 5
        %v817 = vsel %vm601, %v812, %v816
        %v819 = vshrl.u32 %v562, 16
        %v821 = vrot.slane %v819, 4
        %v822 = vshll.u32 %v562, 16
        %v824 = vrot.slane %v822, 5
        %v825 = vor.u32 %v821, %v824
        %v826 = vrot.slane %v825, 4
        %v828 = vshll.u32 %v563, 16
        %v830 = vrot.slane %v828, 5
        %v831 = vsel %vm601, %v826, %v830
        %v832 = vshrl.u32 %v563, 16
        %v834 = vrot.slane %v832, 4
        %v835 = vor.u32 %v834, %v830
        %v836 = vrot.slane %v835, 4
        %v838 = vshll.u32 %v564, 16
        %v840 = vrot.slane %v838, 5
        %v841 = vsel %vm601, %v836, %v840
        %v843 = vshrl.u32 %v565, 16
        %v845 = vrot.slane %v843, 4
        %v846 = vshll.u32 %v565, 16
        %v848 = vrot.slane %v846, 5
        %v849 = vor.u32 %v845, %v848
        %v850 = vrot.slane %v849, 4
        %v852 = vshll.u32 %v566, 16
        %v854 = vrot.slane %v852, 5
        %v855 = vsel %vm601, %v850, %v854
        %v856 = vshrl.u32 %v566, 16
        %v858 = vrot.slane %v856, 4
        %v859 = vor.u32 %v858, %v854
        %v860 = vrot.slane %v859, 4
        %v862 = vshll.u32 %v567, 16
        %v864 = vrot.slane %v862, 5
        %v865 = vsel %vm601, %v860, %v864
        %v867 = vshrl.u32 %v568, 16
        %v869 = vrot.slane %v867, 4
        %v870 = vshll.u32 %v568, 16
        %v872 = vrot.slane %v870, 5
        %v873 = vor.u32 %v869, %v872
        %v874 = vrot.slane %v873, 4
        %v876 = vshll.u32 %v569, 16
        %v878 = vrot.slane %v876, 5
        %v879 = vsel %vm601, %v874, %v878
        %v880 = vshrl.u32 %v569, 16
        %v882 = vrot.slane %v880, 4
        %v883 = vor.u32 %v882, %v878
        %v884 = vrot.slane %v883, 4
        %v886 = vshll.u32 %v570, 16
        %v888 = vrot.slane %v886, 5
        %v889 = vsel %vm601, %v884, %v888
        %v891 = vshrl.u32 %v571, 16
        %v893 = vrot.slane %v891, 4
        %v894 = vshll.u32 %v571, 16
        %v896 = vrot.slane %v894, 5
        %v897 = vor.u32 %v893, %v896
        %v898 = vrot.slane %v897, 4
        %v900 = vshll.u32 %v572, 16
        %v902 = vrot.slane %v900, 5
        %v903 = vsel %vm601, %v898, %v902
        %v904 = vshrl.u32 %v572, 16
        %v906 = vrot.slane %v904, 4
        %v907 = vor.u32 %v906, %v902
        %v908 = vrot.slane %v907, 4
        %v910 = vshll.u32 %v573, 16
        %v912 = vrot.slane %v910, 5
        %v913 = vsel %vm601, %v908, %v912
        %v915 = vshrl.u32 %v574, 16
        %v917 = vrot.slane %v915, 4
        %v918 = vshll.u32 %v574, 16
        %v920 = vrot.slane %v918, 5
        %v921 = vor.u32 %v917, %v920
        %v922 = vrot.slane %v921, 4
        %v924 = vshll.u32 %v575, 16
        %v926 = vrot.slane %v924, 5
        %v927 = vsel %vm601, %v922, %v926
        %v928 = vshrl.u32 %v575, 16
        %v930 = vrot.slane %v928, 4
        %v931 = vor.u32 %v930, %v926
        %v932 = vrot.slane %v931, 4
        %v934 = vshll.u32 %v576, 16
        %v936 = vrot.slane %v934, 5
        %v937 = vsel %vm601, %v932, %v936
        %v939 = vshrl.u32 %v577, 16
        %v941 = vrot.slane %v939, 4
        %v942 = vshll.u32 %v577, 16
        %v944 = vrot.slane %v942, 5
        %v945 = vor.u32 %v941, %v944
        %v946 = vrot.slane %v945, 4
        %v948 = vshll.u32 %v578, 16
        %v950 = vrot.slane %v948, 5
        %v951 = vsel %vm601, %v946, %v950
        %v952 = vshrl.u32 %v578, 16
        %v954 = vrot.slane %v952, 4
        %v955 = vor.u32 %v954, %v950
        %v956 = vrot.slane %v955, 4
        %v958 = vshll.u32 %v579, 16
        %v960 = vrot.slane %v958, 5
        %v961 = vsel %vm601, %v956, %v960
        %s962 = scalar_lea.vmem [#allocation5], 64
        %v963 = vld [vmem:[%s962] sm:$0xf]
        %v964 = vld [vmem:[%s962 + $0x4] sm:$0xf]
        %v965 = vld [vmem:[%s962 + $0x8] sm:$0xf]
        %v966 = vld [vmem:[%s962 + $0xc] sm:$0xf]
        %v967 = vld [vmem:[%s962 + $0x10] sm:$0xf]
        %v968 = vld [vmem:[%s962 + $0x14] sm:$0xf]
        %v969 = vld [vmem:[%s962 + $0x18] sm:$0xf]
        %v970 = vld [vmem:[%s962 + $0x1c] sm:$0xf]
        %v971 = vld [vmem:[%s962 + $0x20] sm:$0xf]
        %v972 = vld [vmem:[%s962 + $0x24] sm:$0xf]
        %v973 = vld [vmem:[%s962 + $0x28] sm:$0xf]
        %v974 = vld [vmem:[%s962 + $0x2c] sm:$0xf]
        %v975 = vld [vmem:[%s962 + $0x30] sm:$0xf]
        %v976 = vld [vmem:[%s962 + $0x34] sm:$0xf]
        %v977 = vld [vmem:[%s962 + $0x38] sm:$0xf]
        %v978 = vld [vmem:[%s962 + $0x3c] sm:$0xf]
        %v979 = vunpack.c.l.b16 %v615
        %v980 = vunpack.c.l.b16 %v625
        %v981 = vunpack.c.l.b16 %v639
        %v982 = vunpack.c.l.b16 %v649
        %v983 = vunpack.c.l.b16 %v663
        %v984 = vunpack.c.l.b16 %v673
        %v985 = vunpack.c.l.b16 %v687
        %v986 = vunpack.c.l.b16 %v697
        %v987 = vunpack.c.l.b16 %v711
        %v988 = vunpack.c.l.b16 %v721
        %v989 = vunpack.c.l.b16 %v735
        %v990 = vunpack.c.l.b16 %v745
        %v991 = vunpack.c.l.b16 %v759
        %v992 = vunpack.c.l.b16 %v769
        %v993 = vunpack.c.l.b16 %v783
        %v994 = vunpack.c.l.b16 %v793
        %v995 = vunpack.c.l.b16 %v807
        %v996 = vunpack.c.l.b16 %v817
        %v997 = vunpack.c.l.b16 %v831
        %v998 = vunpack.c.l.b16 %v841
        %v999 = vunpack.c.l.b16 %v855
        %v1000 = vunpack.c.l.b16 %v865
        %v1001 = vunpack.c.l.b16 %v879
        %v1002 = vunpack.c.l.b16 %v889
        %v1003 = vunpack.c.l.b16 %v903
        %v1004 = vunpack.c.l.b16 %v913
        %v1005 = vunpack.c.l.b16 %v927
        %v1006 = vunpack.c.l.b16 %v937
        %v1007 = vunpack.c.l.b16 %v951
        %v1008 = vunpack.c.l.b16 %v961
        %v1009 = vpack.c.b16 %v980, %v979
        %v1010 = vpack.c.b16 %v982, %v981
        %v1011 = vpack.c.b16 %v984, %v983
        %v1012 = vpack.c.b16 %v986, %v985
        %v1013 = vpack.c.b16 %v988, %v987
        %v1014 = vpack.c.b16 %v990, %v989
        %v1015 = vpack.c.b16 %v992, %v991
        %v1016 = vpack.c.b16 %v994, %v993
        %v1017 = vpack.c.b16 %v996, %v995
        %v1018 = vpack.c.b16 %v998, %v997
        %v1019 = vpack.c.b16 %v1000, %v999
        %v1020 = vpack.c.b16 %v1002, %v1001
        %v1021 = vpack.c.b16 %v1004, %v1003
        %v1022 = vpack.c.b16 %v1006, %v1005
        %v1023 = vpack.c.b16 %v1008, %v1007
        %v1055 = vunpack.c.l.b16 %v963
        %v1056 = vunpack.c.l.b16 %v964
        %v1057 = vunpack.c.l.b16 %v965
        %v1058 = vunpack.c.l.b16 %v966
        %v1059 = vunpack.c.l.b16 %v967
        %v1060 = vunpack.c.l.b16 %v968
        %v1061 = vunpack.c.l.b16 %v969
        %v1062 = vunpack.c.l.b16 %v970
        %v1063 = vunpack.c.l.b16 %v971
        %v1064 = vunpack.c.l.b16 %v972
        %v1065 = vunpack.c.l.b16 %v973
        %v1066 = vunpack.c.l.b16 %v974
        %v1067 = vunpack.c.l.b16 %v975
        %v1068 = vunpack.c.l.b16 %v976
        %v1069 = vunpack.c.l.b16 %v977
        %v1070 = vunpack.c.l.b16 %v978
        %v1071 = vpack.c.b16 %v1056, %v1055
        %v1072 = vpack.c.b16 %v1058, %v1057
        %v1073 = vpack.c.b16 %v1060, %v1059
        %v1074 = vpack.c.b16 %v1062, %v1061
        %v1075 = vpack.c.b16 %v1064, %v1063
        %v1076 = vpack.c.b16 %v1066, %v1065
        %v1077 = vpack.c.b16 %v1068, %v1067
        %v1078 = vpack.c.b16 %v1070, %v1069
        %1087 = vmatpush.bf16.msra.mxu0 %v1078
        %1088 = vmatpush.bf16.msra.mxu0 %v1077
        %1089 = vmatpush.bf16.msra.mxu0 %v1076
        %1090 = vmatpush.bf16.msra.mxu0 %v1075
        %1091 = vmatpush.bf16.msra.mxu0 %v1074
        %1092 = vmatpush.bf16.msra.mxu0 %v1073
        %1093 = vmatpush.bf16.msra.mxu0 %v1072
        %1094 = vmatpush.bf16.msra.mxu0 %v1071
        %1095 = vmatmul.bf16.gmra.mxu0 %v1009
        %v1096 = vpop.f32.mrf.mxu0
        %v1097 = vadd.f32 0.0, %v1096
        %v1098 = vpop.f32.mrf.mxu0
        %v1099 = vadd.f32 0.0, %v1098
        %1100 = vmatmul.bf16.gmra.mxu0 %v1010
        %v1101 = vpop.f32.mrf.mxu0
        %v1102 = vadd.f32 0.0, %v1101
        %v1103 = vpop.f32.mrf.mxu0
        %v1104 = vadd.f32 0.0, %v1103
        %1105 = vmatmul.bf16.gmra.mxu0 %v1009
        %v1106 = vpop.f32.mrf.mxu0
        %v1107 = vadd.f32 0.0, %v1106
        %v1108 = vpop.f32.mrf.mxu0
        %v1109 = vadd.f32 0.0, %v1108
        %1110 = vmatmul.bf16.gmra.mxu0 %v1011
        %v1111 = vpop.f32.mrf.mxu0
        %v1112 = vadd.f32 0.0, %v1111
        %v1113 = vpop.f32.mrf.mxu0
        %v1114 = vadd.f32 0.0, %v1113
        %1115 = vmatmul.bf16.gmra.mxu0 %v1012
        %v1116 = vpop.f32.mrf.mxu0
        %v1117 = vadd.f32 0.0, %v1116
        %v1118 = vpop.f32.mrf.mxu0
        %v1119 = vadd.f32 0.0, %v1118
        %1120 = vmatmul.bf16.gmra.mxu0 %v1013
        %v1121 = vpop.f32.mrf.mxu0
        %v1122 = vadd.f32 0.0, %v1121
        %v1123 = vpop.f32.mrf.mxu0
        %v1124 = vadd.f32 0.0, %v1123
        %1125 = vmatmul.bf16.gmra.mxu0 %v1014
        %v1126 = vpop.f32.mrf.mxu0
        %v1127 = vadd.f32 0.0, %v1126
        %v1128 = vpop.f32.mrf.mxu0
        %v1129 = vadd.f32 0.0, %v1128
        %1130 = vmatmul.bf16.gmra.mxu0 %v1015
        %v1131 = vpop.f32.mrf.mxu0
        %v1132 = vadd.f32 0.0, %v1131
        %v1133 = vpop.f32.mrf.mxu0
        %v1134 = vadd.f32 0.0, %v1133
        %1135 = vmatmul.bf16.gmra.mxu0 %v1016
        %v1136 = vpop.f32.mrf.mxu0
        %v1137 = vadd.f32 0.0, %v1136
        %v1138 = vpop.f32.mrf.mxu0
        %v1139 = vadd.f32 0.0, %v1138
        %1140 = vmatmul.bf16.gmra.mxu0 %v1017
        %v1141 = vpop.f32.mrf.mxu0
        %v1142 = vadd.f32 0.0, %v1141
        %v1143 = vpop.f32.mrf.mxu0
        %v1144 = vadd.f32 0.0, %v1143
        %1145 = vmatmul.bf16.gmra.mxu0 %v1018
        %v1146 = vpop.f32.mrf.mxu0
        %v1147 = vadd.f32 0.0, %v1146
        %v1148 = vpop.f32.mrf.mxu0
        %v1149 = vadd.f32 0.0, %v1148
        %1150 = vmatmul.bf16.gmra.mxu0 %v1019
        %v1151 = vpop.f32.mrf.mxu0
        %v1152 = vadd.f32 0.0, %v1151
        %v1153 = vpop.f32.mrf.mxu0
        %v1154 = vadd.f32 0.0, %v1153
        %1155 = vmatmul.bf16.gmra.mxu0 %v1020
        %v1156 = vpop.f32.mrf.mxu0
        %v1157 = vadd.f32 0.0, %v1156
        %v1158 = vpop.f32.mrf.mxu0
        %v1159 = vadd.f32 0.0, %v1158
        %1160 = vmatmul.bf16.gmra.mxu0 %v1021
        %v1161 = vpop.f32.mrf.mxu0
        %v1162 = vadd.f32 0.0, %v1161
        %v1163 = vpop.f32.mrf.mxu0
        %v1164 = vadd.f32 0.0, %v1163
        %1165 = vmatmul.bf16.gmra.mxu0 %v1022
        %v1166 = vpop.f32.mrf.mxu0
        %v1167 = vadd.f32 0.0, %v1166
        %v1168 = vpop.f32.mrf.mxu0
        %v1169 = vadd.f32 0.0, %v1168
        %1170 = vmatmul.bf16.gmra.mxu0 %v1023
        %v1171 = vpop.f32.mrf.mxu0
        %v1172 = vadd.f32 0.0, %v1171
        %v1173 = vpop.f32.mrf.mxu0
        %v1174 = vadd.f32 0.0, %v1173
        %1175 = vdwg.mxu0
        %v1206 = vunpack.c.l.b16 %v535
        %v1207 = vunpack.c.l.b16 %v536
        %v1208 = vunpack.c.l.b16 %v538
        %v1209 = vunpack.c.l.b16 %v539
        %v1210 = vunpack.c.l.b16 %v541
        %v1211 = vunpack.c.l.b16 %v542
        %v1212 = vunpack.c.l.b16 %v544
        %v1213 = vunpack.c.l.b16 %v545
        %v1214 = vunpack.c.l.b16 %v547
        %v1215 = vunpack.c.l.b16 %v548
        %v1216 = vunpack.c.l.b16 %v550
        %v1217 = vunpack.c.l.b16 %v551
        %v1218 = vunpack.c.l.b16 %v553
        %v1219 = vunpack.c.l.b16 %v554
        %v1220 = vunpack.c.l.b16 %v556
        %v1221 = vunpack.c.l.b16 %v557
        %v1222 = vunpack.c.l.b16 %v559
        %v1223 = vunpack.c.l.b16 %v560
        %v1224 = vunpack.c.l.b16 %v562
        %v1225 = vunpack.c.l.b16 %v563
        %v1226 = vunpack.c.l.b16 %v565
        %v1227 = vunpack.c.l.b16 %v566
        %v1228 = vunpack.c.l.b16 %v568
        %v1229 = vunpack.c.l.b16 %v569
        %v1230 = vunpack.c.l.b16 %v571
        %v1231 = vunpack.c.l.b16 %v572
        %v1232 = vunpack.c.l.b16 %v574
        %v1233 = vunpack.c.l.b16 %v575
        %v1234 = vunpack.c.l.b16 %v577
        %v1235 = vunpack.c.l.b16 %v578
        %v1236 = vpack.c.b16 %v1207, %v1206
        %v1237 = vpack.c.b16 %v1209, %v1208
        %v1238 = vpack.c.b16 %v1211, %v1210
        %v1239 = vpack.c.b16 %v1213, %v1212
        %v1240 = vpack.c.b16 %v1215, %v1214
        %v1241 = vpack.c.b16 %v1217, %v1216
        %v1242 = vpack.c.b16 %v1219, %v1218
        %v1243 = vpack.c.b16 %v1221, %v1220
        %v1244 = vpack.c.b16 %v1223, %v1222
        %v1245 = vpack.c.b16 %v1225, %v1224
        %v1246 = vpack.c.b16 %v1227, %v1226
        %v1247 = vpack.c.b16 %v1229, %v1228
        %v1248 = vpack.c.b16 %v1231, %v1230
        %v1249 = vpack.c.b16 %v1233, %v1232
        %v1250 = vpack.c.b16 %v1235, %v1234
        %v1282 = vunpack.c.l.b16 %v583
        %v1283 = vunpack.c.l.b16 %v584
        %v1284 = vunpack.c.l.b16 %v585
        %v1285 = vunpack.c.l.b16 %v586
        %v1286 = vunpack.c.l.b16 %v587
        %v1287 = vunpack.c.l.b16 %v588
        %v1288 = vunpack.c.l.b16 %v589
        %v1289 = vunpack.c.l.b16 %v590
        %v1290 = vunpack.c.l.b16 %v591
        %v1291 = vunpack.c.l.b16 %v592
        %v1292 = vunpack.c.l.b16 %v593
        %v1293 = vunpack.c.l.b16 %v594
        %v1294 = vunpack.c.l.b16 %v595
        %v1295 = vunpack.c.l.b16 %v596
        %v1296 = vunpack.c.l.b16 %v597
        %v1297 = vunpack.c.l.b16 %v598
        %v1298 = vpack.c.b16 %v1283, %v1282
        %v1299 = vpack.c.b16 %v1285, %v1284
        %v1300 = vpack.c.b16 %v1287, %v1286
        %v1301 = vpack.c.b16 %v1289, %v1288
        %v1302 = vpack.c.b16 %v1291, %v1290
        %v1303 = vpack.c.b16 %v1293, %v1292
        %v1304 = vpack.c.b16 %v1295, %v1294
        %v1305 = vpack.c.b16 %v1297, %v1296
        %1314 = vmatpush.bf16.msra.mxu0 %v1305
        %1315 = vmatpush.bf16.msra.mxu0 %v1304
        %1316 = vmatpush.bf16.msra.mxu0 %v1303
        %1317 = vmatpush.bf16.msra.mxu0 %v1302
        %1318 = vmatpush.bf16.msra.mxu0 %v1301
        %1319 = vmatpush.bf16.msra.mxu0 %v1300
        %1320 = vmatpush.bf16.msra.mxu0 %v1299
        %1321 = vmatpush.bf16.msra.mxu0 %v1298
        %1322 = vmatmul.bf16.gmra.mxu0 %v1236
        %v1323 = vpop.f32.mrf.mxu0
        %v1324 = vadd.f32 %v1097, %v1323
        %v1325 = vpop.f32.mrf.mxu0
        %v1326 = vadd.f32 %v1099, %v1325
        %1327 = vmatmul.bf16.gmra.mxu0 %v1237
        %v1328 = vpop.f32.mrf.mxu0
        %v1329 = vadd.f32 %v1102, %v1328
        %v1330 = vpop.f32.mrf.mxu0
        %v1331 = vadd.f32 %v1104, %v1330
        %1332 = vmatmul.bf16.gmra.mxu0 %v1236
        %v1333 = vpop.f32.mrf.mxu0
        %v1334 = vadd.f32 %v1107, %v1333
        %v1335 = vpop.f32.mrf.mxu0
        %v1336 = vadd.f32 %v1109, %v1335
        %1337 = vmatmul.bf16.gmra.mxu0 %v1238
        %v1338 = vpop.f32.mrf.mxu0
        %v1339 = vadd.f32 %v1112, %v1338
        %v1340 = vpop.f32.mrf.mxu0
        %v1341 = vadd.f32 %v1114, %v1340
        %1342 = vmatmul.bf16.gmra.mxu0 %v1239
        %v1343 = vpop.f32.mrf.mxu0
        %v1344 = vadd.f32 %v1117, %v1343
        %v1345 = vpop.f32.mrf.mxu0
        %v1346 = vadd.f32 %v1119, %v1345
        %1347 = vmatmul.bf16.gmra.mxu0 %v1240
        %v1348 = vpop.f32.mrf.mxu0
        %v1349 = vadd.f32 %v1122, %v1348
        %v1350 = vpop.f32.mrf.mxu0
        %v1351 = vadd.f32 %v1124, %v1350
        %1352 = vmatmul.bf16.gmra.mxu0 %v1241
        %v1353 = vpop.f32.mrf.mxu0
        %v1354 = vadd.f32 %v1127, %v1353
        %v1355 = vpop.f32.mrf.mxu0
        %v1356 = vadd.f32 %v1129, %v1355
        %1357 = vmatmul.bf16.gmra.mxu0 %v1242
        %v1358 = vpop.f32.mrf.mxu0
        %v1359 = vadd.f32 %v1132, %v1358
        %v1360 = vpop.f32.mrf.mxu0
        %v1361 = vadd.f32 %v1134, %v1360
        %1362 = vmatmul.bf16.gmra.mxu0 %v1243
        %v1363 = vpop.f32.mrf.mxu0
        %v1364 = vadd.f32 %v1137, %v1363
        %v1365 = vpop.f32.mrf.mxu0
        %v1366 = vadd.f32 %v1139, %v1365
        %1367 = vmatmul.bf16.gmra.mxu0 %v1244
        %v1368 = vpop.f32.mrf.mxu0
        %v1369 = vadd.f32 %v1142, %v1368
        %v1370 = vpop.f32.mrf.mxu0
        %v1371 = vadd.f32 %v1144, %v1370
        %1372 = vmatmul.bf16.gmra.mxu0 %v1245
        %v1373 = vpop.f32.mrf.mxu0
        %v1374 = vadd.f32 %v1147, %v1373
        %v1375 = vpop.f32.mrf.mxu0
        %v1376 = vadd.f32 %v1149, %v1375
        %1377 = vmatmul.bf16.gmra.mxu0 %v1246
        %v1378 = vpop.f32.mrf.mxu0
        %v1379 = vadd.f32 %v1152, %v1378
        %v1380 = vpop.f32.mrf.mxu0
        %v1381 = vadd.f32 %v1154, %v1380
        %1382 = vmatmul.bf16.gmra.mxu0 %v1247
        %v1383 = vpop.f32.mrf.mxu0
        %v1384 = vadd.f32 %v1157, %v1383
        %v1385 = vpop.f32.mrf.mxu0
        %v1386 = vadd.f32 %v1159, %v1385
        %1387 = vmatmul.bf16.gmra.mxu0 %v1248
        %v1388 = vpop.f32.mrf.mxu0
        %v1389 = vadd.f32 %v1162, %v1388
        %v1390 = vpop.f32.mrf.mxu0
        %v1391 = vadd.f32 %v1164, %v1390
        %1392 = vmatmul.bf16.gmra.mxu0 %v1249
        %v1393 = vpop.f32.mrf.mxu0
        %v1394 = vadd.f32 %v1167, %v1393
        %v1395 = vpop.f32.mrf.mxu0
        %v1396 = vadd.f32 %v1169, %v1395
        %1397 = vmatmul.bf16.gmra.mxu0 %v1250
        %v1398 = vpop.f32.mrf.mxu0
        %v1399 = vadd.f32 %v1172, %v1398
        %v1400 = vpop.f32.mrf.mxu0
        %v1401 = vadd.f32 %v1174, %v1400
        %1402 = vdwg.mxu0
        %vm1418 = vcmask 1042432
        %vm1419 = vcmask 1046532
        %vm1420 = vmor %vm1418, %vm1419
        %v1421 = vrot.slane %v535, 5
        %v1422 = vrot.slane %v1421, 4
        %v1423 = vrot.slane %v536, 5
        %v1424 = vsel %vm1420, %v1422, %v1423
        %v1425 = vrot.slane %v1423, 4
        %v1426 = vrot.slane %v537, 5
        %v1427 = vsel %vm1420, %v1425, %v1426
        %v1428 = vrot.slane %v538, 5
        %v1429 = vrot.slane %v1428, 4
        %v1430 = vrot.slane %v539, 5
        %v1431 = vsel %vm1420, %v1429, %v1430
        %v1432 = vrot.slane %v1430, 4
        %v1433 = vrot.slane %v540, 5
        %v1434 = vsel %vm1420, %v1432, %v1433
        %v1435 = vrot.slane %v541, 5
        %v1436 = vrot.slane %v1435, 4
        %v1437 = vrot.slane %v542, 5
        %v1438 = vsel %vm1420, %v1436, %v1437
        %v1439 = vrot.slane %v1437, 4
        %v1440 = vrot.slane %v543, 5
        %v1441 = vsel %vm1420, %v1439, %v1440
        %v1442 = vrot.slane %v544, 5
        %v1443 = vrot.slane %v1442, 4
        %v1444 = vrot.slane %v545, 5
        %v1445 = vsel %vm1420, %v1443, %v1444
        %v1446 = vrot.slane %v1444, 4
        %v1447 = vrot.slane %v546, 5
        %v1448 = vsel %vm1420, %v1446, %v1447
        %v1449 = vrot.slane %v547, 5
        %v1450 = vrot.slane %v1449, 4
        %v1451 = vrot.slane %v548, 5
        %v1452 = vsel %vm1420, %v1450, %v1451
        %v1453 = vrot.slane %v1451, 4
        %v1454 = vrot.slane %v549, 5
        %v1455 = vsel %vm1420, %v1453, %v1454
        %v1456 = vrot.slane %v550, 5
        %v1457 = vrot.slane %v1456, 4
        %v1458 = vrot.slane %v551, 5
        %v1459 = vsel %vm1420, %v1457, %v1458
        %v1460 = vrot.slane %v1458, 4
        %v1461 = vrot.slane %v552, 5
        %v1462 = vsel %vm1420, %v1460, %v1461
        %v1463 = vrot.slane %v553, 5
        %v1464 = vrot.slane %v1463, 4
        %v1465 = vrot.slane %v554, 5
        %v1466 = vsel %vm1420, %v1464, %v1465
        %v1467 = vrot.slane %v1465, 4
        %v1468 = vrot.slane %v555, 5
        %v1469 = vsel %vm1420, %v1467, %v1468
        %v1470 = vrot.slane %v556, 5
        %v1471 = vrot.slane %v1470, 4
        %v1472 = vrot.slane %v557, 5
        %v1473 = vsel %vm1420, %v1471, %v1472
        %v1474 = vrot.slane %v1472, 4
        %v1475 = vrot.slane %v558, 5
        %v1476 = vsel %vm1420, %v1474, %v1475
        %v1477 = vrot.slane %v559, 5
        %v1478 = vrot.slane %v1477, 4
        %v1479 = vrot.slane %v560, 5
        %v1480 = vsel %vm1420, %v1478, %v1479
        %v1481 = vrot.slane %v1479, 4
        %v1482 = vrot.slane %v561, 5
        %v1483 = vsel %vm1420, %v1481, %v1482
        %v1484 = vrot.slane %v562, 5
        %v1485 = vrot.slane %v1484, 4
        %v1486 = vrot.slane %v563, 5
        %v1487 = vsel %vm1420, %v1485, %v1486
        %v1488 = vrot.slane %v1486, 4
        %v1489 = vrot.slane %v564, 5
        %v1490 = vsel %vm1420, %v1488, %v1489
        %v1491 = vrot.slane %v565, 5
        %v1492 = vrot.slane %v1491, 4
        %v1493 = vrot.slane %v566, 5
        %v1494 = vsel %vm1420, %v1492, %v1493
        %v1495 = vrot.slane %v1493, 4
        %v1496 = vrot.slane %v567, 5
        %v1497 = vsel %vm1420, %v1495, %v1496
        %v1498 = vrot.slane %v568, 5
        %v1499 = vrot.slane %v1498, 4
        %v1500 = vrot.slane %v569, 5
        %v1501 = vsel %vm1420, %v1499, %v1500
        %v1502 = vrot.slane %v1500, 4
        %v1503 = vrot.slane %v570, 5
        %v1504 = vsel %vm1420, %v1502, %v1503
        %v1505 = vrot.slane %v571, 5
        %v1506 = vrot.slane %v1505, 4
        %v1507 = vrot.slane %v572, 5
        %v1508 = vsel %vm1420, %v1506, %v1507
        %v1509 = vrot.slane %v1507, 4
        %v1510 = vrot.slane %v573, 5
        %v1511 = vsel %vm1420, %v1509, %v1510
        %v1512 = vrot.slane %v574, 5
        %v1513 = vrot.slane %v1512, 4
        %v1514 = vrot.slane %v575, 5
        %v1515 = vsel %vm1420, %v1513, %v1514
        %v1516 = vrot.slane %v1514, 4
        %v1517 = vrot.slane %v576, 5
        %v1518 = vsel %vm1420, %v1516, %v1517
        %v1519 = vrot.slane %v577, 5
        %v1520 = vrot.slane %v1519, 4
        %v1521 = vrot.slane %v578, 5
        %v1522 = vsel %vm1420, %v1520, %v1521
        %v1523 = vrot.slane %v1521, 4
        %v1524 = vrot.slane %v579, 5
        %v1525 = vsel %vm1420, %v1523, %v1524
        %s1526 = scalar_lea.vmem [#allocation5], 128
        %v1527 = vld [vmem:[%s1526] sm:$0xf]
        %v1528 = vld [vmem:[%s1526 + $0x4] sm:$0xf]
        %v1529 = vld [vmem:[%s1526 + $0x8] sm:$0xf]
        %v1530 = vld [vmem:[%s1526 + $0xc] sm:$0xf]
        %v1531 = vld [vmem:[%s1526 + $0x10] sm:$0xf]
        %v1532 = vld [vmem:[%s1526 + $0x14] sm:$0xf]
        %v1533 = vld [vmem:[%s1526 + $0x18] sm:$0xf]
        %v1534 = vld [vmem:[%s1526 + $0x1c] sm:$0xf]
        %v1535 = vld [vmem:[%s1526 + $0x20] sm:$0xf]
        %v1536 = vld [vmem:[%s1526 + $0x24] sm:$0xf]
        %v1537 = vld [vmem:[%s1526 + $0x28] sm:$0xf]
        %v1538 = vld [vmem:[%s1526 + $0x2c] sm:$0xf]
        %v1539 = vld [vmem:[%s1526 + $0x30] sm:$0xf]
        %v1540 = vld [vmem:[%s1526 + $0x34] sm:$0xf]
        %v1541 = vld [vmem:[%s1526 + $0x38] sm:$0xf]
        %v1542 = vld [vmem:[%s1526 + $0x3c] sm:$0xf]
        %v1543 = vunpack.c.l.b16 %v1424
        %v1544 = vunpack.c.l.b16 %v1427
        %v1545 = vunpack.c.l.b16 %v1431
        %v1546 = vunpack.c.l.b16 %v1434
        %v1547 = vunpack.c.l.b16 %v1438
        %v1548 = vunpack.c.l.b16 %v1441
        %v1549 = vunpack.c.l.b16 %v1445
        %v1550 = vunpack.c.l.b16 %v1448
        %v1551 = vunpack.c.l.b16 %v1452
        %v1552 = vunpack.c.l.b16 %v1455
        %v1553 = vunpack.c.l.b16 %v1459
        %v1554 = vunpack.c.l.b16 %v1462
        %v1555 = vunpack.c.l.b16 %v1466
        %v1556 = vunpack.c.l.b16 %v1469
        %v1557 = vunpack.c.l.b16 %v1473
        %v1558 = vunpack.c.l.b16 %v1476
        %v1559 = vunpack.c.l.b16 %v1480
        %v1560 = vunpack.c.l.b16 %v1483
        %v1561 = vunpack.c.l.b16 %v1487
        %v1562 = vunpack.c.l.b16 %v1490
        %v1563 = vunpack.c.l.b16 %v1494
        %v1564 = vunpack.c.l.b16 %v1497
        %v1565 = vunpack.c.l.b16 %v1501
        %v1566 = vunpack.c.l.b16 %v1504
        %v1567 = vunpack.c.l.b16 %v1508
        %v1568 = vunpack.c.l.b16 %v1511
        %v1569 = vunpack.c.l.b16 %v1515
        %v1570 = vunpack.c.l.b16 %v1518
        %v1571 = vunpack.c.l.b16 %v1522
        %v1572 = vunpack.c.l.b16 %v1525
        %v1573 = vpack.c.b16 %v1544, %v1543
        %v1574 = vpack.c.b16 %v1546, %v1545
        %v1575 = vpack.c.b16 %v1548, %v1547
        %v1576 = vpack.c.b16 %v1550, %v1549
        %v1577 = vpack.c.b16 %v1552, %v1551
        %v1578 = vpack.c.b16 %v1554, %v1553
        %v1579 = vpack.c.b16 %v1556, %v1555
        %v1580 = vpack.c.b16 %v1558, %v1557
        %v1581 = vpack.c.b16 %v1560, %v1559
        %v1582 = vpack.c.b16 %v1562, %v1561
        %v1583 = vpack.c.b16 %v1564, %v1563
        %v1584 = vpack.c.b16 %v1566, %v1565
        %v1585 = vpack.c.b16 %v1568, %v1567
        %v1586 = vpack.c.b16 %v1570, %v1569
        %v1587 = vpack.c.b16 %v1572, %v1571
        %v1619 = vunpack.c.l.b16 %v1527
        %v1620 = vunpack.c.l.b16 %v1528
        %v1621 = vunpack.c.l.b16 %v1529
        %v1622 = vunpack.c.l.b16 %v1530
        %v1623 = vunpack.c.l.b16 %v1531
        %v1624 = vunpack.c.l.b16 %v1532
        %v1625 = vunpack.c.l.b16 %v1533
        %v1626 = vunpack.c.l.b16 %v1534
        %v1627 = vunpack.c.l.b16 %v1535
        %v1628 = vunpack.c.l.b16 %v1536
        %v1629 = vunpack.c.l.b16 %v1537
        %v1630 = vunpack.c.l.b16 %v1538
        %v1631 = vunpack.c.l.b16 %v1539
        %v1632 = vunpack.c.l.b16 %v1540
        %v1633 = vunpack.c.l.b16 %v1541
        %v1634 = vunpack.c.l.b16 %v1542
        %v1635 = vpack.c.b16 %v1620, %v1619
        %v1636 = vpack.c.b16 %v1622, %v1621
        %v1637 = vpack.c.b16 %v1624, %v1623
        %v1638 = vpack.c.b16 %v1626, %v1625
        %v1639 = vpack.c.b16 %v1628, %v1627
        %v1640 = vpack.c.b16 %v1630, %v1629
        %v1641 = vpack.c.b16 %v1632, %v1631
        %v1642 = vpack.c.b16 %v1634, %v1633
        %1651 = vmatpush.bf16.msra.mxu0 %v1642
        %1652 = vmatpush.bf16.msra.mxu0 %v1641
        %1653 = vmatpush.bf16.msra.mxu0 %v1640
        %1654 = vmatpush.bf16.msra.mxu0 %v1639
        %1655 = vmatpush.bf16.msra.mxu0 %v1638
        %1656 = vmatpush.bf16.msra.mxu0 %v1637
        %1657 = vmatpush.bf16.msra.mxu0 %v1636
        %1658 = vmatpush.bf16.msra.mxu0 %v1635
        %1659 = vmatmul.bf16.gmra.mxu0 %v1573
        %v1660 = vpop.f32.mrf.mxu0
        %v1661 = vadd.f32 0.0, %v1660
        %v1662 = vpop.f32.mrf.mxu0
        %v1663 = vadd.f32 0.0, %v1662
        %1664 = vmatmul.bf16.gmra.mxu0 %v1574
        %v1665 = vpop.f32.mrf.mxu0
        %v1666 = vadd.f32 0.0, %v1665
        %v1667 = vpop.f32.mrf.mxu0
        %v1668 = vadd.f32 0.0, %v1667
        %1669 = vmatmul.bf16.gmra.mxu0 %v1573
        %v1670 = vpop.f32.mrf.mxu0
        %v1671 = vadd.f32 0.0, %v1670
        %v1672 = vpop.f32.mrf.mxu0
        %v1673 = vadd.f32 0.0, %v1672
        %1674 = vmatmul.bf16.gmra.mxu0 %v1575
        %v1675 = vpop.f32.mrf.mxu0
        %v1676 = vadd.f32 0.0, %v1675
        %v1677 = vpop.f32.mrf.mxu0
        %v1678 = vadd.f32 0.0, %v1677
        %1679 = vmatmul.bf16.gmra.mxu0 %v1576
        %v1680 = vpop.f32.mrf.mxu0
        %v1681 = vadd.f32 0.0, %v1680
        %v1682 = vpop.f32.mrf.mxu0
        %v1683 = vadd.f32 0.0, %v1682
        %1684 = vmatmul.bf16.gmra.mxu0 %v1577
        %v1685 = vpop.f32.mrf.mxu0
        %v1686 = vadd.f32 0.0, %v1685
        %v1687 = vpop.f32.mrf.mxu0
        %v1688 = vadd.f32 0.0, %v1687
        %1689 = vmatmul.bf16.gmra.mxu0 %v1578
        %v1690 = vpop.f32.mrf.mxu0
        %v1691 = vadd.f32 0.0, %v1690
        %v1692 = vpop.f32.mrf.mxu0
        %v1693 = vadd.f32 0.0, %v1692
        %1694 = vmatmul.bf16.gmra.mxu0 %v1579
        %v1695 = vpop.f32.mrf.mxu0
        %v1696 = vadd.f32 0.0, %v1695
        %v1697 = vpop.f32.mrf.mxu0
        %v1698 = vadd.f32 0.0, %v1697
        %1699 = vmatmul.bf16.gmra.mxu0 %v1580
        %v1700 = vpop.f32.mrf.mxu0
        %v1701 = vadd.f32 0.0, %v1700
        %v1702 = vpop.f32.mrf.mxu0
        %v1703 = vadd.f32 0.0, %v1702
        %1704 = vmatmul.bf16.gmra.mxu0 %v1581
        %v1705 = vpop.f32.mrf.mxu0
        %v1706 = vadd.f32 0.0, %v1705
        %v1707 = vpop.f32.mrf.mxu0
        %v1708 = vadd.f32 0.0, %v1707
        %1709 = vmatmul.bf16.gmra.mxu0 %v1582
        %v1710 = vpop.f32.mrf.mxu0
        %v1711 = vadd.f32 0.0, %v1710
        %v1712 = vpop.f32.mrf.mxu0
        %v1713 = vadd.f32 0.0, %v1712
        %1714 = vmatmul.bf16.gmra.mxu0 %v1583
        %v1715 = vpop.f32.mrf.mxu0
        %v1716 = vadd.f32 0.0, %v1715
        %v1717 = vpop.f32.mrf.mxu0
        %v1718 = vadd.f32 0.0, %v1717
        %1719 = vmatmul.bf16.gmra.mxu0 %v1584
        %v1720 = vpop.f32.mrf.mxu0
        %v1721 = vadd.f32 0.0, %v1720
        %v1722 = vpop.f32.mrf.mxu0
        %v1723 = vadd.f32 0.0, %v1722
        %1724 = vmatmul.bf16.gmra.mxu0 %v1585
        %v1725 = vpop.f32.mrf.mxu0
        %v1726 = vadd.f32 0.0, %v1725
        %v1727 = vpop.f32.mrf.mxu0
        %v1728 = vadd.f32 0.0, %v1727
        %1729 = vmatmul.bf16.gmra.mxu0 %v1586
        %v1730 = vpop.f32.mrf.mxu0
        %v1731 = vadd.f32 0.0, %v1730
        %v1732 = vpop.f32.mrf.mxu0
        %v1733 = vadd.f32 0.0, %v1732
        %1734 = vmatmul.bf16.gmra.mxu0 %v1587
        %v1735 = vpop.f32.mrf.mxu0
        %v1736 = vadd.f32 0.0, %v1735
        %v1737 = vpop.f32.mrf.mxu0
        %v1738 = vadd.f32 0.0, %v1737
        %1739 = vdwg.mxu0
        %v1740 = vadd.f32 %v1324, %v1661
        %v1741 = vadd.f32 %v1326, %v1663
        %v1742 = vadd.f32 %v1329, %v1666
        %v1743 = vadd.f32 %v1331, %v1668
        %v1744 = vadd.f32 %v1334, %v1671
        %v1745 = vadd.f32 %v1336, %v1673
        %v1746 = vadd.f32 %v1339, %v1676
        %v1747 = vadd.f32 %v1341, %v1678
        %v1748 = vadd.f32 %v1344, %v1681
        %v1749 = vadd.f32 %v1346, %v1683
        %v1750 = vadd.f32 %v1349, %v1686
        %v1751 = vadd.f32 %v1351, %v1688
        %v1752 = vadd.f32 %v1354, %v1691
        %v1753 = vadd.f32 %v1356, %v1693
        %v1754 = vadd.f32 %v1359, %v1696
        %v1755 = vadd.f32 %v1361, %v1698
        %v1756 = vadd.f32 %v1364, %v1701
        %v1757 = vadd.f32 %v1366, %v1703
        %v1758 = vadd.f32 %v1369, %v1706
        %v1759 = vadd.f32 %v1371, %v1708
        %v1760 = vadd.f32 %v1374, %v1711
        %v1761 = vadd.f32 %v1376, %v1713
        %v1762 = vadd.f32 %v1379, %v1716
        %v1763 = vadd.f32 %v1381, %v1718
        %v1764 = vadd.f32 %v1384, %v1721
        %v1765 = vadd.f32 %v1386, %v1723
        %v1766 = vadd.f32 %v1389, %v1726
        %v1767 = vadd.f32 %v1391, %v1728
        %v1768 = vadd.f32 %v1394, %v1731
        %v1769 = vadd.f32 %v1396, %v1733
        %v1770 = vadd.f32 %v1399, %v1736
        %v1771 = vadd.f32 %v1401, %v1738
        %s1772 = scalar_lea.vmem [#allocation5], 192
        %v1773 = vld [vmem:[%s1772] sm:$0xf]
        %v1774 = vld [vmem:[%s1772 + $0x4] sm:$0xf]
        %v1775 = vld [vmem:[%s1772 + $0x8] sm:$0xf]
        %v1776 = vld [vmem:[%s1772 + $0xc] sm:$0xf]
        %v1777 = vld [vmem:[%s1772 + $0x10] sm:$0xf]
        %v1778 = vld [vmem:[%s1772 + $0x14] sm:$0xf]
        %v1779 = vld [vmem:[%s1772 + $0x18] sm:$0xf]
        %v1780 = vld [vmem:[%s1772 + $0x1c] sm:$0xf]
        %v1781 = vld [vmem:[%s1772 + $0x20] sm:$0xf]
        %v1782 = vld [vmem:[%s1772 + $0x24] sm:$0xf]
        %v1783 = vld [vmem:[%s1772 + $0x28] sm:$0xf]
        %v1784 = vld [vmem:[%s1772 + $0x2c] sm:$0xf]
        %v1785 = vld [vmem:[%s1772 + $0x30] sm:$0xf]
        %v1786 = vld [vmem:[%s1772 + $0x34] sm:$0xf]
        %v1787 = vld [vmem:[%s1772 + $0x38] sm:$0xf]
        %v1788 = vld [vmem:[%s1772 + $0x3c] sm:$0xf]
        %v1791 = vunpack.c.l.b16 %v580
        %v1792 = vunpack.c.l.b16 %v581
        %v1793 = vpack.c.b16 %v1792, %v1791
        %v1811 = vunpack.c.l.b16 %v1773
        %v1812 = vunpack.c.l.b16 %v1774
        %v1813 = vunpack.c.l.b16 %v1775
        %v1814 = vunpack.c.l.b16 %v1776
        %v1815 = vunpack.c.l.b16 %v1777
        %v1816 = vunpack.c.l.b16 %v1778
        %v1817 = vunpack.c.l.b16 %v1779
        %v1818 = vunpack.c.l.b16 %v1780
        %v1819 = vunpack.c.l.b16 %v1781
        %v1820 = vunpack.c.l.b16 %v1782
        %v1821 = vunpack.c.l.b16 %v1783
        %v1822 = vunpack.c.l.b16 %v1784
        %v1823 = vunpack.c.l.b16 %v1785
        %v1824 = vunpack.c.l.b16 %v1786
        %v1825 = vunpack.c.l.b16 %v1787
        %v1826 = vunpack.c.l.b16 %v1788
        %v1827 = vpack.c.b16 %v1812, %v1811
        %v1828 = vpack.c.b16 %v1814, %v1813
        %v1829 = vpack.c.b16 %v1816, %v1815
        %v1830 = vpack.c.b16 %v1818, %v1817
        %v1831 = vpack.c.b16 %v1820, %v1819
        %v1832 = vpack.c.b16 %v1822, %v1821
        %v1833 = vpack.c.b16 %v1824, %v1823
        %v1834 = vpack.c.b16 %v1826, %v1825
        %1843 = vmatpush.bf16.msra.mxu0 %v1834
        %1844 = vmatpush.bf16.msra.mxu0 %v1833
        %1845 = vmatpush.bf16.msra.mxu0 %v1832
        %1846 = vmatpush.bf16.msra.mxu0 %v1831
        %1847 = vmatpush.bf16.msra.mxu0 %v1830
        %1848 = vmatpush.bf16.msra.mxu0 %v1829
        %1849 = vmatpush.bf16.msra.mxu0 %v1828
        %1850 = vmatpush.bf16.msra.mxu0 %v1827
        %1851 = vmatmul.bf16.gmra.mxu0 %v1237
        %v1852 = vpop.f32.mrf.mxu0
        %v1853 = vadd.f32 0.0, %v1852
        %v1854 = vpop.f32.mrf.mxu0
        %v1855 = vadd.f32 0.0, %v1854
        %1856 = vmatmul.bf16.gmra.mxu0 %v1236
        %v1857 = vpop.f32.mrf.mxu0
        %v1858 = vadd.f32 0.0, %v1857
        %v1859 = vpop.f32.mrf.mxu0
        %v1860 = vadd.f32 0.0, %v1859
        %1861 = vmatmul.bf16.gmra.mxu0 %v1238
        %v1862 = vpop.f32.mrf.mxu0
        %v1863 = vadd.f32 0.0, %v1862
        %v1864 = vpop.f32.mrf.mxu0
        %v1865 = vadd.f32 0.0, %v1864
        %1866 = vmatmul.bf16.gmra.mxu0 %v1239
        %v1867 = vpop.f32.mrf.mxu0
        %v1868 = vadd.f32 0.0, %v1867
        %v1869 = vpop.f32.mrf.mxu0
        %v1870 = vadd.f32 0.0, %v1869
        %1871 = vmatmul.bf16.gmra.mxu0 %v1240
        %v1872 = vpop.f32.mrf.mxu0
        %v1873 = vadd.f32 0.0, %v1872
        %v1874 = vpop.f32.mrf.mxu0
        %v1875 = vadd.f32 0.0, %v1874
        %1876 = vmatmul.bf16.gmra.mxu0 %v1241
        %v1877 = vpop.f32.mrf.mxu0
        %v1878 = vadd.f32 0.0, %v1877
        %v1879 = vpop.f32.mrf.mxu0
        %v1880 = vadd.f32 0.0, %v1879
        %1881 = vmatmul.bf16.gmra.mxu0 %v1242
        %v1882 = vpop.f32.mrf.mxu0
        %v1883 = vadd.f32 0.0, %v1882
        %v1884 = vpop.f32.mrf.mxu0
        %v1885 = vadd.f32 0.0, %v1884
        %1886 = vmatmul.bf16.gmra.mxu0 %v1243
        %v1887 = vpop.f32.mrf.mxu0
        %v1888 = vadd.f32 0.0, %v1887
        %v1889 = vpop.f32.mrf.mxu0
        %v1890 = vadd.f32 0.0, %v1889
        %1891 = vmatmul.bf16.gmra.mxu0 %v1244
        %v1892 = vpop.f32.mrf.mxu0
        %v1893 = vadd.f32 0.0, %v1892
        %v1894 = vpop.f32.mrf.mxu0
        %v1895 = vadd.f32 0.0, %v1894
        %1896 = vmatmul.bf16.gmra.mxu0 %v1245
        %v1897 = vpop.f32.mrf.mxu0
        %v1898 = vadd.f32 0.0, %v1897
        %v1899 = vpop.f32.mrf.mxu0
        %v1900 = vadd.f32 0.0, %v1899
        %1901 = vmatmul.bf16.gmra.mxu0 %v1246
        %v1902 = vpop.f32.mrf.mxu0
        %v1903 = vadd.f32 0.0, %v1902
        %v1904 = vpop.f32.mrf.mxu0
        %v1905 = vadd.f32 0.0, %v1904
        %1906 = vmatmul.bf16.gmra.mxu0 %v1247
        %v1907 = vpop.f32.mrf.mxu0
        %v1908 = vadd.f32 0.0, %v1907
        %v1909 = vpop.f32.mrf.mxu0
        %v1910 = vadd.f32 0.0, %v1909
        %1911 = vmatmul.bf16.gmra.mxu0 %v1248
        %v1912 = vpop.f32.mrf.mxu0
        %v1913 = vadd.f32 0.0, %v1912
        %v1914 = vpop.f32.mrf.mxu0
        %v1915 = vadd.f32 0.0, %v1914
        %1916 = vmatmul.bf16.gmra.mxu0 %v1249
        %v1917 = vpop.f32.mrf.mxu0
        %v1918 = vadd.f32 0.0, %v1917
        %v1919 = vpop.f32.mrf.mxu0
        %v1920 = vadd.f32 0.0, %v1919
        %1921 = vmatmul.bf16.gmra.mxu0 %v1250
        %v1922 = vpop.f32.mrf.mxu0
        %v1923 = vadd.f32 0.0, %v1922
        %v1924 = vpop.f32.mrf.mxu0
        %v1925 = vadd.f32 0.0, %v1924
        %1926 = vmatmul.bf16.gmra.mxu0 %v1793
        %v1927 = vpop.f32.mrf.mxu0
        %v1928 = vadd.f32 0.0, %v1927
        %v1929 = vpop.f32.mrf.mxu0
        %v1930 = vadd.f32 0.0, %v1929
        %1931 = vdwg.mxu0
        %v1932 = vadd.f32 %v1740, %v1853
        %v1933 = vadd.f32 %v1741, %v1855
        %v1934 = vadd.f32 %v1742, %v1858
        %v1935 = vadd.f32 %v1743, %v1860
        %v1936 = vadd.f32 %v1744, %v1863
        %v1937 = vadd.f32 %v1745, %v1865
        %v1938 = vadd.f32 %v1746, %v1868
        %v1939 = vadd.f32 %v1747, %v1870
        %v1940 = vadd.f32 %v1748, %v1873
        %v1941 = vadd.f32 %v1749, %v1875
        %v1942 = vadd.f32 %v1750, %v1878
        %v1943 = vadd.f32 %v1751, %v1880
        %v1944 = vadd.f32 %v1752, %v1883
        %v1945 = vadd.f32 %v1753, %v1885
        %v1946 = vadd.f32 %v1754, %v1888
        %v1947 = vadd.f32 %v1755, %v1890
        %v1948 = vadd.f32 %v1756, %v1893
        %v1949 = vadd.f32 %v1757, %v1895
        %v1950 = vadd.f32 %v1758, %v1898
        %v1951 = vadd.f32 %v1759, %v1900
        %v1952 = vadd.f32 %v1760, %v1903
        %v1953 = vadd.f32 %v1761, %v1905
        %v1954 = vadd.f32 %v1762, %v1908
        %v1955 = vadd.f32 %v1763, %v1910
        %v1956 = vadd.f32 %v1764, %v1913
        %v1957 = vadd.f32 %v1765, %v1915
        %v1958 = vadd.f32 %v1766, %v1918
        %v1959 = vadd.f32 %v1767, %v1920
        %v1960 = vadd.f32 %v1768, %v1923
        %v1961 = vadd.f32 %v1769, %v1925
        %v1962 = vadd.f32 %v1770, %v1928
        %v1963 = vadd.f32 %v1771, %v1930
        %v1965 = vshrl.u32 %v580, 16
        %v1967 = vrot.slane %v1965, 4
        %v1968 = vshll.u32 %v580, 16
        %v1970 = vrot.slane %v1968, 5
        %v1971 = vor.u32 %v1967, %v1970
        %v1972 = vrot.slane %v1971, 4
        %v1974 = vshll.u32 %v581, 16
        %v1976 = vrot.slane %v1974, 5
        %v1977 = vsel %vm601, %v1972, %v1976
        %v1978 = vshrl.u32 %v581, 16
        %v1980 = vrot.slane %v1978, 4
        %v1981 = vor.u32 %v1980, %v1976
        %v1982 = vrot.slane %v1981, 4
        %v1984 = vshll.u32 %v582, 16
        %v1986 = vrot.slane %v1984, 5
        %v1987 = vsel %vm601, %v1982, %v1986
        %s1988 = scalar_lea.vmem [#allocation5], 256
        %v1989 = vld [vmem:[%s1988] sm:$0xf]
        %v1990 = vld [vmem:[%s1988 + $0x4] sm:$0xf]
        %v1991 = vld [vmem:[%s1988 + $0x8] sm:$0xf]
        %v1992 = vld [vmem:[%s1988 + $0xc] sm:$0xf]
        %v1993 = vld [vmem:[%s1988 + $0x10] sm:$0xf]
        %v1994 = vld [vmem:[%s1988 + $0x14] sm:$0xf]
        %v1995 = vld [vmem:[%s1988 + $0x18] sm:$0xf]
        %v1996 = vld [vmem:[%s1988 + $0x1c] sm:$0xf]
        %v1997 = vld [vmem:[%s1988 + $0x20] sm:$0xf]
        %v1998 = vld [vmem:[%s1988 + $0x24] sm:$0xf]
        %v1999 = vld [vmem:[%s1988 + $0x28] sm:$0xf]
        %v2000 = vld [vmem:[%s1988 + $0x2c] sm:$0xf]
        %v2001 = vld [vmem:[%s1988 + $0x30] sm:$0xf]
        %v2002 = vld [vmem:[%s1988 + $0x34] sm:$0xf]
        %v2003 = vld [vmem:[%s1988 + $0x38] sm:$0xf]
        %v2004 = vld [vmem:[%s1988 + $0x3c] sm:$0xf]
        %v2005 = vunpack.c.l.b16 %v1977
        %v2006 = vunpack.c.l.b16 %v1987
        %v2007 = vpack.c.b16 %v2006, %v2005
        %v2025 = vunpack.c.l.b16 %v1989
        %v2026 = vunpack.c.l.b16 %v1990
        %v2027 = vunpack.c.l.b16 %v1991
        %v2028 = vunpack.c.l.b16 %v1992
        %v2029 = vunpack.c.l.b16 %v1993
        %v2030 = vunpack.c.l.b16 %v1994
        %v2031 = vunpack.c.l.b16 %v1995
        %v2032 = vunpack.c.l.b16 %v1996
        %v2033 = vunpack.c.l.b16 %v1997
        %v2034 = vunpack.c.l.b16 %v1998
        %v2035 = vunpack.c.l.b16 %v1999
        %v2036 = vunpack.c.l.b16 %v2000
        %v2037 = vunpack.c.l.b16 %v2001
        %v2038 = vunpack.c.l.b16 %v2002
        %v2039 = vunpack.c.l.b16 %v2003
        %v2040 = vunpack.c.l.b16 %v2004
        %v2041 = vpack.c.b16 %v2026, %v2025
        %v2042 = vpack.c.b16 %v2028, %v2027
        %v2043 = vpack.c.b16 %v2030, %v2029
        %v2044 = vpack.c.b16 %v2032, %v2031
        %v2045 = vpack.c.b16 %v2034, %v2033
        %v2046 = vpack.c.b16 %v2036, %v2035
        %v2047 = vpack.c.b16 %v2038, %v2037
        %v2048 = vpack.c.b16 %v2040, %v2039
        %2057 = vmatpush.bf16.msra.mxu0 %v2048
        %2058 = vmatpush.bf16.msra.mxu0 %v2047
        %2059 = vmatpush.bf16.msra.mxu0 %v2046
        %2060 = vmatpush.bf16.msra.mxu0 %v2045
        %2061 = vmatpush.bf16.msra.mxu0 %v2044
        %2062 = vmatpush.bf16.msra.mxu0 %v2043
        %2063 = vmatpush.bf16.msra.mxu0 %v2042
        %2064 = vmatpush.bf16.msra.mxu0 %v2041
        %2065 = vmatmul.bf16.gmra.mxu0 %v1010
        %v2066 = vpop.f32.mrf.mxu0
        %v2067 = vadd.f32 0.0, %v2066
        %v2068 = vpop.f32.mrf.mxu0
        %v2069 = vadd.f32 0.0, %v2068
        %2070 = vmatmul.bf16.gmra.mxu0 %v1009
        %v2071 = vpop.f32.mrf.mxu0
        %v2072 = vadd.f32 0.0, %v2071
        %v2073 = vpop.f32.mrf.mxu0
        %v2074 = vadd.f32 0.0, %v2073
        %2075 = vmatmul.bf16.gmra.mxu0 %v1011
        %v2076 = vpop.f32.mrf.mxu0
        %v2077 = vadd.f32 0.0, %v2076
        %v2078 = vpop.f32.mrf.mxu0
        %v2079 = vadd.f32 0.0, %v2078
        %2080 = vmatmul.bf16.gmra.mxu0 %v1012
        %v2081 = vpop.f32.mrf.mxu0
        %v2082 = vadd.f32 0.0, %v2081
        %v2083 = vpop.f32.mrf.mxu0
        %v2084 = vadd.f32 0.0, %v2083
        %2085 = vmatmul.bf16.gmra.mxu0 %v1013
        %v2086 = vpop.f32.mrf.mxu0
        %v2087 = vadd.f32 0.0, %v2086
        %v2088 = vpop.f32.mrf.mxu0
        %v2089 = vadd.f32 0.0, %v2088
        %2090 = vmatmul.bf16.gmra.mxu0 %v1014
        %v2091 = vpop.f32.mrf.mxu0
        %v2092 = vadd.f32 0.0, %v2091
        %v2093 = vpop.f32.mrf.mxu0
        %v2094 = vadd.f32 0.0, %v2093
        %2095 = vmatmul.bf16.gmra.mxu0 %v1015
        %v2096 = vpop.f32.mrf.mxu0
        %v2097 = vadd.f32 0.0, %v2096
        %v2098 = vpop.f32.mrf.mxu0
        %v2099 = vadd.f32 0.0, %v2098
        %2100 = vmatmul.bf16.gmra.mxu0 %v1016
        %v2101 = vpop.f32.mrf.mxu0
        %v2102 = vadd.f32 0.0, %v2101
        %v2103 = vpop.f32.mrf.mxu0
        %v2104 = vadd.f32 0.0, %v2103
        %2105 = vmatmul.bf16.gmra.mxu0 %v1017
        %v2106 = vpop.f32.mrf.mxu0
        %v2107 = vadd.f32 0.0, %v2106
        %v2108 = vpop.f32.mrf.mxu0
        %v2109 = vadd.f32 0.0, %v2108
        %2110 = vmatmul.bf16.gmra.mxu0 %v1018
        %v2111 = vpop.f32.mrf.mxu0
        %v2112 = vadd.f32 0.0, %v2111
        %v2113 = vpop.f32.mrf.mxu0
        %v2114 = vadd.f32 0.0, %v2113
        %2115 = vmatmul.bf16.gmra.mxu0 %v1019
        %v2116 = vpop.f32.mrf.mxu0
        %v2117 = vadd.f32 0.0, %v2116
        %v2118 = vpop.f32.mrf.mxu0
        %v2119 = vadd.f32 0.0, %v2118
        %2120 = vmatmul.bf16.gmra.mxu0 %v1020
        %v2121 = vpop.f32.mrf.mxu0
        %v2122 = vadd.f32 0.0, %v2121
        %v2123 = vpop.f32.mrf.mxu0
        %v2124 = vadd.f32 0.0, %v2123
        %2125 = vmatmul.bf16.gmra.mxu0 %v1021
        %v2126 = vpop.f32.mrf.mxu0
        %v2127 = vadd.f32 0.0, %v2126
        %v2128 = vpop.f32.mrf.mxu0
        %v2129 = vadd.f32 0.0, %v2128
        %2130 = vmatmul.bf16.gmra.mxu0 %v1022
        %v2131 = vpop.f32.mrf.mxu0
        %v2132 = vadd.f32 0.0, %v2131
        %v2133 = vpop.f32.mrf.mxu0
        %v2134 = vadd.f32 0.0, %v2133
        %2135 = vmatmul.bf16.gmra.mxu0 %v1023
        %v2136 = vpop.f32.mrf.mxu0
        %v2137 = vadd.f32 0.0, %v2136
        %v2138 = vpop.f32.mrf.mxu0
        %v2139 = vadd.f32 0.0, %v2138
        %2140 = vmatmul.bf16.gmra.mxu0 %v2007
        %v2141 = vpop.f32.mrf.mxu0
        %v2142 = vadd.f32 0.0, %v2141
        %v2143 = vpop.f32.mrf.mxu0
        %v2144 = vadd.f32 0.0, %v2143
        %2145 = vdwg.mxu0
        %v2146 = vadd.f32 %v1932, %v2067
        %v2147 = vadd.f32 %v1933, %v2069
        %v2148 = vadd.f32 %v1934, %v2072
        %v2149 = vadd.f32 %v1935, %v2074
        %v2150 = vadd.f32 %v1936, %v2077
        %v2151 = vadd.f32 %v1937, %v2079
        %v2152 = vadd.f32 %v1938, %v2082
        %v2153 = vadd.f32 %v1939, %v2084
        %v2154 = vadd.f32 %v1940, %v2087
        %v2155 = vadd.f32 %v1941, %v2089
        %v2156 = vadd.f32 %v1942, %v2092
        %v2157 = vadd.f32 %v1943, %v2094
        %v2158 = vadd.f32 %v1944, %v2097
        %v2159 = vadd.f32 %v1945, %v2099
        %v2160 = vadd.f32 %v1946, %v2102
        %v2161 = vadd.f32 %v1947, %v2104
        %v2162 = vadd.f32 %v1948, %v2107
        %v2163 = vadd.f32 %v1949, %v2109
        %v2164 = vadd.f32 %v1950, %v2112
        %v2165 = vadd.f32 %v1951, %v2114
        %v2166 = vadd.f32 %v1952, %v2117
        %v2167 = vadd.f32 %v1953, %v2119
        %v2168 = vadd.f32 %v1954, %v2122
        %v2169 = vadd.f32 %v1955, %v2124
        %v2170 = vadd.f32 %v1956, %v2127
        %v2171 = vadd.f32 %v1957, %v2129
        %v2172 = vadd.f32 %v1958, %v2132
        %v2173 = vadd.f32 %v1959, %v2134
        %v2174 = vadd.f32 %v1960, %v2137
        %v2175 = vadd.f32 %v1961, %v2139
        %v2176 = vadd.f32 %v1962, %v2142
        %v2177 = vadd.f32 %v1963, %v2144
        %v2179 = vrot.slane %v580, 5
        %v2180 = vrot.slane %v2179, 4
        %v2181 = vrot.slane %v581, 5
        %v2182 = vsel %vm1420, %v2180, %v2181
        %v2183 = vrot.slane %v2181, 4
        %v2184 = vrot.slane %v582, 5
        %v2185 = vsel %vm1420, %v2183, %v2184
        %s2186 = scalar_lea.vmem [#allocation5], 320
        %v2187 = vld [vmem:[%s2186] sm:$0xf]
        %v2188 = vld [vmem:[%s2186 + $0x4] sm:$0xf]
        %v2189 = vld [vmem:[%s2186 + $0x8] sm:$0xf]
        %v2190 = vld [vmem:[%s2186 + $0xc] sm:$0xf]
        %v2191 = vld [vmem:[%s2186 + $0x10] sm:$0xf]
        %v2192 = vld [vmem:[%s2186 + $0x14] sm:$0xf]
        %v2193 = vld [vmem:[%s2186 + $0x18] sm:$0xf]
        %v2194 = vld [vmem:[%s2186 + $0x1c] sm:$0xf]
        %v2195 = vld [vmem:[%s2186 + $0x20] sm:$0xf]
        %v2196 = vld [vmem:[%s2186 + $0x24] sm:$0xf]
        %v2197 = vld [vmem:[%s2186 + $0x28] sm:$0xf]
        %v2198 = vld [vmem:[%s2186 + $0x2c] sm:$0xf]
        %v2199 = vld [vmem:[%s2186 + $0x30] sm:$0xf]
        %v2200 = vld [vmem:[%s2186 + $0x34] sm:$0xf]
        %v2201 = vld [vmem:[%s2186 + $0x38] sm:$0xf]
        %v2202 = vld [vmem:[%s2186 + $0x3c] sm:$0xf]
        %v2203 = vunpack.c.l.b16 %v2182
        %v2204 = vunpack.c.l.b16 %v2185
        %v2205 = vpack.c.b16 %v2204, %v2203
        %v2223 = vunpack.c.l.b16 %v2187
        %v2224 = vunpack.c.l.b16 %v2188
        %v2225 = vunpack.c.l.b16 %v2189
        %v2226 = vunpack.c.l.b16 %v2190
        %v2227 = vunpack.c.l.b16 %v2191
        %v2228 = vunpack.c.l.b16 %v2192
        %v2229 = vunpack.c.l.b16 %v2193
        %v2230 = vunpack.c.l.b16 %v2194
        %v2231 = vunpack.c.l.b16 %v2195
        %v2232 = vunpack.c.l.b16 %v2196
        %v2233 = vunpack.c.l.b16 %v2197
        %v2234 = vunpack.c.l.b16 %v2198
        %v2235 = vunpack.c.l.b16 %v2199
        %v2236 = vunpack.c.l.b16 %v2200
        %v2237 = vunpack.c.l.b16 %v2201
        %v2238 = vunpack.c.l.b16 %v2202
        %v2239 = vpack.c.b16 %v2224, %v2223
        %v2240 = vpack.c.b16 %v2226, %v2225
        %v2241 = vpack.c.b16 %v2228, %v2227
        %v2242 = vpack.c.b16 %v2230, %v2229
        %v2243 = vpack.c.b16 %v2232, %v2231
        %v2244 = vpack.c.b16 %v2234, %v2233
        %v2245 = vpack.c.b16 %v2236, %v2235
        %v2246 = vpack.c.b16 %v2238, %v2237
        %2255 = vmatpush.bf16.msra.mxu0 %v2246
        %2256 = vmatpush.bf16.msra.mxu0 %v2245
        %2257 = vmatpush.bf16.msra.mxu0 %v2244
        %2258 = vmatpush.bf16.msra.mxu0 %v2243
        %2259 = vmatpush.bf16.msra.mxu0 %v2242
        %2260 = vmatpush.bf16.msra.mxu0 %v2241
        %2261 = vmatpush.bf16.msra.mxu0 %v2240
        %2262 = vmatpush.bf16.msra.mxu0 %v2239
        %2263 = vmatmul.bf16.gmra.mxu0 %v1574
        %v2264 = vpop.f32.mrf.mxu0
        %v2265 = vadd.f32 0.0, %v2264
        %v2266 = vpop.f32.mrf.mxu0
        %v2267 = vadd.f32 0.0, %v2266
        %2268 = vmatmul.bf16.gmra.mxu0 %v1573
        %v2269 = vpop.f32.mrf.mxu0
        %v2270 = vadd.f32 0.0, %v2269
        %v2271 = vpop.f32.mrf.mxu0
        %v2272 = vadd.f32 0.0, %v2271
        %2273 = vmatmul.bf16.gmra.mxu0 %v1575
        %v2274 = vpop.f32.mrf.mxu0
        %v2275 = vadd.f32 0.0, %v2274
        %v2276 = vpop.f32.mrf.mxu0
        %v2277 = vadd.f32 0.0, %v2276
        %2278 = vmatmul.bf16.gmra.mxu0 %v1576
        %v2279 = vpop.f32.mrf.mxu0
        %v2280 = vadd.f32 0.0, %v2279
        %v2281 = vpop.f32.mrf.mxu0
        %v2282 = vadd.f32 0.0, %v2281
        %2283 = vmatmul.bf16.gmra.mxu0 %v1577
        %v2284 = vpop.f32.mrf.mxu0
        %v2285 = vadd.f32 0.0, %v2284
        %v2286 = vpop.f32.mrf.mxu0
        %v2287 = vadd.f32 0.0, %v2286
        %2288 = vmatmul.bf16.gmra.mxu0 %v1578
        %v2289 = vpop.f32.mrf.mxu0
        %v2290 = vadd.f32 0.0, %v2289
        %v2291 = vpop.f32.mrf.mxu0
        %v2292 = vadd.f32 0.0, %v2291
        %2293 = vmatmul.bf16.gmra.mxu0 %v1579
        %v2294 = vpop.f32.mrf.mxu0
        %v2295 = vadd.f32 0.0, %v2294
        %v2296 = vpop.f32.mrf.mxu0
        %v2297 = vadd.f32 0.0, %v2296
        %2298 = vmatmul.bf16.gmra.mxu0 %v1580
        %v2299 = vpop.f32.mrf.mxu0
        %v2300 = vadd.f32 0.0, %v2299
        %v2301 = vpop.f32.mrf.mxu0
        %v2302 = vadd.f32 0.0, %v2301
        %2303 = vmatmul.bf16.gmra.mxu0 %v1581
        %v2304 = vpop.f32.mrf.mxu0
        %v2305 = vadd.f32 0.0, %v2304
        %v2306 = vpop.f32.mrf.mxu0
        %v2307 = vadd.f32 0.0, %v2306
        %2308 = vmatmul.bf16.gmra.mxu0 %v1582
        %v2309 = vpop.f32.mrf.mxu0
        %v2310 = vadd.f32 0.0, %v2309
        %v2311 = vpop.f32.mrf.mxu0
        %v2312 = vadd.f32 0.0, %v2311
        %2313 = vmatmul.bf16.gmra.mxu0 %v1583
        %v2314 = vpop.f32.mrf.mxu0
        %v2315 = vadd.f32 0.0, %v2314
        %v2316 = vpop.f32.mrf.mxu0
        %v2317 = vadd.f32 0.0, %v2316
        %2318 = vmatmul.bf16.gmra.mxu0 %v1584
        %v2319 = vpop.f32.mrf.mxu0
        %v2320 = vadd.f32 0.0, %v2319
        %v2321 = vpop.f32.mrf.mxu0
        %v2322 = vadd.f32 0.0, %v2321
        %2323 = vmatmul.bf16.gmra.mxu0 %v1585
        %v2324 = vpop.f32.mrf.mxu0
        %v2325 = vadd.f32 0.0, %v2324
        %v2326 = vpop.f32.mrf.mxu0
        %v2327 = vadd.f32 0.0, %v2326
        %2328 = vmatmul.bf16.gmra.mxu0 %v1586
        %v2329 = vpop.f32.mrf.mxu0
        %v2330 = vadd.f32 0.0, %v2329
        %v2331 = vpop.f32.mrf.mxu0
        %v2332 = vadd.f32 0.0, %v2331
        %2333 = vmatmul.bf16.gmra.mxu0 %v1587
        %v2334 = vpop.f32.mrf.mxu0
        %v2335 = vadd.f32 0.0, %v2334
        %v2336 = vpop.f32.mrf.mxu0
        %v2337 = vadd.f32 0.0, %v2336
        %2338 = vmatmul.bf16.gmra.mxu0 %v2205
        %v2339 = vpop.f32.mrf.mxu0
        %v2340 = vadd.f32 0.0, %v2339
        %v2341 = vpop.f32.mrf.mxu0
        %v2342 = vadd.f32 0.0, %v2341
        %2343 = vdwg.mxu0
        %v2344 = vadd.f32 %v2146, %v2265
        %v2345 = vadd.f32 %v2147, %v2267
        %v2346 = vadd.f32 %v2148, %v2270
        %v2347 = vadd.f32 %v2149, %v2272
        %v2348 = vadd.f32 %v2150, %v2275
        %v2349 = vadd.f32 %v2151, %v2277
        %v2350 = vadd.f32 %v2152, %v2280
        %v2351 = vadd.f32 %v2153, %v2282
        %v2352 = vadd.f32 %v2154, %v2285
        %v2353 = vadd.f32 %v2155, %v2287
        %v2354 = vadd.f32 %v2156, %v2290
        %v2355 = vadd.f32 %v2157, %v2292
        %v2356 = vadd.f32 %v2158, %v2295
        %v2357 = vadd.f32 %v2159, %v2297
        %v2358 = vadd.f32 %v2160, %v2300
        %v2359 = vadd.f32 %v2161, %v2302
        %v2360 = vadd.f32 %v2162, %v2305
        %v2361 = vadd.f32 %v2163, %v2307
        %v2362 = vadd.f32 %v2164, %v2310
        %v2363 = vadd.f32 %v2165, %v2312
        %v2364 = vadd.f32 %v2166, %v2315
        %v2365 = vadd.f32 %v2167, %v2317
        %v2366 = vadd.f32 %v2168, %v2320
        %v2367 = vadd.f32 %v2169, %v2322
        %v2368 = vadd.f32 %v2170, %v2325
        %v2369 = vadd.f32 %v2171, %v2327
        %v2370 = vadd.f32 %v2172, %v2330
        %v2371 = vadd.f32 %v2173, %v2332
        %v2372 = vadd.f32 %v2174, %v2335
        %v2373 = vadd.f32 %v2175, %v2337
        %v2374 = vadd.f32 %v2176, %v2340
        %v2375 = vadd.f32 %v2177, %v2342
        %s2376 = scalar_lea.vmem [#allocation5], 384
        %v2377 = vld [vmem:[%s2376] sm:$0xf]
        %v2378 = vld [vmem:[%s2376 + $0x4] sm:$0xf]
        %v2379 = vld [vmem:[%s2376 + $0x8] sm:$0xf]
        %v2380 = vld [vmem:[%s2376 + $0xc] sm:$0xf]
        %v2381 = vld [vmem:[%s2376 + $0x10] sm:$0xf]
        %v2382 = vld [vmem:[%s2376 + $0x14] sm:$0xf]
        %v2383 = vld [vmem:[%s2376 + $0x18] sm:$0xf]
        %v2384 = vld [vmem:[%s2376 + $0x1c] sm:$0xf]
        %v2385 = vld [vmem:[%s2376 + $0x20] sm:$0xf]
        %v2386 = vld [vmem:[%s2376 + $0x24] sm:$0xf]
        %v2387 = vld [vmem:[%s2376 + $0x28] sm:$0xf]
        %v2388 = vld [vmem:[%s2376 + $0x2c] sm:$0xf]
        %v2389 = vld [vmem:[%s2376 + $0x30] sm:$0xf]
        %v2390 = vld [vmem:[%s2376 + $0x34] sm:$0xf]
        %v2391 = vld [vmem:[%s2376 + $0x38] sm:$0xf]
        %v2392 = vld [vmem:[%s2376 + $0x3c] sm:$0xf]
        %v2409 = vunpack.c.l.b16 %v2377
        %v2410 = vunpack.c.l.b16 %v2378
        %v2411 = vunpack.c.l.b16 %v2379
        %v2412 = vunpack.c.l.b16 %v2380
        %v2413 = vunpack.c.l.b16 %v2381
        %v2414 = vunpack.c.l.b16 %v2382
        %v2415 = vunpack.c.l.b16 %v2383
        %v2416 = vunpack.c.l.b16 %v2384
        %v2417 = vunpack.c.l.b16 %v2385
        %v2418 = vunpack.c.l.b16 %v2386
        %v2419 = vunpack.c.l.b16 %v2387
        %v2420 = vunpack.c.l.b16 %v2388
        %v2421 = vunpack.c.l.b16 %v2389
        %v2422 = vunpack.c.l.b16 %v2390
        %v2423 = vunpack.c.l.b16 %v2391
        %v2424 = vunpack.c.l.b16 %v2392
        %v2425 = vpack.c.b16 %v2410, %v2409
        %v2426 = vpack.c.b16 %v2412, %v2411
        %v2427 = vpack.c.b16 %v2414, %v2413
        %v2428 = vpack.c.b16 %v2416, %v2415
        %v2429 = vpack.c.b16 %v2418, %v2417
        %v2430 = vpack.c.b16 %v2420, %v2419
        %v2431 = vpack.c.b16 %v2422, %v2421
        %v2432 = vpack.c.b16 %v2424, %v2423
        %2441 = vmatpush.bf16.msra.mxu0 %v2432
        %2442 = vmatpush.bf16.msra.mxu0 %v2431
        %2443 = vmatpush.bf16.msra.mxu0 %v2430
        %2444 = vmatpush.bf16.msra.mxu0 %v2429
        %2445 = vmatpush.bf16.msra.mxu0 %v2428
        %2446 = vmatpush.bf16.msra.mxu0 %v2427
        %2447 = vmatpush.bf16.msra.mxu0 %v2426
        %2448 = vmatpush.bf16.msra.mxu0 %v2425
        %2449 = vmatmul.bf16.gmra.mxu0 %v1236
        %v2450 = vpop.f32.mrf.mxu0
        %v2451 = vadd.f32 0.0, %v2450
        %v2452 = vpop.f32.mrf.mxu0
        %v2453 = vadd.f32 0.0, %v2452
        %2454 = vmatmul.bf16.gmra.mxu0 %v1238
        %v2455 = vpop.f32.mrf.mxu0
        %v2456 = vadd.f32 0.0, %v2455
        %v2457 = vpop.f32.mrf.mxu0
        %v2458 = vadd.f32 0.0, %v2457
        %2459 = vmatmul.bf16.gmra.mxu0 %v1239
        %v2460 = vpop.f32.mrf.mxu0
        %v2461 = vadd.f32 0.0, %v2460
        %v2462 = vpop.f32.mrf.mxu0
        %v2463 = vadd.f32 0.0, %v2462
        %2464 = vmatmul.bf16.gmra.mxu0 %v1240
        %v2465 = vpop.f32.mrf.mxu0
        %v2466 = vadd.f32 0.0, %v2465
        %v2467 = vpop.f32.mrf.mxu0
        %v2468 = vadd.f32 0.0, %v2467
        %2469 = vmatmul.bf16.gmra.mxu0 %v1241
        %v2470 = vpop.f32.mrf.mxu0
        %v2471 = vadd.f32 0.0, %v2470
        %v2472 = vpop.f32.mrf.mxu0
        %v2473 = vadd.f32 0.0, %v2472
        %2474 = vmatmul.bf16.gmra.mxu0 %v1242
        %v2475 = vpop.f32.mrf.mxu0
        %v2476 = vadd.f32 0.0, %v2475
        %v2477 = vpop.f32.mrf.mxu0
        %v2478 = vadd.f32 0.0, %v2477
        %2479 = vmatmul.bf16.gmra.mxu0 %v1243
        %v2480 = vpop.f32.mrf.mxu0
        %v2481 = vadd.f32 0.0, %v2480
        %v2482 = vpop.f32.mrf.mxu0
        %v2483 = vadd.f32 0.0, %v2482
        %2484 = vmatmul.bf16.gmra.mxu0 %v1244
        %v2485 = vpop.f32.mrf.mxu0
        %v2486 = vadd.f32 0.0, %v2485
        %v2487 = vpop.f32.mrf.mxu0
        %v2488 = vadd.f32 0.0, %v2487
        %2489 = vmatmul.bf16.gmra.mxu0 %v1245
        %v2490 = vpop.f32.mrf.mxu0
        %v2491 = vadd.f32 0.0, %v2490
        %v2492 = vpop.f32.mrf.mxu0
        %v2493 = vadd.f32 0.0, %v2492
        %2494 = vmatmul.bf16.gmra.mxu0 %v1246
        %v2495 = vpop.f32.mrf.mxu0
        %v2496 = vadd.f32 0.0, %v2495
        %v2497 = vpop.f32.mrf.mxu0
        %v2498 = vadd.f32 0.0, %v2497
        %2499 = vmatmul.bf16.gmra.mxu0 %v1247
        %v2500 = vpop.f32.mrf.mxu0
        %v2501 = vadd.f32 0.0, %v2500
        %v2502 = vpop.f32.mrf.mxu0
        %v2503 = vadd.f32 0.0, %v2502
        %2504 = vmatmul.bf16.gmra.mxu0 %v1248
        %v2505 = vpop.f32.mrf.mxu0
        %v2506 = vadd.f32 0.0, %v2505
        %v2507 = vpop.f32.mrf.mxu0
        %v2508 = vadd.f32 0.0, %v2507
        %2509 = vmatmul.bf16.gmra.mxu0 %v1249
        %v2510 = vpop.f32.mrf.mxu0
        %v2511 = vadd.f32 0.0, %v2510
        %v2512 = vpop.f32.mrf.mxu0
        %v2513 = vadd.f32 0.0, %v2512
        %2514 = vmatmul.bf16.gmra.mxu0 %v1250
        %v2515 = vpop.f32.mrf.mxu0
        %v2516 = vadd.f32 0.0, %v2515
        %v2517 = vpop.f32.mrf.mxu0
        %v2518 = vadd.f32 0.0, %v2517
        %2519 = vmatmul.bf16.gmra.mxu0 %v1793
        %v2520 = vpop.f32.mrf.mxu0
        %v2521 = vadd.f32 0.0, %v2520
        %v2522 = vpop.f32.mrf.mxu0
        %v2523 = vadd.f32 0.0, %v2522
        %2524 = vmatmul.bf16.gmra.mxu0 %v1250
        %v2525 = vpop.f32.mrf.mxu0
        %v2526 = vadd.f32 0.0, %v2525
        %v2527 = vpop.f32.mrf.mxu0
        %v2528 = vadd.f32 0.0, %v2527
        %2529 = vdwg.mxu0
        %v2530 = vadd.f32 %v2344, %v2451
        %v2531 = vadd.f32 %v2345, %v2453
        %v2532 = vadd.f32 %v2346, %v2456
        %v2533 = vadd.f32 %v2347, %v2458
        %v2534 = vadd.f32 %v2348, %v2461
        %v2535 = vadd.f32 %v2349, %v2463
        %v2536 = vadd.f32 %v2350, %v2466
        %v2537 = vadd.f32 %v2351, %v2468
        %v2538 = vadd.f32 %v2352, %v2471
        %v2539 = vadd.f32 %v2353, %v2473
        %v2540 = vadd.f32 %v2354, %v2476
        %v2541 = vadd.f32 %v2355, %v2478
        %v2542 = vadd.f32 %v2356, %v2481
        %v2543 = vadd.f32 %v2357, %v2483
        %v2544 = vadd.f32 %v2358, %v2486
        %v2545 = vadd.f32 %v2359, %v2488
        %v2546 = vadd.f32 %v2360, %v2491
        %v2547 = vadd.f32 %v2361, %v2493
        %v2548 = vadd.f32 %v2362, %v2496
        %v2549 = vadd.f32 %v2363, %v2498
        %v2550 = vadd.f32 %v2364, %v2501
        %v2551 = vadd.f32 %v2365, %v2503
        %v2552 = vadd.f32 %v2366, %v2506
        %v2553 = vadd.f32 %v2367, %v2508
        %v2554 = vadd.f32 %v2368, %v2511
        %v2555 = vadd.f32 %v2369, %v2513
        %v2556 = vadd.f32 %v2370, %v2516
        %v2557 = vadd.f32 %v2371, %v2518
        %v2558 = vadd.f32 %v2372, %v2521
        %v2559 = vadd.f32 %v2373, %v2523
        %v2560 = vadd.f32 %v2374, %v2526
        %v2561 = vadd.f32 %v2375, %v2528
        %s2562 = scalar_lea.vmem [#allocation5], 448
        %v2563 = vld [vmem:[%s2562] sm:$0xf]
        %v2564 = vld [vmem:[%s2562 + $0x4] sm:$0xf]
        %v2565 = vld [vmem:[%s2562 + $0x8] sm:$0xf]
        %v2566 = vld [vmem:[%s2562 + $0xc] sm:$0xf]
        %v2567 = vld [vmem:[%s2562 + $0x10] sm:$0xf]
        %v2568 = vld [vmem:[%s2562 + $0x14] sm:$0xf]
        %v2569 = vld [vmem:[%s2562 + $0x18] sm:$0xf]
        %v2570 = vld [vmem:[%s2562 + $0x1c] sm:$0xf]
        %v2571 = vld [vmem:[%s2562 + $0x20] sm:$0xf]
        %v2572 = vld [vmem:[%s2562 + $0x24] sm:$0xf]
        %v2573 = vld [vmem:[%s2562 + $0x28] sm:$0xf]
        %v2574 = vld [vmem:[%s2562 + $0x2c] sm:$0xf]
        %v2575 = vld [vmem:[%s2562 + $0x30] sm:$0xf]
        %v2576 = vld [vmem:[%s2562 + $0x34] sm:$0xf]
        %v2577 = vld [vmem:[%s2562 + $0x38] sm:$0xf]
        %v2578 = vld [vmem:[%s2562 + $0x3c] sm:$0xf]
        %v2595 = vunpack.c.l.b16 %v2563
        %v2596 = vunpack.c.l.b16 %v2564
        %v2597 = vunpack.c.l.b16 %v2565
        %v2598 = vunpack.c.l.b16 %v2566
        %v2599 = vunpack.c.l.b16 %v2567
        %v2600 = vunpack.c.l.b16 %v2568
        %v2601 = vunpack.c.l.b16 %v2569
        %v2602 = vunpack.c.l.b16 %v2570
        %v2603 = vunpack.c.l.b16 %v2571
        %v2604 = vunpack.c.l.b16 %v2572
        %v2605 = vunpack.c.l.b16 %v2573
        %v2606 = vunpack.c.l.b16 %v2574
        %v2607 = vunpack.c.l.b16 %v2575
        %v2608 = vunpack.c.l.b16 %v2576
        %v2609 = vunpack.c.l.b16 %v2577
        %v2610 = vunpack.c.l.b16 %v2578
        %v2611 = vpack.c.b16 %v2596, %v2595
        %v2612 = vpack.c.b16 %v2598, %v2597
        %v2613 = vpack.c.b16 %v2600, %v2599
        %v2614 = vpack.c.b16 %v2602, %v2601
        %v2615 = vpack.c.b16 %v2604, %v2603
        %v2616 = vpack.c.b16 %v2606, %v2605
        %v2617 = vpack.c.b16 %v2608, %v2607
        %v2618 = vpack.c.b16 %v2610, %v2609
        %2627 = vmatpush.bf16.msra.mxu0 %v2618
        %2628 = vmatpush.bf16.msra.mxu0 %v2617
        %2629 = vmatpush.bf16.msra.mxu0 %v2616
        %2630 = vmatpush.bf16.msra.mxu0 %v2615
        %2631 = vmatpush.bf16.msra.mxu0 %v2614
        %2632 = vmatpush.bf16.msra.mxu0 %v2613
        %2633 = vmatpush.bf16.msra.mxu0 %v2612
        %2634 = vmatpush.bf16.msra.mxu0 %v2611
        %2635 = vmatmul.bf16.gmra.mxu0 %v1009
        %v2636 = vpop.f32.mrf.mxu0
        %v2637 = vadd.f32 0.0, %v2636
        %v2638 = vpop.f32.mrf.mxu0
        %v2639 = vadd.f32 0.0, %v2638
        %2640 = vmatmul.bf16.gmra.mxu0 %v1011
        %v2641 = vpop.f32.mrf.mxu0
        %v2642 = vadd.f32 0.0, %v2641
        %v2643 = vpop.f32.mrf.mxu0
        %v2644 = vadd.f32 0.0, %v2643
        %2645 = vmatmul.bf16.gmra.mxu0 %v1012
        %v2646 = vpop.f32.mrf.mxu0
        %v2647 = vadd.f32 0.0, %v2646
        %v2648 = vpop.f32.mrf.mxu0
        %v2649 = vadd.f32 0.0, %v2648
        %2650 = vmatmul.bf16.gmra.mxu0 %v1013
        %v2651 = vpop.f32.mrf.mxu0
        %v2652 = vadd.f32 0.0, %v2651
        %v2653 = vpop.f32.mrf.mxu0
        %v2654 = vadd.f32 0.0, %v2653
        %2655 = vmatmul.bf16.gmra.mxu0 %v1014
        %v2656 = vpop.f32.mrf.mxu0
        %v2657 = vadd.f32 0.0, %v2656
        %v2658 = vpop.f32.mrf.mxu0
        %v2659 = vadd.f32 0.0, %v2658
        %2660 = vmatmul.bf16.gmra.mxu0 %v1015
        %v2661 = vpop.f32.mrf.mxu0
        %v2662 = vadd.f32 0.0, %v2661
        %v2663 = vpop.f32.mrf.mxu0
        %v2664 = vadd.f32 0.0, %v2663
        %2665 = vmatmul.bf16.gmra.mxu0 %v1016
        %v2666 = vpop.f32.mrf.mxu0
        %v2667 = vadd.f32 0.0, %v2666
        %v2668 = vpop.f32.mrf.mxu0
        %v2669 = vadd.f32 0.0, %v2668
        %2670 = vmatmul.bf16.gmra.mxu0 %v1017
        %v2671 = vpop.f32.mrf.mxu0
        %v2672 = vadd.f32 0.0, %v2671
        %v2673 = vpop.f32.mrf.mxu0
        %v2674 = vadd.f32 0.0, %v2673
        %2675 = vmatmul.bf16.gmra.mxu0 %v1018
        %v2676 = vpop.f32.mrf.mxu0
        %v2677 = vadd.f32 0.0, %v2676
        %v2678 = vpop.f32.mrf.mxu0
        %v2679 = vadd.f32 0.0, %v2678
        %2680 = vmatmul.bf16.gmra.mxu0 %v1019
        %v2681 = vpop.f32.mrf.mxu0
        %v2682 = vadd.f32 0.0, %v2681
        %v2683 = vpop.f32.mrf.mxu0
        %v2684 = vadd.f32 0.0, %v2683
        %2685 = vmatmul.bf16.gmra.mxu0 %v1020
        %v2686 = vpop.f32.mrf.mxu0
        %v2687 = vadd.f32 0.0, %v2686
        %v2688 = vpop.f32.mrf.mxu0
        %v2689 = vadd.f32 0.0, %v2688
        %2690 = vmatmul.bf16.gmra.mxu0 %v1021
        %v2691 = vpop.f32.mrf.mxu0
        %v2692 = vadd.f32 0.0, %v2691
        %v2693 = vpop.f32.mrf.mxu0
        %v2694 = vadd.f32 0.0, %v2693
        %2695 = vmatmul.bf16.gmra.mxu0 %v1022
        %v2696 = vpop.f32.mrf.mxu0
        %v2697 = vadd.f32 0.0, %v2696
        %v2698 = vpop.f32.mrf.mxu0
        %v2699 = vadd.f32 0.0, %v2698
        %2700 = vmatmul.bf16.gmra.mxu0 %v1023
        %v2701 = vpop.f32.mrf.mxu0
        %v2702 = vadd.f32 0.0, %v2701
        %v2703 = vpop.f32.mrf.mxu0
        %v2704 = vadd.f32 0.0, %v2703
        %2705 = vmatmul.bf16.gmra.mxu0 %v2007
        %v2706 = vpop.f32.mrf.mxu0
        %v2707 = vadd.f32 0.0, %v2706
        %v2708 = vpop.f32.mrf.mxu0
        %v2709 = vadd.f32 0.0, %v2708
        %2710 = vmatmul.bf16.gmra.mxu0 %v1023
        %v2711 = vpop.f32.mrf.mxu0
        %v2712 = vadd.f32 0.0, %v2711
        %v2713 = vpop.f32.mrf.mxu0
        %v2714 = vadd.f32 0.0, %v2713
        %2715 = vdwg.mxu0
        %v2716 = vadd.f32 %v2530, %v2637
        %v2717 = vadd.f32 %v2531, %v2639
        %v2718 = vadd.f32 %v2532, %v2642
        %v2719 = vadd.f32 %v2533, %v2644
        %v2720 = vadd.f32 %v2534, %v2647
        %v2721 = vadd.f32 %v2535, %v2649
        %v2722 = vadd.f32 %v2536, %v2652
        %v2723 = vadd.f32 %v2537, %v2654
        %v2724 = vadd.f32 %v2538, %v2657
        %v2725 = vadd.f32 %v2539, %v2659
        %v2726 = vadd.f32 %v2540, %v2662
        %v2727 = vadd.f32 %v2541, %v2664
        %v2728 = vadd.f32 %v2542, %v2667
        %v2729 = vadd.f32 %v2543, %v2669
        %v2730 = vadd.f32 %v2544, %v2672
        %v2731 = vadd.f32 %v2545, %v2674
        %v2732 = vadd.f32 %v2546, %v2677
        %v2733 = vadd.f32 %v2547, %v2679
        %v2734 = vadd.f32 %v2548, %v2682
        %v2735 = vadd.f32 %v2549, %v2684
        %v2736 = vadd.f32 %v2550, %v2687
        %v2737 = vadd.f32 %v2551, %v2689
        %v2738 = vadd.f32 %v2552, %v2692
        %v2739 = vadd.f32 %v2553, %v2694
        %v2740 = vadd.f32 %v2554, %v2697
        %v2741 = vadd.f32 %v2555, %v2699
        %v2742 = vadd.f32 %v2556, %v2702
        %v2743 = vadd.f32 %v2557, %v2704
        %v2744 = vadd.f32 %v2558, %v2707
        %v2745 = vadd.f32 %v2559, %v2709
        %v2746 = vadd.f32 %v2560, %v2712
        %v2747 = vadd.f32 %v2561, %v2714
        %s2748 = scalar_lea.vmem [#allocation5], 512
        %v2749 = vld [vmem:[%s2748] sm:$0xf]
        %v2750 = vld [vmem:[%s2748 + $0x4] sm:$0xf]
        %v2751 = vld [vmem:[%s2748 + $0x8] sm:$0xf]
        %v2752 = vld [vmem:[%s2748 + $0xc] sm:$0xf]
        %v2753 = vld [vmem:[%s2748 + $0x10] sm:$0xf]
        %v2754 = vld [vmem:[%s2748 + $0x14] sm:$0xf]
        %v2755 = vld [vmem:[%s2748 + $0x18] sm:$0xf]
        %v2756 = vld [vmem:[%s2748 + $0x1c] sm:$0xf]
        %v2757 = vld [vmem:[%s2748 + $0x20] sm:$0xf]
        %v2758 = vld [vmem:[%s2748 + $0x24] sm:$0xf]
        %v2759 = vld [vmem:[%s2748 + $0x28] sm:$0xf]
        %v2760 = vld [vmem:[%s2748 + $0x2c] sm:$0xf]
        %v2761 = vld [vmem:[%s2748 + $0x30] sm:$0xf]
        %v2762 = vld [vmem:[%s2748 + $0x34] sm:$0xf]
        %v2763 = vld [vmem:[%s2748 + $0x38] sm:$0xf]
        %v2764 = vld [vmem:[%s2748 + $0x3c] sm:$0xf]
        %v2781 = vunpack.c.l.b16 %v2749
        %v2782 = vunpack.c.l.b16 %v2750
        %v2783 = vunpack.c.l.b16 %v2751
        %v2784 = vunpack.c.l.b16 %v2752
        %v2785 = vunpack.c.l.b16 %v2753
        %v2786 = vunpack.c.l.b16 %v2754
        %v2787 = vunpack.c.l.b16 %v2755
        %v2788 = vunpack.c.l.b16 %v2756
        %v2789 = vunpack.c.l.b16 %v2757
        %v2790 = vunpack.c.l.b16 %v2758
        %v2791 = vunpack.c.l.b16 %v2759
        %v2792 = vunpack.c.l.b16 %v2760
        %v2793 = vunpack.c.l.b16 %v2761
        %v2794 = vunpack.c.l.b16 %v2762
        %v2795 = vunpack.c.l.b16 %v2763
        %v2796 = vunpack.c.l.b16 %v2764
        %v2797 = vpack.c.b16 %v2782, %v2781
        %v2798 = vpack.c.b16 %v2784, %v2783
        %v2799 = vpack.c.b16 %v2786, %v2785
        %v2800 = vpack.c.b16 %v2788, %v2787
        %v2801 = vpack.c.b16 %v2790, %v2789
        %v2802 = vpack.c.b16 %v2792, %v2791
        %v2803 = vpack.c.b16 %v2794, %v2793
        %v2804 = vpack.c.b16 %v2796, %v2795
        %2813 = vmatpush.bf16.msra.mxu0 %v2804
        %2814 = vmatpush.bf16.msra.mxu0 %v2803
        %2815 = vmatpush.bf16.msra.mxu0 %v2802
        %2816 = vmatpush.bf16.msra.mxu0 %v2801
        %2817 = vmatpush.bf16.msra.mxu0 %v2800
        %2818 = vmatpush.bf16.msra.mxu0 %v2799
        %2819 = vmatpush.bf16.msra.mxu0 %v2798
        %2820 = vmatpush.bf16.msra.mxu0 %v2797
        %2821 = vmatmul.bf16.gmra.mxu0 %v1573
        %v2822 = vpop.f32.mrf.mxu0
        %v2823 = vadd.f32 0.0, %v2822
        %v2824 = vpop.f32.mrf.mxu0
        %v2825 = vadd.f32 0.0, %v2824
        %2826 = vmatmul.bf16.gmra.mxu0 %v1575
        %v2827 = vpop.f32.mrf.mxu0
        %v2828 = vadd.f32 0.0, %v2827
        %v2829 = vpop.f32.mrf.mxu0
        %v2830 = vadd.f32 0.0, %v2829
        %2831 = vmatmul.bf16.gmra.mxu0 %v1576
        %v2832 = vpop.f32.mrf.mxu0
        %v2833 = vadd.f32 0.0, %v2832
        %v2834 = vpop.f32.mrf.mxu0
        %v2835 = vadd.f32 0.0, %v2834
        %2836 = vmatmul.bf16.gmra.mxu0 %v1577
        %v2837 = vpop.f32.mrf.mxu0
        %v2838 = vadd.f32 0.0, %v2837
        %v2839 = vpop.f32.mrf.mxu0
        %v2840 = vadd.f32 0.0, %v2839
        %2841 = vmatmul.bf16.gmra.mxu0 %v1578
        %v2842 = vpop.f32.mrf.mxu0
        %v2843 = vadd.f32 0.0, %v2842
        %v2844 = vpop.f32.mrf.mxu0
        %v2845 = vadd.f32 0.0, %v2844
        %2846 = vmatmul.bf16.gmra.mxu0 %v1579
        %v2847 = vpop.f32.mrf.mxu0
        %v2848 = vadd.f32 0.0, %v2847
        %v2849 = vpop.f32.mrf.mxu0
        %v2850 = vadd.f32 0.0, %v2849
        %2851 = vmatmul.bf16.gmra.mxu0 %v1580
        %v2852 = vpop.f32.mrf.mxu0
        %v2853 = vadd.f32 0.0, %v2852
        %v2854 = vpop.f32.mrf.mxu0
        %v2855 = vadd.f32 0.0, %v2854
        %2856 = vmatmul.bf16.gmra.mxu0 %v1581
        %v2857 = vpop.f32.mrf.mxu0
        %v2858 = vadd.f32 0.0, %v2857
        %v2859 = vpop.f32.mrf.mxu0
        %v2860 = vadd.f32 0.0, %v2859
        %2861 = vmatmul.bf16.gmra.mxu0 %v1582
        %v2862 = vpop.f32.mrf.mxu0
        %v2863 = vadd.f32 0.0, %v2862
        %v2864 = vpop.f32.mrf.mxu0
        %v2865 = vadd.f32 0.0, %v2864
        %2866 = vmatmul.bf16.gmra.mxu0 %v1583
        %v2867 = vpop.f32.mrf.mxu0
        %v2868 = vadd.f32 0.0, %v2867
        %v2869 = vpop.f32.mrf.mxu0
        %v2870 = vadd.f32 0.0, %v2869
        %2871 = vmatmul.bf16.gmra.mxu0 %v1584
        %v2872 = vpop.f32.mrf.mxu0
        %v2873 = vadd.f32 0.0, %v2872
        %v2874 = vpop.f32.mrf.mxu0
        %v2875 = vadd.f32 0.0, %v2874
        %2876 = vmatmul.bf16.gmra.mxu0 %v1585
        %v2877 = vpop.f32.mrf.mxu0
        %v2878 = vadd.f32 0.0, %v2877
        %v2879 = vpop.f32.mrf.mxu0
        %v2880 = vadd.f32 0.0, %v2879
        %2881 = vmatmul.bf16.gmra.mxu0 %v1586
        %v2882 = vpop.f32.mrf.mxu0
        %v2883 = vadd.f32 0.0, %v2882
        %v2884 = vpop.f32.mrf.mxu0
        %v2885 = vadd.f32 0.0, %v2884
        %2886 = vmatmul.bf16.gmra.mxu0 %v1587
        %v2887 = vpop.f32.mrf.mxu0
        %v2888 = vadd.f32 0.0, %v2887
        %v2889 = vpop.f32.mrf.mxu0
        %v2890 = vadd.f32 0.0, %v2889
        %2891 = vmatmul.bf16.gmra.mxu0 %v2205
        %v2892 = vpop.f32.mrf.mxu0
        %v2893 = vadd.f32 0.0, %v2892
        %v2894 = vpop.f32.mrf.mxu0
        %v2895 = vadd.f32 0.0, %v2894
        %2896 = vmatmul.bf16.gmra.mxu0 %v1587
        %v2897 = vpop.f32.mrf.mxu0
        %v2898 = vadd.f32 0.0, %v2897
        %v2899 = vpop.f32.mrf.mxu0
        %v2900 = vadd.f32 0.0, %v2899
        %2901 = vdwg.mxu0
        %v2902 = vadd.f32 %v2716, %v2823
        %v2903 = vadd.f32 %v2717, %v2825
        %v2904 = vadd.f32 %v2718, %v2828
        %v2905 = vadd.f32 %v2719, %v2830
        %v2906 = vadd.f32 %v2720, %v2833
        %v2907 = vadd.f32 %v2721, %v2835
        %v2908 = vadd.f32 %v2722, %v2838
        %v2909 = vadd.f32 %v2723, %v2840
        %v2910 = vadd.f32 %v2724, %v2843
        %v2911 = vadd.f32 %v2725, %v2845
        %v2912 = vadd.f32 %v2726, %v2848
        %v2913 = vadd.f32 %v2727, %v2850
        %v2914 = vadd.f32 %v2728, %v2853
        %v2915 = vadd.f32 %v2729, %v2855
        %v2916 = vadd.f32 %v2730, %v2858
        %v2917 = vadd.f32 %v2731, %v2860
        %v2918 = vadd.f32 %v2732, %v2863
        %v2919 = vadd.f32 %v2733, %v2865
        %v2920 = vadd.f32 %v2734, %v2868
        %v2921 = vadd.f32 %v2735, %v2870
        %v2922 = vadd.f32 %v2736, %v2873
        %v2923 = vadd.f32 %v2737, %v2875
        %v2924 = vadd.f32 %v2738, %v2878
        %v2925 = vadd.f32 %v2739, %v2880
        %v2926 = vadd.f32 %v2740, %v2883
        %v2927 = vadd.f32 %v2741, %v2885
        %v2928 = vadd.f32 %v2742, %v2888
        %v2929 = vadd.f32 %v2743, %v2890
        %v2930 = vadd.f32 %v2744, %v2893
        %v2931 = vadd.f32 %v2745, %v2895
        %v2932 = vadd.f32 %v2746, %v2898
        %v2933 = vadd.f32 %v2747, %v2900
        %v2934 = vld [vmem:[%s2] sm:$0x1]
        %v2936 = vperm.slane %v2934, 0
        %v2938 = vadd.f32 %v2902, %v2936
        %v2939 = vadd.f32 %v2903, %v2936
        %v2940 = vadd.f32 %v2904, %v2936
        %v2941 = vadd.f32 %v2905, %v2936
        %v2942 = vadd.f32 %v2906, %v2936
        %v2943 = vadd.f32 %v2907, %v2936
        %v2944 = vadd.f32 %v2908, %v2936
        %v2945 = vadd.f32 %v2909, %v2936
        %v2946 = vadd.f32 %v2910, %v2936
        %v2947 = vadd.f32 %v2911, %v2936
        %v2948 = vadd.f32 %v2912, %v2936
        %v2949 = vadd.f32 %v2913, %v2936
        %v2950 = vadd.f32 %v2914, %v2936
        %v2951 = vadd.f32 %v2915, %v2936
        %v2952 = vadd.f32 %v2916, %v2936
        %v2953 = vadd.f32 %v2917, %v2936
        %v2954 = vadd.f32 %v2918, %v2936
        %v2955 = vadd.f32 %v2919, %v2936
        %v2956 = vadd.f32 %v2920, %v2936
        %v2957 = vadd.f32 %v2921, %v2936
        %v2958 = vadd.f32 %v2922, %v2936
        %v2959 = vadd.f32 %v2923, %v2936
        %v2960 = vadd.f32 %v2924, %v2936
        %v2961 = vadd.f32 %v2925, %v2936
        %v2962 = vadd.f32 %v2926, %v2936
        %v2963 = vadd.f32 %v2927, %v2936
        %v2964 = vadd.f32 %v2928, %v2936
        %v2965 = vadd.f32 %v2929, %v2936
        %v2966 = vadd.f32 %v2930, %v2936
        %v2967 = vadd.f32 %v2931, %v2936
        %v2968 = vadd.f32 %v2932, %v2936
        %v2969 = vadd.f32 %v2933, %v2936
        %v2970 = vadd.f32 %v2938, %v2939
        %v2971 = vadd.f32 %v2970, %v2940
        %v2972 = vadd.f32 %v2971, %v2941
        %v2973 = vadd.f32 %v2972, %v2942
        %v2974 = vadd.f32 %v2973, %v2943
        %v2975 = vadd.f32 %v2974, %v2944
        %v2976 = vadd.f32 %v2975, %v2945
        %v2977 = vadd.f32 %v2976, %v2946
        %v2978 = vadd.f32 %v2977, %v2947
        %v2979 = vadd.f32 %v2978, %v2948
        %v2980 = vadd.f32 %v2979, %v2949
        %v2981 = vadd.f32 %v2980, %v2950
        %v2982 = vadd.f32 %v2981, %v2951
        %v2983 = vadd.f32 %v2982, %v2952
        %v2984 = vadd.f32 %v2983, %v2953
        %v2985 = vadd.f32 %v2984, %v2954
        %v2986 = vadd.f32 %v2985, %v2955
        %v2987 = vadd.f32 %v2986, %v2956
        %v2988 = vadd.f32 %v2987, %v2957
        %v2989 = vadd.f32 %v2988, %v2958
        %v2990 = vadd.f32 %v2989, %v2959
        %v2991 = vadd.f32 %v2990, %v2960
        %v2992 = vadd.f32 %v2991, %v2961
        %v2993 = vadd.f32 %v2992, %v2962
        %v2994 = vadd.f32 %v2993, %v2963
        %v2995 = vadd.f32 %v2994, %v2964
        %v2996 = vadd.f32 %v2995, %v2965
        %v2997 = vadd.f32 %v2996, %v2966
        %v2998 = vadd.f32 %v2997, %v2967
        %v2999 = vadd.f32 %v2998, %v2968
        %v3000 = vadd.f32 %v2999, %v2969
        %v3001 = vrot.slane %v3000, 4
        %v3002 = vadd.f32 %v3000, %v3001
        %v3003 = vrot.slane %v3002, 2
        %v3004 = vadd.f32 %v3002, %v3003
        %v3005 = vrot.slane %v3004, 1
        %v3006 = vadd.f32 %v3004, %v3005
        %v3007 = vrcp.pop 256.0
        %v3008 = vmul.f32 256.0, %v3007
        %v3009 = vsub.f32 1.0, %v3008
        %v3010 = vmul.f32 %v3007, %v3009
        %v3011 = vadd.f32 %v3007, %v3010
        %vm3012 = vweird.f32 %v3007
        %v3013 = vsel %vm3012, %v3007, %v3011
        %v3014 = vmul.f32 %v3006, %v3013
        %v3015 = vsub.f32 %v2938, %v3014
        %v3016 = vsub.f32 %v2939, %v3014
        %v3017 = vsub.f32 %v2940, %v3014
        %v3018 = vsub.f32 %v2941, %v3014
        %v3019 = vsub.f32 %v2942, %v3014
        %v3020 = vsub.f32 %v2943, %v3014
        %v3021 = vsub.f32 %v2944, %v3014
        %v3022 = vsub.f32 %v2945, %v3014
        %v3023 = vsub.f32 %v2946, %v3014
        %v3024 = vsub.f32 %v2947, %v3014
        %v3025 = vsub.f32 %v2948, %v3014
        %v3026 = vsub.f32 %v2949, %v3014
        %v3027 = vsub.f32 %v2950, %v3014
        %v3028 = vsub.f32 %v2951, %v3014
        %v3029 = vsub.f32 %v2952, %v3014
        %v3030 = vsub.f32 %v2953, %v3014
        %v3031 = vsub.f32 %v2954, %v3014
        %v3032 = vsub.f32 %v2955, %v3014
        %v3033 = vsub.f32 %v2956, %v3014
        %v3034 = vsub.f32 %v2957, %v3014
        %v3035 = vsub.f32 %v2958, %v3014
        %v3036 = vsub.f32 %v2959, %v3014
        %v3037 = vsub.f32 %v2960, %v3014
        %v3038 = vsub.f32 %v2961, %v3014
        %v3039 = vsub.f32 %v2962, %v3014
        %v3040 = vsub.f32 %v2963, %v3014
        %v3041 = vsub.f32 %v2964, %v3014
        %v3042 = vsub.f32 %v2965, %v3014
        %v3043 = vsub.f32 %v2966, %v3014
        %v3044 = vsub.f32 %v2967, %v3014
        %v3045 = vsub.f32 %v2968, %v3014
        %v3046 = vsub.f32 %v2969, %v3014
        %v3047 = vmul.f32 %v3015, %v3015
        %v3048 = vmul.f32 %v3016, %v3016
        %v3049 = vmul.f32 %v3017, %v3017
        %v3050 = vmul.f32 %v3018, %v3018
        %v3051 = vmul.f32 %v3019, %v3019
        %v3052 = vmul.f32 %v3020, %v3020
        %v3053 = vmul.f32 %v3021, %v3021
        %v3054 = vmul.f32 %v3022, %v3022
        %v3055 = vmul.f32 %v3023, %v3023
        %v3056 = vmul.f32 %v3024, %v3024
        %v3057 = vmul.f32 %v3025, %v3025
        %v3058 = vmul.f32 %v3026, %v3026
        %v3059 = vmul.f32 %v3027, %v3027
        %v3060 = vmul.f32 %v3028, %v3028
        %v3061 = vmul.f32 %v3029, %v3029
        %v3062 = vmul.f32 %v3030, %v3030
        %v3063 = vmul.f32 %v3031, %v3031
        %v3064 = vmul.f32 %v3032, %v3032
        %v3065 = vmul.f32 %v3033, %v3033
        %v3066 = vmul.f32 %v3034, %v3034
        %v3067 = vmul.f32 %v3035, %v3035
        %v3068 = vmul.f32 %v3036, %v3036
        %v3069 = vmul.f32 %v3037, %v3037
        %v3070 = vmul.f32 %v3038, %v3038
        %v3071 = vmul.f32 %v3039, %v3039
        %v3072 = vmul.f32 %v3040, %v3040
        %v3073 = vmul.f32 %v3041, %v3041
        %v3074 = vmul.f32 %v3042, %v3042
        %v3075 = vmul.f32 %v3043, %v3043
        %v3076 = vmul.f32 %v3044, %v3044
        %v3077 = vmul.f32 %v3045, %v3045
        %v3078 = vmul.f32 %v3046, %v3046
        %v3079 = vadd.f32 %v3047, %v3048
        %v3080 = vadd.f32 %v3079, %v3049
        %v3081 = vadd.f32 %v3080, %v3050
        %v3082 = vadd.f32 %v3081, %v3051
        %v3083 = vadd.f32 %v3082, %v3052
        %v3084 = vadd.f32 %v3083, %v3053
        %v3085 = vadd.f32 %v3084, %v3054
        %v3086 = vadd.f32 %v3085, %v3055
        %v3087 = vadd.f32 %v3086, %v3056
        %v3088 = vadd.f32 %v3087, %v3057
        %v3089 = vadd.f32 %v3088, %v3058
        %v3090 = vadd.f32 %v3089, %v3059
        %v3091 = vadd.f32 %v3090, %v3060
        %v3092 = vadd.f32 %v3091, %v3061
        %v3093 = vadd.f32 %v3092, %v3062
        %v3094 = vadd.f32 %v3093, %v3063
        %v3095 = vadd.f32 %v3094, %v3064
        %v3096 = vadd.f32 %v3095, %v3065
        %v3097 = vadd.f32 %v3096, %v3066
        %v3098 = vadd.f32 %v3097, %v3067
        %v3099 = vadd.f32 %v3098, %v3068
        %v3100 = vadd.f32 %v3099, %v3069
        %v3101 = vadd.f32 %v3100, %v3070
        %v3102 = vadd.f32 %v3101, %v3071
        %v3103 = vadd.f32 %v3102, %v3072
        %v3104 = vadd.f32 %v3103, %v3073
        %v3105 = vadd.f32 %v3104, %v3074
        %v3106 = vadd.f32 %v3105, %v3075
        %v3107 = vadd.f32 %v3106, %v3076
        %v3108 = vadd.f32 %v3107, %v3077
        %v3109 = vadd.f32 %v3108, %v3078
        %v3110 = vrot.slane %v3109, 4
        %v3111 = vadd.f32 %v3109, %v3110
        %v3112 = vrot.slane %v3111, 2
        %v3113 = vadd.f32 %v3111, %v3112
        %v3114 = vrot.slane %v3113, 1
        %v3115 = vadd.f32 %v3113, %v3114
        %v3116 = vmul.f32 %v3115, %v3013
        %v3117 = vadd.f32 %v3116, 1e-05
        %v3118 = vrsqrt.pop %v3117
        %v3119 = vmul.f32 %v3118, %v3117
        %v3120 = vmul.f32 %v3119, %v3118
        %v3121 = vmul.f32 0.5, %v3120
        %v3122 = vsub.f32 1.5, %v3121
        %v3123 = vmul.f32 %v3118, %v3122
        %vm3124 = vweird.f32 %v3117
        %vm3125 = vweird.f32 %v3118
        %vm3126 = vmor %vm3124, %vm3125
        %v3127 = vsel %vm3126, %v3118, %v3123
        %v3128 = vmul.f32 %v3015, %v3127
        %v3129 = vmul.f32 %v3016, %v3127
        %v3130 = vmul.f32 %v3017, %v3127
        %v3131 = vmul.f32 %v3018, %v3127
        %v3132 = vmul.f32 %v3019, %v3127
        %v3133 = vmul.f32 %v3020, %v3127
        %v3134 = vmul.f32 %v3021, %v3127
        %v3135 = vmul.f32 %v3022, %v3127
        %v3136 = vmul.f32 %v3023, %v3127
        %v3137 = vmul.f32 %v3024, %v3127
        %v3138 = vmul.f32 %v3025, %v3127
        %v3139 = vmul.f32 %v3026, %v3127
        %v3140 = vmul.f32 %v3027, %v3127
        %v3141 = vmul.f32 %v3028, %v3127
        %v3142 = vmul.f32 %v3029, %v3127
        %v3143 = vmul.f32 %v3030, %v3127
        %v3144 = vmul.f32 %v3031, %v3127
        %v3145 = vmul.f32 %v3032, %v3127
        %v3146 = vmul.f32 %v3033, %v3127
        %v3147 = vmul.f32 %v3034, %v3127
        %v3148 = vmul.f32 %v3035, %v3127
        %v3149 = vmul.f32 %v3036, %v3127
        %v3150 = vmul.f32 %v3037, %v3127
        %v3151 = vmul.f32 %v3038, %v3127
        %v3152 = vmul.f32 %v3039, %v3127
        %v3153 = vmul.f32 %v3040, %v3127
        %v3154 = vmul.f32 %v3041, %v3127
        %v3155 = vmul.f32 %v3042, %v3127
        %v3156 = vmul.f32 %v3043, %v3127
        %v3157 = vmul.f32 %v3044, %v3127
        %v3158 = vmul.f32 %v3045, %v3127
        %v3159 = vmul.f32 %v3046, %v3127
        %v3160 = vmax.f32 %v3128, 0.0
        %v3161 = vmax.f32 %v3129, 0.0
        %v3162 = vmax.f32 %v3130, 0.0
        %v3163 = vmax.f32 %v3131, 0.0
        %v3164 = vmax.f32 %v3132, 0.0
        %v3165 = vmax.f32 %v3133, 0.0
        %v3166 = vmax.f32 %v3134, 0.0
        %v3167 = vmax.f32 %v3135, 0.0
        %v3168 = vmax.f32 %v3136, 0.0
        %v3169 = vmax.f32 %v3137, 0.0
        %v3170 = vmax.f32 %v3138, 0.0
        %v3171 = vmax.f32 %v3139, 0.0
        %v3172 = vmax.f32 %v3140, 0.0
        %v3173 = vmax.f32 %v3141, 0.0
        %v3174 = vmax.f32 %v3142, 0.0
        %v3175 = vmax.f32 %v3143, 0.0
        %v3176 = vmax.f32 %v3144, 0.0
        %v3177 = vmax.f32 %v3145, 0.0
        %v3178 = vmax.f32 %v3146, 0.0
        %v3179 = vmax.f32 %v3147, 0.0
        %v3180 = vmax.f32 %v3148, 0.0
        %v3181 = vmax.f32 %v3149, 0.0
        %v3182 = vmax.f32 %v3150, 0.0
        %v3183 = vmax.f32 %v3151, 0.0
        %v3184 = vmax.f32 %v3152, 0.0
        %v3185 = vmax.f32 %v3153, 0.0
        %v3186 = vmax.f32 %v3154, 0.0
        %v3187 = vmax.f32 %v3155, 0.0
        %v3188 = vmax.f32 %v3156, 0.0
        %v3189 = vmax.f32 %v3157, 0.0
        %v3190 = vmax.f32 %v3158, 0.0
        %v3191 = vmax.f32 %v3159, 0.0
        %v3208 = vrot.slane %v3162, 1
        %v3209 = vrot.slane %v3160, 1
        %v3210 = vrot.slane %v3164, 1
        %v3211 = vrot.slane %v3166, 1
        %v3212 = vrot.slane %v3168, 1
        %v3213 = vrot.slane %v3170, 1
        %v3214 = vrot.slane %v3172, 1
        %v3215 = vrot.slane %v3174, 1
        %v3216 = vrot.slane %v3176, 1
        %v3217 = vrot.slane %v3178, 1
        %v3218 = vrot.slane %v3180, 1
        %v3219 = vrot.slane %v3182, 1
        %v3220 = vrot.slane %v3184, 1
        %v3221 = vrot.slane %v3186, 1
        %v3222 = vrot.slane %v3188, 1
        %v3223 = vrot.slane %v3190, 1
        %v3256 = vrot.slane %v3162, 7
        %v3257 = vrot.slane %v3163, 7
        %v3258 = vsel %vm374, %v3256, %v3257
        %v3259 = vrot.slane %v3160, 7
        %v3260 = vrot.slane %v3161, 7
        %v3261 = vsel %vm374, %v3259, %v3260
        %v3262 = vrot.slane %v3164, 7
        %v3263 = vrot.slane %v3165, 7
        %v3264 = vsel %vm374, %v3262, %v3263
        %v3265 = vrot.slane %v3166, 7
        %v3266 = vrot.slane %v3167, 7
        %v3267 = vsel %vm374, %v3265, %v3266
        %v3268 = vrot.slane %v3168, 7
        %v3269 = vrot.slane %v3169, 7
        %v3270 = vsel %vm374, %v3268, %v3269
        %v3271 = vrot.slane %v3170, 7
        %v3272 = vrot.slane %v3171, 7
        %v3273 = vsel %vm374, %v3271, %v3272
        %v3274 = vrot.slane %v3172, 7
        %v3275 = vrot.slane %v3173, 7
        %v3276 = vsel %vm374, %v3274, %v3275
        %v3277 = vrot.slane %v3174, 7
        %v3278 = vrot.slane %v3175, 7
        %v3279 = vsel %vm374, %v3277, %v3278
        %v3280 = vrot.slane %v3176, 7
        %v3281 = vrot.slane %v3177, 7
        %v3282 = vsel %vm374, %v3280, %v3281
        %v3283 = vrot.slane %v3178, 7
        %v3284 = vrot.slane %v3179, 7
        %v3285 = vsel %vm374, %v3283, %v3284
        %v3286 = vrot.slane %v3180, 7
        %v3287 = vrot.slane %v3181, 7
        %v3288 = vsel %vm374, %v3286, %v3287
        %v3289 = vrot.slane %v3182, 7
        %v3290 = vrot.slane %v3183, 7
        %v3291 = vsel %vm374, %v3289, %v3290
        %v3292 = vrot.slane %v3184, 7
        %v3293 = vrot.slane %v3185, 7
        %v3294 = vsel %vm374, %v3292, %v3293
        %v3295 = vrot.slane %v3186, 7
        %v3296 = vrot.slane %v3187, 7
        %v3297 = vsel %vm374, %v3295, %v3296
        %v3298 = vrot.slane %v3188, 7
        %v3299 = vrot.slane %v3189, 7
        %v3300 = vsel %vm374, %v3298, %v3299
        %v3301 = vrot.slane %v3190, 7
        %v3302 = vrot.slane %v3191, 7
        %v3303 = vsel %vm374, %v3301, %v3302
        %v3352 = vrot.slane %v3163, 5
        %v3353 = vrot.slane %v3161, 5
        %v3354 = vrot.slane %v3165, 5
        %v3355 = vrot.slane %v3167, 5
        %v3356 = vrot.slane %v3169, 5
        %v3357 = vrot.slane %v3171, 5
        %v3358 = vrot.slane %v3173, 5
        %v3359 = vrot.slane %v3175, 5
        %v3360 = vrot.slane %v3177, 5
        %v3361 = vrot.slane %v3179, 5
        %v3362 = vrot.slane %v3181, 5
        %v3363 = vrot.slane %v3183, 5
        %v3364 = vrot.slane %v3185, 5
        %v3365 = vrot.slane %v3187, 5
        %v3366 = vrot.slane %v3189, 5
        %v3367 = vrot.slane %v3191, 5
        %v3384 = vsel %vm374, %v3208, %v3256
        %v3385 = vsel %vm374, %v3209, %v3259
        %v3386 = vsel %vm374, %v3210, %v3262
        %v3387 = vsel %vm374, %v3211, %v3265
        %v3388 = vsel %vm374, %v3212, %v3268
        %v3389 = vsel %vm374, %v3213, %v3271
        %v3390 = vsel %vm374, %v3214, %v3274
        %v3391 = vsel %vm374, %v3215, %v3277
        %v3392 = vsel %vm374, %v3216, %v3280
        %v3393 = vsel %vm374, %v3217, %v3283
        %v3394 = vsel %vm374, %v3218, %v3286
        %v3395 = vsel %vm374, %v3219, %v3289
        %v3396 = vsel %vm374, %v3220, %v3292
        %v3397 = vsel %vm374, %v3221, %v3295
        %v3398 = vsel %vm374, %v3222, %v3298
        %v3399 = vsel %vm374, %v3223, %v3301
        %v3400 = vsel %vm374, %v3257, %v3352
        %v3401 = vsel %vm374, %v3260, %v3353
        %v3402 = vsel %vm374, %v3263, %v3354
        %v3403 = vsel %vm374, %v3266, %v3355
        %v3404 = vsel %vm374, %v3269, %v3356
        %v3405 = vsel %vm374, %v3272, %v3357
        %v3406 = vsel %vm374, %v3275, %v3358
        %v3407 = vsel %vm374, %v3278, %v3359
        %v3408 = vsel %vm374, %v3281, %v3360
        %v3409 = vsel %vm374, %v3284, %v3361
        %v3410 = vsel %vm374, %v3287, %v3362
        %v3411 = vsel %vm374, %v3290, %v3363
        %v3412 = vsel %vm374, %v3293, %v3364
        %v3413 = vsel %vm374, %v3296, %v3365
        %v3414 = vsel %vm374, %v3299, %v3366
        %v3415 = vsel %vm374, %v3302, %v3367
        %v3416 = vpack.c.bf16 %v3384, %v3384
        %v3417 = vpack.c.bf16 %v3258, %v3258
        %v3418 = vpack.c.bf16 %v3400, %v3400
        %v3419 = vpack.c.bf16 %v3385, %v3385
        %v3420 = vpack.c.bf16 %v3261, %v3261
        %v3421 = vpack.c.bf16 %v3401, %v3401
        %v3422 = vpack.c.bf16 %v3386, %v3386
        %v3423 = vpack.c.bf16 %v3264, %v3264
        %v3424 = vpack.c.bf16 %v3402, %v3402
        %v3425 = vpack.c.bf16 %v3387, %v3387
        %v3426 = vpack.c.bf16 %v3267, %v3267
        %v3427 = vpack.c.bf16 %v3403, %v3403
        %v3428 = vpack.c.bf16 %v3388, %v3388
        %v3429 = vpack.c.bf16 %v3270, %v3270
        %v3430 = vpack.c.bf16 %v3404, %v3404
        %v3431 = vpack.c.bf16 %v3389, %v3389
        %v3432 = vpack.c.bf16 %v3273, %v3273
        %v3433 = vpack.c.bf16 %v3405, %v3405
        %v3434 = vpack.c.bf16 %v3390, %v3390
        %v3435 = vpack.c.bf16 %v3276, %v3276
        %v3436 = vpack.c.bf16 %v3406, %v3406
        %v3437 = vpack.c.bf16 %v3391, %v3391
        %v3438 = vpack.c.bf16 %v3279, %v3279
        %v3439 = vpack.c.bf16 %v3407, %v3407
        %v3440 = vpack.c.bf16 %v3392, %v3392
        %v3441 = vpack.c.bf16 %v3282, %v3282
        %v3442 = vpack.c.bf16 %v3408, %v3408
        %v3443 = vpack.c.bf16 %v3393, %v3393
        %v3444 = vpack.c.bf16 %v3285, %v3285
        %v3445 = vpack.c.bf16 %v3409, %v3409
        %v3446 = vpack.c.bf16 %v3394, %v3394
        %v3447 = vpack.c.bf16 %v3288, %v3288
        %v3448 = vpack.c.bf16 %v3410, %v3410
        %v3449 = vpack.c.bf16 %v3395, %v3395
        %v3450 = vpack.c.bf16 %v3291, %v3291
        %v3451 = vpack.c.bf16 %v3411, %v3411
        %v3452 = vpack.c.bf16 %v3396, %v3396
        %v3453 = vpack.c.bf16 %v3294, %v3294
        %v3454 = vpack.c.bf16 %v3412, %v3412
        %v3455 = vpack.c.bf16 %v3397, %v3397
        %v3456 = vpack.c.bf16 %v3297, %v3297
        %v3457 = vpack.c.bf16 %v3413, %v3413
        %v3458 = vpack.c.bf16 %v3398, %v3398
        %v3459 = vpack.c.bf16 %v3300, %v3300
        %v3460 = vpack.c.bf16 %v3414, %v3414
        %v3461 = vpack.c.bf16 %v3399, %v3399
        %v3462 = vpack.c.bf16 %v3303, %v3303
        %v3463 = vpack.c.bf16 %v3415, %v3415
        %v3464 = vld [vmem:[#allocation7] sm:$0xf]
        %v3465 = vld [vmem:[#allocation7 + $0x4] sm:$0xf]
        %v3466 = vld [vmem:[#allocation7 + $0x8] sm:$0xf]
        %v3467 = vld [vmem:[#allocation7 + $0xc] sm:$0xf]
        %v3468 = vld [vmem:[#allocation7 + $0x10] sm:$0xf]
        %v3469 = vld [vmem:[#allocation7 + $0x14] sm:$0xf]
        %v3470 = vld [vmem:[#allocation7 + $0x18] sm:$0xf]
        %v3471 = vld [vmem:[#allocation7 + $0x1c] sm:$0xf]
        %v3472 = vld [vmem:[#allocation7 + $0x20] sm:$0xf]
        %v3473 = vld [vmem:[#allocation7 + $0x24] sm:$0xf]
        %v3474 = vld [vmem:[#allocation7 + $0x28] sm:$0xf]
        %v3475 = vld [vmem:[#allocation7 + $0x2c] sm:$0xf]
        %v3476 = vld [vmem:[#allocation7 + $0x30] sm:$0xf]
        %v3477 = vld [vmem:[#allocation7 + $0x34] sm:$0xf]
        %v3478 = vld [vmem:[#allocation7 + $0x38] sm:$0xf]
        %v3479 = vld [vmem:[#allocation7 + $0x3c] sm:$0xf]
        %v3481 = vshrl.u32 %v3416, 16
        %v3483 = vrot.slane %v3481, 4
        %v3484 = vshll.u32 %v3416, 16
        %v3486 = vrot.slane %v3484, 5
        %v3487 = vor.u32 %v3483, %v3486
        %v3488 = vrot.slane %v3487, 4
        %v3490 = vshll.u32 %v3417, 16
        %v3492 = vrot.slane %v3490, 5
        %v3493 = vsel %vm601, %v3488, %v3492
        %v3494 = vshrl.u32 %v3417, 16
        %v3496 = vrot.slane %v3494, 4
        %v3497 = vor.u32 %v3496, %v3492
        %v3498 = vrot.slane %v3497, 4
        %v3500 = vshll.u32 %v3418, 16
        %v3502 = vrot.slane %v3500, 5
        %v3503 = vsel %vm601, %v3498, %v3502
        %v3505 = vshrl.u32 %v3419, 16
        %v3507 = vrot.slane %v3505, 4
        %v3508 = vshll.u32 %v3419, 16
        %v3510 = vrot.slane %v3508, 5
        %v3511 = vor.u32 %v3507, %v3510
        %v3512 = vrot.slane %v3511, 4
        %v3514 = vshll.u32 %v3420, 16
        %v3516 = vrot.slane %v3514, 5
        %v3517 = vsel %vm601, %v3512, %v3516
        %v3518 = vshrl.u32 %v3420, 16
        %v3520 = vrot.slane %v3518, 4
        %v3521 = vor.u32 %v3520, %v3516
        %v3522 = vrot.slane %v3521, 4
        %v3524 = vshll.u32 %v3421, 16
        %v3526 = vrot.slane %v3524, 5
        %v3527 = vsel %vm601, %v3522, %v3526
        %v3529 = vshrl.u32 %v3422, 16
        %v3531 = vrot.slane %v3529, 4
        %v3532 = vshll.u32 %v3422, 16
        %v3534 = vrot.slane %v3532, 5
        %v3535 = vor.u32 %v3531, %v3534
        %v3536 = vrot.slane %v3535, 4
        %v3538 = vshll.u32 %v3423, 16
        %v3540 = vrot.slane %v3538, 5
        %v3541 = vsel %vm601, %v3536, %v3540
        %v3542 = vshrl.u32 %v3423, 16
        %v3544 = vrot.slane %v3542, 4
        %v3545 = vor.u32 %v3544, %v3540
        %v3546 = vrot.slane %v3545, 4
        %v3548 = vshll.u32 %v3424, 16
        %v3550 = vrot.slane %v3548, 5
        %v3551 = vsel %vm601, %v3546, %v3550
        %v3553 = vshrl.u32 %v3425, 16
        %v3555 = vrot.slane %v3553, 4
        %v3556 = vshll.u32 %v3425, 16
        %v3558 = vrot.slane %v3556, 5
        %v3559 = vor.u32 %v3555, %v3558
        %v3560 = vrot.slane %v3559, 4
        %v3562 = vshll.u32 %v3426, 16
        %v3564 = vrot.slane %v3562, 5
        %v3565 = vsel %vm601, %v3560, %v3564
        %v3566 = vshrl.u32 %v3426, 16
        %v3568 = vrot.slane %v3566, 4
        %v3569 = vor.u32 %v3568, %v3564
        %v3570 = vrot.slane %v3569, 4
        %v3572 = vshll.u32 %v3427, 16
        %v3574 = vrot.slane %v3572, 5
        %v3575 = vsel %vm601, %v3570, %v3574
        %v3577 = vshrl.u32 %v3428, 16
        %v3579 = vrot.slane %v3577, 4
        %v3580 = vshll.u32 %v3428, 16
        %v3582 = vrot.slane %v3580, 5
        %v3583 = vor.u32 %v3579, %v3582
        %v3584 = vrot.slane %v3583, 4
        %v3586 = vshll.u32 %v3429, 16
        %v3588 = vrot.slane %v3586, 5
        %v3589 = vsel %vm601, %v3584, %v3588
        %v3590 = vshrl.u32 %v3429, 16
        %v3592 = vrot.slane %v3590, 4
        %v3593 = vor.u32 %v3592, %v3588
        %v3594 = vrot.slane %v3593, 4
        %v3596 = vshll.u32 %v3430, 16
        %v3598 = vrot.slane %v3596, 5
        %v3599 = vsel %vm601, %v3594, %v3598
        %v3601 = vshrl.u32 %v3431, 16
        %v3603 = vrot.slane %v3601, 4
        %v3604 = vshll.u32 %v3431, 16
        %v3606 = vrot.slane %v3604, 5
        %v3607 = vor.u32 %v3603, %v3606
        %v3608 = vrot.slane %v3607, 4
        %v3610 = vshll.u32 %v3432, 16
        %v3612 = vrot.slane %v3610, 5
        %v3613 = vsel %vm601, %v3608, %v3612
        %v3614 = vshrl.u32 %v3432, 16
        %v3616 = vrot.slane %v3614, 4
        %v3617 = vor.u32 %v3616, %v3612
        %v3618 = vrot.slane %v3617, 4
        %v3620 = vshll.u32 %v3433, 16
        %v3622 = vrot.slane %v3620, 5
        %v3623 = vsel %vm601, %v3618, %v3622
        %v3625 = vshrl.u32 %v3434, 16
        %v3627 = vrot.slane %v3625, 4
        %v3628 = vshll.u32 %v3434, 16
        %v3630 = vrot.slane %v3628, 5
        %v3631 = vor.u32 %v3627, %v3630
        %v3632 = vrot.slane %v3631, 4
        %v3634 = vshll.u32 %v3435, 16
        %v3636 = vrot.slane %v3634, 5
        %v3637 = vsel %vm601, %v3632, %v3636
        %v3638 = vshrl.u32 %v3435, 16
        %v3640 = vrot.slane %v3638, 4
        %v3641 = vor.u32 %v3640, %v3636
        %v3642 = vrot.slane %v3641, 4
        %v3644 = vshll.u32 %v3436, 16
        %v3646 = vrot.slane %v3644, 5
        %v3647 = vsel %vm601, %v3642, %v3646
        %v3649 = vshrl.u32 %v3437, 16
        %v3651 = vrot.slane %v3649, 4
        %v3652 = vshll.u32 %v3437, 16
        %v3654 = vrot.slane %v3652, 5
        %v3655 = vor.u32 %v3651, %v3654
        %v3656 = vrot.slane %v3655, 4
        %v3658 = vshll.u32 %v3438, 16
        %v3660 = vrot.slane %v3658, 5
        %v3661 = vsel %vm601, %v3656, %v3660
        %v3662 = vshrl.u32 %v3438, 16
        %v3664 = vrot.slane %v3662, 4
        %v3665 = vor.u32 %v3664, %v3660
        %v3666 = vrot.slane %v3665, 4
        %v3668 = vshll.u32 %v3439, 16
        %v3670 = vrot.slane %v3668, 5
        %v3671 = vsel %vm601, %v3666, %v3670
        %v3673 = vshrl.u32 %v3440, 16
        %v3675 = vrot.slane %v3673, 4
        %v3676 = vshll.u32 %v3440, 16
        %v3678 = vrot.slane %v3676, 5
        %v3679 = vor.u32 %v3675, %v3678
        %v3680 = vrot.slane %v3679, 4
        %v3682 = vshll.u32 %v3441, 16
        %v3684 = vrot.slane %v3682, 5
        %v3685 = vsel %vm601, %v3680, %v3684
        %v3686 = vshrl.u32 %v3441, 16
        %v3688 = vrot.slane %v3686, 4
        %v3689 = vor.u32 %v3688, %v3684
        %v3690 = vrot.slane %v3689, 4
        %v3692 = vshll.u32 %v3442, 16
        %v3694 = vrot.slane %v3692, 5
        %v3695 = vsel %vm601, %v3690, %v3694
        %v3697 = vshrl.u32 %v3443, 16
        %v3699 = vrot.slane %v3697, 4
        %v3700 = vshll.u32 %v3443, 16
        %v3702 = vrot.slane %v3700, 5
        %v3703 = vor.u32 %v3699, %v3702
        %v3704 = vrot.slane %v3703, 4
        %v3706 = vshll.u32 %v3444, 16
        %v3708 = vrot.slane %v3706, 5
        %v3709 = vsel %vm601, %v3704, %v3708
        %v3710 = vshrl.u32 %v3444, 16
        %v3712 = vrot.slane %v3710, 4
        %v3713 = vor.u32 %v3712, %v3708
        %v3714 = vrot.slane %v3713, 4
        %v3716 = vshll.u32 %v3445, 16
        %v3718 = vrot.slane %v3716, 5
        %v3719 = vsel %vm601, %v3714, %v3718
        %v3721 = vshrl.u32 %v3446, 16
        %v3723 = vrot.slane %v3721, 4
        %v3724 = vshll.u32 %v3446, 16
        %v3726 = vrot.slane %v3724, 5
        %v3727 = vor.u32 %v3723, %v3726
        %v3728 = vrot.slane %v3727, 4
        %v3730 = vshll.u32 %v3447, 16
        %v3732 = vrot.slane %v3730, 5
        %v3733 = vsel %vm601, %v3728, %v3732
        %v3734 = vshrl.u32 %v3447, 16
        %v3736 = vrot.slane %v3734, 4
        %v3737 = vor.u32 %v3736, %v3732
        %v3738 = vrot.slane %v3737, 4
        %v3740 = vshll.u32 %v3448, 16
        %v3742 = vrot.slane %v3740, 5
        %v3743 = vsel %vm601, %v3738, %v3742
        %v3745 = vshrl.u32 %v3449, 16
        %v3747 = vrot.slane %v3745, 4
        %v3748 = vshll.u32 %v3449, 16
        %v3750 = vrot.slane %v3748, 5
        %v3751 = vor.u32 %v3747, %v3750
        %v3752 = vrot.slane %v3751, 4
        %v3754 = vshll.u32 %v3450, 16
        %v3756 = vrot.slane %v3754, 5
        %v3757 = vsel %vm601, %v3752, %v3756
        %v3758 = vshrl.u32 %v3450, 16
        %v3760 = vrot.slane %v3758, 4
        %v3761 = vor.u32 %v3760, %v3756
        %v3762 = vrot.slane %v3761, 4
        %v3764 = vshll.u32 %v3451, 16
        %v3766 = vrot.slane %v3764, 5
        %v3767 = vsel %vm601, %v3762, %v3766
        %v3769 = vshrl.u32 %v3452, 16
        %v3771 = vrot.slane %v3769, 4
        %v3772 = vshll.u32 %v3452, 16
        %v3774 = vrot.slane %v3772, 5
        %v3775 = vor.u32 %v3771, %v3774
        %v3776 = vrot.slane %v3775, 4
        %v3778 = vshll.u32 %v3453, 16
        %v3780 = vrot.slane %v3778, 5
        %v3781 = vsel %vm601, %v3776, %v3780
        %v3782 = vshrl.u32 %v3453, 16
        %v3784 = vrot.slane %v3782, 4
        %v3785 = vor.u32 %v3784, %v3780
        %v3786 = vrot.slane %v3785, 4
        %v3788 = vshll.u32 %v3454, 16
        %v3790 = vrot.slane %v3788, 5
        %v3791 = vsel %vm601, %v3786, %v3790
        %v3793 = vshrl.u32 %v3455, 16
        %v3795 = vrot.slane %v3793, 4
        %v3796 = vshll.u32 %v3455, 16
        %v3798 = vrot.slane %v3796, 5
        %v3799 = vor.u32 %v3795, %v3798
        %v3800 = vrot.slane %v3799, 4
        %v3802 = vshll.u32 %v3456, 16
        %v3804 = vrot.slane %v3802, 5
        %v3805 = vsel %vm601, %v3800, %v3804
        %v3806 = vshrl.u32 %v3456, 16
        %v3808 = vrot.slane %v3806, 4
        %v3809 = vor.u32 %v3808, %v3804
        %v3810 = vrot.slane %v3809, 4
        %v3812 = vshll.u32 %v3457, 16
        %v3814 = vrot.slane %v3812, 5
        %v3815 = vsel %vm601, %v3810, %v3814
        %v3817 = vshrl.u32 %v3458, 16
        %v3819 = vrot.slane %v3817, 4
        %v3820 = vshll.u32 %v3458, 16
        %v3822 = vrot.slane %v3820, 5
        %v3823 = vor.u32 %v3819, %v3822
        %v3824 = vrot.slane %v3823, 4
        %v3826 = vshll.u32 %v3459, 16
        %v3828 = vrot.slane %v3826, 5
        %v3829 = vsel %vm601, %v3824, %v3828
        %v3830 = vshrl.u32 %v3459, 16
        %v3832 = vrot.slane %v3830, 4
        %v3833 = vor.u32 %v3832, %v3828
        %v3834 = vrot.slane %v3833, 4
        %v3836 = vshll.u32 %v3460, 16
        %v3838 = vrot.slane %v3836, 5
        %v3839 = vsel %vm601, %v3834, %v3838
        %s3840 = scalar_lea.vmem [#allocation7], 64
        %v3841 = vld [vmem:[%s3840] sm:$0xf]
        %v3842 = vld [vmem:[%s3840 + $0x4] sm:$0xf]
        %v3843 = vld [vmem:[%s3840 + $0x8] sm:$0xf]
        %v3844 = vld [vmem:[%s3840 + $0xc] sm:$0xf]
        %v3845 = vld [vmem:[%s3840 + $0x10] sm:$0xf]
        %v3846 = vld [vmem:[%s3840 + $0x14] sm:$0xf]
        %v3847 = vld [vmem:[%s3840 + $0x18] sm:$0xf]
        %v3848 = vld [vmem:[%s3840 + $0x1c] sm:$0xf]
        %v3849 = vld [vmem:[%s3840 + $0x20] sm:$0xf]
        %v3850 = vld [vmem:[%s3840 + $0x24] sm:$0xf]
        %v3851 = vld [vmem:[%s3840 + $0x28] sm:$0xf]
        %v3852 = vld [vmem:[%s3840 + $0x2c] sm:$0xf]
        %v3853 = vld [vmem:[%s3840 + $0x30] sm:$0xf]
        %v3854 = vld [vmem:[%s3840 + $0x34] sm:$0xf]
        %v3855 = vld [vmem:[%s3840 + $0x38] sm:$0xf]
        %v3856 = vld [vmem:[%s3840 + $0x3c] sm:$0xf]
        %v3857 = vunpack.c.l.b16 %v3493
        %v3858 = vunpack.c.l.b16 %v3503
        %v3859 = vunpack.c.l.b16 %v3517
        %v3860 = vunpack.c.l.b16 %v3527
        %v3861 = vunpack.c.l.b16 %v3541
        %v3862 = vunpack.c.l.b16 %v3551
        %v3863 = vunpack.c.l.b16 %v3565
        %v3864 = vunpack.c.l.b16 %v3575
        %v3865 = vunpack.c.l.b16 %v3589
        %v3866 = vunpack.c.l.b16 %v3599
        %v3867 = vunpack.c.l.b16 %v3613
        %v3868 = vunpack.c.l.b16 %v3623
        %v3869 = vunpack.c.l.b16 %v3637
        %v3870 = vunpack.c.l.b16 %v3647
        %v3871 = vunpack.c.l.b16 %v3661
        %v3872 = vunpack.c.l.b16 %v3671
        %v3873 = vunpack.c.l.b16 %v3685
        %v3874 = vunpack.c.l.b16 %v3695
        %v3875 = vunpack.c.l.b16 %v3709
        %v3876 = vunpack.c.l.b16 %v3719
        %v3877 = vunpack.c.l.b16 %v3733
        %v3878 = vunpack.c.l.b16 %v3743
        %v3879 = vunpack.c.l.b16 %v3757
        %v3880 = vunpack.c.l.b16 %v3767
        %v3881 = vunpack.c.l.b16 %v3781
        %v3882 = vunpack.c.l.b16 %v3791
        %v3883 = vunpack.c.l.b16 %v3805
        %v3884 = vunpack.c.l.b16 %v3815
        %v3885 = vunpack.c.l.b16 %v3829
        %v3886 = vunpack.c.l.b16 %v3839
        %v3887 = vpack.c.b16 %v3858, %v3857
        %v3888 = vpack.c.b16 %v3860, %v3859
        %v3889 = vpack.c.b16 %v3862, %v3861
        %v3890 = vpack.c.b16 %v3864, %v3863
        %v3891 = vpack.c.b16 %v3866, %v3865
        %v3892 = vpack.c.b16 %v3868, %v3867
        %v3893 = vpack.c.b16 %v3870, %v3869
        %v3894 = vpack.c.b16 %v3872, %v3871
        %v3895 = vpack.c.b16 %v3874, %v3873
        %v3896 = vpack.c.b16 %v3876, %v3875
        %v3897 = vpack.c.b16 %v3878, %v3877
        %v3898 = vpack.c.b16 %v3880, %v3879
        %v3899 = vpack.c.b16 %v3882, %v3881
        %v3900 = vpack.c.b16 %v3884, %v3883
        %v3901 = vpack.c.b16 %v3886, %v3885
        %v3933 = vunpack.c.l.b16 %v3841
        %v3934 = vunpack.c.l.b16 %v3842
        %v3935 = vunpack.c.l.b16 %v3843
        %v3936 = vunpack.c.l.b16 %v3844
        %v3937 = vunpack.c.l.b16 %v3845
        %v3938 = vunpack.c.l.b16 %v3846
        %v3939 = vunpack.c.l.b16 %v3847
        %v3940 = vunpack.c.l.b16 %v3848
        %v3941 = vunpack.c.l.b16 %v3849
        %v3942 = vunpack.c.l.b16 %v3850
        %v3943 = vunpack.c.l.b16 %v3851
        %v3944 = vunpack.c.l.b16 %v3852
        %v3945 = vunpack.c.l.b16 %v3853
        %v3946 = vunpack.c.l.b16 %v3854
        %v3947 = vunpack.c.l.b16 %v3855
        %v3948 = vunpack.c.l.b16 %v3856
        %v3949 = vpack.c.b16 %v3934, %v3933
        %v3950 = vpack.c.b16 %v3936, %v3935
        %v3951 = vpack.c.b16 %v3938, %v3937
        %v3952 = vpack.c.b16 %v3940, %v3939
        %v3953 = vpack.c.b16 %v3942, %v3941
        %v3954 = vpack.c.b16 %v3944, %v3943
        %v3955 = vpack.c.b16 %v3946, %v3945
        %v3956 = vpack.c.b16 %v3948, %v3947
        %3965 = vmatpush.bf16.msra.mxu0 %v3956
        %3966 = vmatpush.bf16.msra.mxu0 %v3955
        %3967 = vmatpush.bf16.msra.mxu0 %v3954
        %3968 = vmatpush.bf16.msra.mxu0 %v3953
        %3969 = vmatpush.bf16.msra.mxu0 %v3952
        %3970 = vmatpush.bf16.msra.mxu0 %v3951
        %3971 = vmatpush.bf16.msra.mxu0 %v3950
        %3972 = vmatpush.bf16.msra.mxu0 %v3949
        %3973 = vmatmul.bf16.gmra.mxu0 %v3887
        %v3974 = vpop.f32.mrf.mxu0
        %v3975 = vadd.f32 0.0, %v3974
        %v3976 = vpop.f32.mrf.mxu0
        %v3977 = vadd.f32 0.0, %v3976
        %3978 = vmatmul.bf16.gmra.mxu0 %v3888
        %v3979 = vpop.f32.mrf.mxu0
        %v3980 = vadd.f32 0.0, %v3979
        %v3981 = vpop.f32.mrf.mxu0
        %v3982 = vadd.f32 0.0, %v3981
        %3983 = vmatmul.bf16.gmra.mxu0 %v3887
        %v3984 = vpop.f32.mrf.mxu0
        %v3985 = vadd.f32 0.0, %v3984
        %v3986 = vpop.f32.mrf.mxu0
        %v3987 = vadd.f32 0.0, %v3986
        %3988 = vmatmul.bf16.gmra.mxu0 %v3889
        %v3989 = vpop.f32.mrf.mxu0
        %v3990 = vadd.f32 0.0, %v3989
        %v3991 = vpop.f32.mrf.mxu0
        %v3992 = vadd.f32 0.0, %v3991
        %3993 = vmatmul.bf16.gmra.mxu0 %v3890
        %v3994 = vpop.f32.mrf.mxu0
        %v3995 = vadd.f32 0.0, %v3994
        %v3996 = vpop.f32.mrf.mxu0
        %v3997 = vadd.f32 0.0, %v3996
        %3998 = vmatmul.bf16.gmra.mxu0 %v3891
        %v3999 = vpop.f32.mrf.mxu0
        %v4000 = vadd.f32 0.0, %v3999
        %v4001 = vpop.f32.mrf.mxu0
        %v4002 = vadd.f32 0.0, %v4001
        %4003 = vmatmul.bf16.gmra.mxu0 %v3892
        %v4004 = vpop.f32.mrf.mxu0
        %v4005 = vadd.f32 0.0, %v4004
        %v4006 = vpop.f32.mrf.mxu0
        %v4007 = vadd.f32 0.0, %v4006
        %4008 = vmatmul.bf16.gmra.mxu0 %v3893
        %v4009 = vpop.f32.mrf.mxu0
        %v4010 = vadd.f32 0.0, %v4009
        %v4011 = vpop.f32.mrf.mxu0
        %v4012 = vadd.f32 0.0, %v4011
        %4013 = vmatmul.bf16.gmra.mxu0 %v3894
        %v4014 = vpop.f32.mrf.mxu0
        %v4015 = vadd.f32 0.0, %v4014
        %v4016 = vpop.f32.mrf.mxu0
        %v4017 = vadd.f32 0.0, %v4016
        %4018 = vmatmul.bf16.gmra.mxu0 %v3895
        %v4019 = vpop.f32.mrf.mxu0
        %v4020 = vadd.f32 0.0, %v4019
        %v4021 = vpop.f32.mrf.mxu0
        %v4022 = vadd.f32 0.0, %v4021
        %4023 = vmatmul.bf16.gmra.mxu0 %v3896
        %v4024 = vpop.f32.mrf.mxu0
        %v4025 = vadd.f32 0.0, %v4024
        %v4026 = vpop.f32.mrf.mxu0
        %v4027 = vadd.f32 0.0, %v4026
        %4028 = vmatmul.bf16.gmra.mxu0 %v3897
        %v4029 = vpop.f32.mrf.mxu0
        %v4030 = vadd.f32 0.0, %v4029
        %v4031 = vpop.f32.mrf.mxu0
        %v4032 = vadd.f32 0.0, %v4031
        %4033 = vmatmul.bf16.gmra.mxu0 %v3898
        %v4034 = vpop.f32.mrf.mxu0
        %v4035 = vadd.f32 0.0, %v4034
        %v4036 = vpop.f32.mrf.mxu0
        %v4037 = vadd.f32 0.0, %v4036
        %4038 = vmatmul.bf16.gmra.mxu0 %v3899
        %v4039 = vpop.f32.mrf.mxu0
        %v4040 = vadd.f32 0.0, %v4039
        %v4041 = vpop.f32.mrf.mxu0
        %v4042 = vadd.f32 0.0, %v4041
        %4043 = vmatmul.bf16.gmra.mxu0 %v3900
        %v4044 = vpop.f32.mrf.mxu0
        %v4045 = vadd.f32 0.0, %v4044
        %v4046 = vpop.f32.mrf.mxu0
        %v4047 = vadd.f32 0.0, %v4046
        %4048 = vmatmul.bf16.gmra.mxu0 %v3901
        %v4049 = vpop.f32.mrf.mxu0
        %v4050 = vadd.f32 0.0, %v4049
        %v4051 = vpop.f32.mrf.mxu0
        %v4052 = vadd.f32 0.0, %v4051
        %4053 = vdwg.mxu0
        %v4084 = vunpack.c.l.b16 %v3416
        %v4085 = vunpack.c.l.b16 %v3417
        %v4086 = vunpack.c.l.b16 %v3419
        %v4087 = vunpack.c.l.b16 %v3420
        %v4088 = vunpack.c.l.b16 %v3422
        %v4089 = vunpack.c.l.b16 %v3423
        %v4090 = vunpack.c.l.b16 %v3425
        %v4091 = vunpack.c.l.b16 %v3426
        %v4092 = vunpack.c.l.b16 %v3428
        %v4093 = vunpack.c.l.b16 %v3429
        %v4094 = vunpack.c.l.b16 %v3431
        %v4095 = vunpack.c.l.b16 %v3432
        %v4096 = vunpack.c.l.b16 %v3434
        %v4097 = vunpack.c.l.b16 %v3435
        %v4098 = vunpack.c.l.b16 %v3437
        %v4099 = vunpack.c.l.b16 %v3438
        %v4100 = vunpack.c.l.b16 %v3440
        %v4101 = vunpack.c.l.b16 %v3441
        %v4102 = vunpack.c.l.b16 %v3443
        %v4103 = vunpack.c.l.b16 %v3444
        %v4104 = vunpack.c.l.b16 %v3446
        %v4105 = vunpack.c.l.b16 %v3447
        %v4106 = vunpack.c.l.b16 %v3449
        %v4107 = vunpack.c.l.b16 %v3450
        %v4108 = vunpack.c.l.b16 %v3452
        %v4109 = vunpack.c.l.b16 %v3453
        %v4110 = vunpack.c.l.b16 %v3455
        %v4111 = vunpack.c.l.b16 %v3456
        %v4112 = vunpack.c.l.b16 %v3458
        %v4113 = vunpack.c.l.b16 %v3459
        %v4114 = vpack.c.b16 %v4085, %v4084
        %v4115 = vpack.c.b16 %v4087, %v4086
        %v4116 = vpack.c.b16 %v4089, %v4088
        %v4117 = vpack.c.b16 %v4091, %v4090
        %v4118 = vpack.c.b16 %v4093, %v4092
        %v4119 = vpack.c.b16 %v4095, %v4094
        %v4120 = vpack.c.b16 %v4097, %v4096
        %v4121 = vpack.c.b16 %v4099, %v4098
        %v4122 = vpack.c.b16 %v4101, %v4100
        %v4123 = vpack.c.b16 %v4103, %v4102
        %v4124 = vpack.c.b16 %v4105, %v4104
        %v4125 = vpack.c.b16 %v4107, %v4106
        %v4126 = vpack.c.b16 %v4109, %v4108
        %v4127 = vpack.c.b16 %v4111, %v4110
        %v4128 = vpack.c.b16 %v4113, %v4112
        %v4160 = vunpack.c.l.b16 %v3464
        %v4161 = vunpack.c.l.b16 %v3465
        %v4162 = vunpack.c.l.b16 %v3466
        %v4163 = vunpack.c.l.b16 %v3467
        %v4164 = vunpack.c.l.b16 %v3468
        %v4165 = vunpack.c.l.b16 %v3469
        %v4166 = vunpack.c.l.b16 %v3470
        %v4167 = vunpack.c.l.b16 %v3471
        %v4168 = vunpack.c.l.b16 %v3472
        %v4169 = vunpack.c.l.b16 %v3473
        %v4170 = vunpack.c.l.b16 %v3474
        %v4171 = vunpack.c.l.b16 %v3475
        %v4172 = vunpack.c.l.b16 %v3476
        %v4173 = vunpack.c.l.b16 %v3477
        %v4174 = vunpack.c.l.b16 %v3478
        %v4175 = vunpack.c.l.b16 %v3479
        %v4176 = vpack.c.b16 %v4161, %v4160
        %v4177 = vpack.c.b16 %v4163, %v4162
        %v4178 = vpack.c.b16 %v4165, %v4164
        %v4179 = vpack.c.b16 %v4167, %v4166
        %v4180 = vpack.c.b16 %v4169, %v4168
        %v4181 = vpack.c.b16 %v4171, %v4170
        %v4182 = vpack.c.b16 %v4173, %v4172
        %v4183 = vpack.c.b16 %v4175, %v4174
        %4192 = vmatpush.bf16.msra.mxu0 %v4183
        %4193 = vmatpush.bf16.msra.mxu0 %v4182
        %4194 = vmatpush.bf16.msra.mxu0 %v4181
        %4195 = vmatpush.bf16.msra.mxu0 %v4180
        %4196 = vmatpush.bf16.msra.mxu0 %v4179
        %4197 = vmatpush.bf16.msra.mxu0 %v4178
        %4198 = vmatpush.bf16.msra.mxu0 %v4177
        %4199 = vmatpush.bf16.msra.mxu0 %v4176
        %4200 = vmatmul.bf16.gmra.mxu0 %v4114
        %v4201 = vpop.f32.mrf.mxu0
        %v4202 = vadd.f32 %v3975, %v4201
        %v4203 = vpop.f32.mrf.mxu0
        %v4204 = vadd.f32 %v3977, %v4203
        %4205 = vmatmul.bf16.gmra.mxu0 %v4115
        %v4206 = vpop.f32.mrf.mxu0
        %v4207 = vadd.f32 %v3980, %v4206
        %v4208 = vpop.f32.mrf.mxu0
        %v4209 = vadd.f32 %v3982, %v4208
        %4210 = vmatmul.bf16.gmra.mxu0 %v4114
        %v4211 = vpop.f32.mrf.mxu0
        %v4212 = vadd.f32 %v3985, %v4211
        %v4213 = vpop.f32.mrf.mxu0
        %v4214 = vadd.f32 %v3987, %v4213
        %4215 = vmatmul.bf16.gmra.mxu0 %v4116
        %v4216 = vpop.f32.mrf.mxu0
        %v4217 = vadd.f32 %v3990, %v4216
        %v4218 = vpop.f32.mrf.mxu0
        %v4219 = vadd.f32 %v3992, %v4218
        %4220 = vmatmul.bf16.gmra.mxu0 %v4117
        %v4221 = vpop.f32.mrf.mxu0
        %v4222 = vadd.f32 %v3995, %v4221
        %v4223 = vpop.f32.mrf.mxu0
        %v4224 = vadd.f32 %v3997, %v4223
        %4225 = vmatmul.bf16.gmra.mxu0 %v4118
        %v4226 = vpop.f32.mrf.mxu0
        %v4227 = vadd.f32 %v4000, %v4226
        %v4228 = vpop.f32.mrf.mxu0
        %v4229 = vadd.f32 %v4002, %v4228
        %4230 = vmatmul.bf16.gmra.mxu0 %v4119
        %v4231 = vpop.f32.mrf.mxu0
        %v4232 = vadd.f32 %v4005, %v4231
        %v4233 = vpop.f32.mrf.mxu0
        %v4234 = vadd.f32 %v4007, %v4233
        %4235 = vmatmul.bf16.gmra.mxu0 %v4120
        %v4236 = vpop.f32.mrf.mxu0
        %v4237 = vadd.f32 %v4010, %v4236
        %v4238 = vpop.f32.mrf.mxu0
        %v4239 = vadd.f32 %v4012, %v4238
        %4240 = vmatmul.bf16.gmra.mxu0 %v4121
        %v4241 = vpop.f32.mrf.mxu0
        %v4242 = vadd.f32 %v4015, %v4241
        %v4243 = vpop.f32.mrf.mxu0
        %v4244 = vadd.f32 %v4017, %v4243
        %4245 = vmatmul.bf16.gmra.mxu0 %v4122
        %v4246 = vpop.f32.mrf.mxu0
        %v4247 = vadd.f32 %v4020, %v4246
        %v4248 = vpop.f32.mrf.mxu0
        %v4249 = vadd.f32 %v4022, %v4248
        %4250 = vmatmul.bf16.gmra.mxu0 %v4123
        %v4251 = vpop.f32.mrf.mxu0
        %v4252 = vadd.f32 %v4025, %v4251
        %v4253 = vpop.f32.mrf.mxu0
        %v4254 = vadd.f32 %v4027, %v4253
        %4255 = vmatmul.bf16.gmra.mxu0 %v4124
        %v4256 = vpop.f32.mrf.mxu0
        %v4257 = vadd.f32 %v4030, %v4256
        %v4258 = vpop.f32.mrf.mxu0
        %v4259 = vadd.f32 %v4032, %v4258
        %4260 = vmatmul.bf16.gmra.mxu0 %v4125
        %v4261 = vpop.f32.mrf.mxu0
        %v4262 = vadd.f32 %v4035, %v4261
        %v4263 = vpop.f32.mrf.mxu0
        %v4264 = vadd.f32 %v4037, %v4263
        %4265 = vmatmul.bf16.gmra.mxu0 %v4126
        %v4266 = vpop.f32.mrf.mxu0
        %v4267 = vadd.f32 %v4040, %v4266
        %v4268 = vpop.f32.mrf.mxu0
        %v4269 = vadd.f32 %v4042, %v4268
        %4270 = vmatmul.bf16.gmra.mxu0 %v4127
        %v4271 = vpop.f32.mrf.mxu0
        %v4272 = vadd.f32 %v4045, %v4271
        %v4273 = vpop.f32.mrf.mxu0
        %v4274 = vadd.f32 %v4047, %v4273
        %4275 = vmatmul.bf16.gmra.mxu0 %v4128
        %v4276 = vpop.f32.mrf.mxu0
        %v4277 = vadd.f32 %v4050, %v4276
        %v4278 = vpop.f32.mrf.mxu0
        %v4279 = vadd.f32 %v4052, %v4278
        %4280 = vdwg.mxu0
        %v4296 = vrot.slane %v3416, 5
        %v4297 = vrot.slane %v4296, 4
        %v4298 = vrot.slane %v3417, 5
        %v4299 = vsel %vm1420, %v4297, %v4298
        %v4300 = vrot.slane %v4298, 4
        %v4301 = vrot.slane %v3418, 5
        %v4302 = vsel %vm1420, %v4300, %v4301
        %v4303 = vrot.slane %v3419, 5
        %v4304 = vrot.slane %v4303, 4
        %v4305 = vrot.slane %v3420, 5
        %v4306 = vsel %vm1420, %v4304, %v4305
        %v4307 = vrot.slane %v4305, 4
        %v4308 = vrot.slane %v3421, 5
        %v4309 = vsel %vm1420, %v4307, %v4308
        %v4310 = vrot.slane %v3422, 5
        %v4311 = vrot.slane %v4310, 4
        %v4312 = vrot.slane %v3423, 5
        %v4313 = vsel %vm1420, %v4311, %v4312
        %v4314 = vrot.slane %v4312, 4
        %v4315 = vrot.slane %v3424, 5
        %v4316 = vsel %vm1420, %v4314, %v4315
        %v4317 = vrot.slane %v3425, 5
        %v4318 = vrot.slane %v4317, 4
        %v4319 = vrot.slane %v3426, 5
        %v4320 = vsel %vm1420, %v4318, %v4319
        %v4321 = vrot.slane %v4319, 4
        %v4322 = vrot.slane %v3427, 5
        %v4323 = vsel %vm1420, %v4321, %v4322
        %v4324 = vrot.slane %v3428, 5
        %v4325 = vrot.slane %v4324, 4
        %v4326 = vrot.slane %v3429, 5
        %v4327 = vsel %vm1420, %v4325, %v4326
        %v4328 = vrot.slane %v4326, 4
        %v4329 = vrot.slane %v3430, 5
        %v4330 = vsel %vm1420, %v4328, %v4329
        %v4331 = vrot.slane %v3431, 5
        %v4332 = vrot.slane %v4331, 4
        %v4333 = vrot.slane %v3432, 5
        %v4334 = vsel %vm1420, %v4332, %v4333
        %v4335 = vrot.slane %v4333, 4
        %v4336 = vrot.slane %v3433, 5
        %v4337 = vsel %vm1420, %v4335, %v4336
        %v4338 = vrot.slane %v3434, 5
        %v4339 = vrot.slane %v4338, 4
        %v4340 = vrot.slane %v3435, 5
        %v4341 = vsel %vm1420, %v4339, %v4340
        %v4342 = vrot.slane %v4340, 4
        %v4343 = vrot.slane %v3436, 5
        %v4344 = vsel %vm1420, %v4342, %v4343
        %v4345 = vrot.slane %v3437, 5
        %v4346 = vrot.slane %v4345, 4
        %v4347 = vrot.slane %v3438, 5
        %v4348 = vsel %vm1420, %v4346, %v4347
        %v4349 = vrot.slane %v4347, 4
        %v4350 = vrot.slane %v3439, 5
        %v4351 = vsel %vm1420, %v4349, %v4350
        %v4352 = vrot.slane %v3440, 5
        %v4353 = vrot.slane %v4352, 4
        %v4354 = vrot.slane %v3441, 5
        %v4355 = vsel %vm1420, %v4353, %v4354
        %v4356 = vrot.slane %v4354, 4
        %v4357 = vrot.slane %v3442, 5
        %v4358 = vsel %vm1420, %v4356, %v4357
        %v4359 = vrot.slane %v3443, 5
        %v4360 = vrot.slane %v4359, 4
        %v4361 = vrot.slane %v3444, 5
        %v4362 = vsel %vm1420, %v4360, %v4361
        %v4363 = vrot.slane %v4361, 4
        %v4364 = vrot.slane %v3445, 5
        %v4365 = vsel %vm1420, %v4363, %v4364
        %v4366 = vrot.slane %v3446, 5
        %v4367 = vrot.slane %v4366, 4
        %v4368 = vrot.slane %v3447, 5
        %v4369 = vsel %vm1420, %v4367, %v4368
        %v4370 = vrot.slane %v4368, 4
        %v4371 = vrot.slane %v3448, 5
        %v4372 = vsel %vm1420, %v4370, %v4371
        %v4373 = vrot.slane %v3449, 5
        %v4374 = vrot.slane %v4373, 4
        %v4375 = vrot.slane %v3450, 5
        %v4376 = vsel %vm1420, %v4374, %v4375
        %v4377 = vrot.slane %v4375, 4
        %v4378 = vrot.slane %v3451, 5
        %v4379 = vsel %vm1420, %v4377, %v4378
        %v4380 = vrot.slane %v3452, 5
        %v4381 = vrot.slane %v4380, 4
        %v4382 = vrot.slane %v3453, 5
        %v4383 = vsel %vm1420, %v4381, %v4382
        %v4384 = vrot.slane %v4382, 4
        %v4385 = vrot.slane %v3454, 5
        %v4386 = vsel %vm1420, %v4384, %v4385
        %v4387 = vrot.slane %v3455, 5
        %v4388 = vrot.slane %v4387, 4
        %v4389 = vrot.slane %v3456, 5
        %v4390 = vsel %vm1420, %v4388, %v4389
        %v4391 = vrot.slane %v4389, 4
        %v4392 = vrot.slane %v3457, 5
        %v4393 = vsel %vm1420, %v4391, %v4392
        %v4394 = vrot.slane %v3458, 5
        %v4395 = vrot.slane %v4394, 4
        %v4396 = vrot.slane %v3459, 5
        %v4397 = vsel %vm1420, %v4395, %v4396
        %v4398 = vrot.slane %v4396, 4
        %v4399 = vrot.slane %v3460, 5
        %v4400 = vsel %vm1420, %v4398, %v4399
        %s4401 = scalar_lea.vmem [#allocation7], 128
        %v4402 = vld [vmem:[%s4401] sm:$0xf]
        %v4403 = vld [vmem:[%s4401 + $0x4] sm:$0xf]
        %v4404 = vld [vmem:[%s4401 + $0x8] sm:$0xf]
        %v4405 = vld [vmem:[%s4401 + $0xc] sm:$0xf]
        %v4406 = vld [vmem:[%s4401 + $0x10] sm:$0xf]
        %v4407 = vld [vmem:[%s4401 + $0x14] sm:$0xf]
        %v4408 = vld [vmem:[%s4401 + $0x18] sm:$0xf]
        %v4409 = vld [vmem:[%s4401 + $0x1c] sm:$0xf]
        %v4410 = vld [vmem:[%s4401 + $0x20] sm:$0xf]
        %v4411 = vld [vmem:[%s4401 + $0x24] sm:$0xf]
        %v4412 = vld [vmem:[%s4401 + $0x28] sm:$0xf]
        %v4413 = vld [vmem:[%s4401 + $0x2c] sm:$0xf]
        %v4414 = vld [vmem:[%s4401 + $0x30] sm:$0xf]
        %v4415 = vld [vmem:[%s4401 + $0x34] sm:$0xf]
        %v4416 = vld [vmem:[%s4401 + $0x38] sm:$0xf]
        %v4417 = vld [vmem:[%s4401 + $0x3c] sm:$0xf]
        %v4418 = vunpack.c.l.b16 %v4299
        %v4419 = vunpack.c.l.b16 %v4302
        %v4420 = vunpack.c.l.b16 %v4306
        %v4421 = vunpack.c.l.b16 %v4309
        %v4422 = vunpack.c.l.b16 %v4313
        %v4423 = vunpack.c.l.b16 %v4316
        %v4424 = vunpack.c.l.b16 %v4320
        %v4425 = vunpack.c.l.b16 %v4323
        %v4426 = vunpack.c.l.b16 %v4327
        %v4427 = vunpack.c.l.b16 %v4330
        %v4428 = vunpack.c.l.b16 %v4334
        %v4429 = vunpack.c.l.b16 %v4337
        %v4430 = vunpack.c.l.b16 %v4341
        %v4431 = vunpack.c.l.b16 %v4344
        %v4432 = vunpack.c.l.b16 %v4348
        %v4433 = vunpack.c.l.b16 %v4351
        %v4434 = vunpack.c.l.b16 %v4355
        %v4435 = vunpack.c.l.b16 %v4358
        %v4436 = vunpack.c.l.b16 %v4362
        %v4437 = vunpack.c.l.b16 %v4365
        %v4438 = vunpack.c.l.b16 %v4369
        %v4439 = vunpack.c.l.b16 %v4372
        %v4440 = vunpack.c.l.b16 %v4376
        %v4441 = vunpack.c.l.b16 %v4379
        %v4442 = vunpack.c.l.b16 %v4383
        %v4443 = vunpack.c.l.b16 %v4386
        %v4444 = vunpack.c.l.b16 %v4390
        %v4445 = vunpack.c.l.b16 %v4393
        %v4446 = vunpack.c.l.b16 %v4397
        %v4447 = vunpack.c.l.b16 %v4400
        %v4448 = vpack.c.b16 %v4419, %v4418
        %v4449 = vpack.c.b16 %v4421, %v4420
        %v4450 = vpack.c.b16 %v4423, %v4422
        %v4451 = vpack.c.b16 %v4425, %v4424
        %v4452 = vpack.c.b16 %v4427, %v4426
        %v4453 = vpack.c.b16 %v4429, %v4428
        %v4454 = vpack.c.b16 %v4431, %v4430
        %v4455 = vpack.c.b16 %v4433, %v4432
        %v4456 = vpack.c.b16 %v4435, %v4434
        %v4457 = vpack.c.b16 %v4437, %v4436
        %v4458 = vpack.c.b16 %v4439, %v4438
        %v4459 = vpack.c.b16 %v4441, %v4440
        %v4460 = vpack.c.b16 %v4443, %v4442
        %v4461 = vpack.c.b16 %v4445, %v4444
        %v4462 = vpack.c.b16 %v4447, %v4446
        %v4494 = vunpack.c.l.b16 %v4402
        %v4495 = vunpack.c.l.b16 %v4403
        %v4496 = vunpack.c.l.b16 %v4404
        %v4497 = vunpack.c.l.b16 %v4405
        %v4498 = vunpack.c.l.b16 %v4406
        %v4499 = vunpack.c.l.b16 %v4407
        %v4500 = vunpack.c.l.b16 %v4408
        %v4501 = vunpack.c.l.b16 %v4409
        %v4502 = vunpack.c.l.b16 %v4410
        %v4503 = vunpack.c.l.b16 %v4411
        %v4504 = vunpack.c.l.b16 %v4412
        %v4505 = vunpack.c.l.b16 %v4413
        %v4506 = vunpack.c.l.b16 %v4414
        %v4507 = vunpack.c.l.b16 %v4415
        %v4508 = vunpack.c.l.b16 %v4416
        %v4509 = vunpack.c.l.b16 %v4417
        %v4510 = vpack.c.b16 %v4495, %v4494
        %v4511 = vpack.c.b16 %v4497, %v4496
        %v4512 = vpack.c.b16 %v4499, %v4498
        %v4513 = vpack.c.b16 %v4501, %v4500
        %v4514 = vpack.c.b16 %v4503, %v4502
        %v4515 = vpack.c.b16 %v4505, %v4504
        %v4516 = vpack.c.b16 %v4507, %v4506
        %v4517 = vpack.c.b16 %v4509, %v4508
        %4526 = vmatpush.bf16.msra.mxu0 %v4517
        %4527 = vmatpush.bf16.msra.mxu0 %v4516
        %4528 = vmatpush.bf16.msra.mxu0 %v4515
        %4529 = vmatpush.bf16.msra.mxu0 %v4514
        %4530 = vmatpush.bf16.msra.mxu0 %v4513
        %4531 = vmatpush.bf16.msra.mxu0 %v4512
        %4532 = vmatpush.bf16.msra.mxu0 %v4511
        %4533 = vmatpush.bf16.msra.mxu0 %v4510
        %4534 = vmatmul.bf16.gmra.mxu0 %v4448
        %v4535 = vpop.f32.mrf.mxu0
        %v4536 = vadd.f32 0.0, %v4535
        %v4537 = vpop.f32.mrf.mxu0
        %v4538 = vadd.f32 0.0, %v4537
        %4539 = vmatmul.bf16.gmra.mxu0 %v4449
        %v4540 = vpop.f32.mrf.mxu0
        %v4541 = vadd.f32 0.0, %v4540
        %v4542 = vpop.f32.mrf.mxu0
        %v4543 = vadd.f32 0.0, %v4542
        %4544 = vmatmul.bf16.gmra.mxu0 %v4448
        %v4545 = vpop.f32.mrf.mxu0
        %v4546 = vadd.f32 0.0, %v4545
        %v4547 = vpop.f32.mrf.mxu0
        %v4548 = vadd.f32 0.0, %v4547
        %4549 = vmatmul.bf16.gmra.mxu0 %v4450
        %v4550 = vpop.f32.mrf.mxu0
        %v4551 = vadd.f32 0.0, %v4550
        %v4552 = vpop.f32.mrf.mxu0
        %v4553 = vadd.f32 0.0, %v4552
        %4554 = vmatmul.bf16.gmra.mxu0 %v4451
        %v4555 = vpop.f32.mrf.mxu0
        %v4556 = vadd.f32 0.0, %v4555
        %v4557 = vpop.f32.mrf.mxu0
        %v4558 = vadd.f32 0.0, %v4557
        %4559 = vmatmul.bf16.gmra.mxu0 %v4452
        %v4560 = vpop.f32.mrf.mxu0
        %v4561 = vadd.f32 0.0, %v4560
        %v4562 = vpop.f32.mrf.mxu0
        %v4563 = vadd.f32 0.0, %v4562
        %4564 = vmatmul.bf16.gmra.mxu0 %v4453
        %v4565 = vpop.f32.mrf.mxu0
        %v4566 = vadd.f32 0.0, %v4565
        %v4567 = vpop.f32.mrf.mxu0
        %v4568 = vadd.f32 0.0, %v4567
        %4569 = vmatmul.bf16.gmra.mxu0 %v4454
        %v4570 = vpop.f32.mrf.mxu0
        %v4571 = vadd.f32 0.0, %v4570
        %v4572 = vpop.f32.mrf.mxu0
        %v4573 = vadd.f32 0.0, %v4572
        %4574 = vmatmul.bf16.gmra.mxu0 %v4455
        %v4575 = vpop.f32.mrf.mxu0
        %v4576 = vadd.f32 0.0, %v4575
        %v4577 = vpop.f32.mrf.mxu0
        %v4578 = vadd.f32 0.0, %v4577
        %4579 = vmatmul.bf16.gmra.mxu0 %v4456
        %v4580 = vpop.f32.mrf.mxu0
        %v4581 = vadd.f32 0.0, %v4580
        %v4582 = vpop.f32.mrf.mxu0
        %v4583 = vadd.f32 0.0, %v4582
        %4584 = vmatmul.bf16.gmra.mxu0 %v4457
        %v4585 = vpop.f32.mrf.mxu0
        %v4586 = vadd.f32 0.0, %v4585
        %v4587 = vpop.f32.mrf.mxu0
        %v4588 = vadd.f32 0.0, %v4587
        %4589 = vmatmul.bf16.gmra.mxu0 %v4458
        %v4590 = vpop.f32.mrf.mxu0
        %v4591 = vadd.f32 0.0, %v4590
        %v4592 = vpop.f32.mrf.mxu0
        %v4593 = vadd.f32 0.0, %v4592
        %4594 = vmatmul.bf16.gmra.mxu0 %v4459
        %v4595 = vpop.f32.mrf.mxu0
        %v4596 = vadd.f32 0.0, %v4595
        %v4597 = vpop.f32.mrf.mxu0
        %v4598 = vadd.f32 0.0, %v4597
        %4599 = vmatmul.bf16.gmra.mxu0 %v4460
        %v4600 = vpop.f32.mrf.mxu0
        %v4601 = vadd.f32 0.0, %v4600
        %v4602 = vpop.f32.mrf.mxu0
        %v4603 = vadd.f32 0.0, %v4602
        %4604 = vmatmul.bf16.gmra.mxu0 %v4461
        %v4605 = vpop.f32.mrf.mxu0
        %v4606 = vadd.f32 0.0, %v4605
        %v4607 = vpop.f32.mrf.mxu0
        %v4608 = vadd.f32 0.0, %v4607
        %4609 = vmatmul.bf16.gmra.mxu0 %v4462
        %v4610 = vpop.f32.mrf.mxu0
        %v4611 = vadd.f32 0.0, %v4610
        %v4612 = vpop.f32.mrf.mxu0
        %v4613 = vadd.f32 0.0, %v4612
        %4614 = vdwg.mxu0
        %v4615 = vadd.f32 %v4202, %v4536
        %v4616 = vadd.f32 %v4204, %v4538
        %v4617 = vadd.f32 %v4207, %v4541
        %v4618 = vadd.f32 %v4209, %v4543
        %v4619 = vadd.f32 %v4212, %v4546
        %v4620 = vadd.f32 %v4214, %v4548
        %v4621 = vadd.f32 %v4217, %v4551
        %v4622 = vadd.f32 %v4219, %v4553
        %v4623 = vadd.f32 %v4222, %v4556
        %v4624 = vadd.f32 %v4224, %v4558
        %v4625 = vadd.f32 %v4227, %v4561
        %v4626 = vadd.f32 %v4229, %v4563
        %v4627 = vadd.f32 %v4232, %v4566
        %v4628 = vadd.f32 %v4234, %v4568
        %v4629 = vadd.f32 %v4237, %v4571
        %v4630 = vadd.f32 %v4239, %v4573
        %v4631 = vadd.f32 %v4242, %v4576
        %v4632 = vadd.f32 %v4244, %v4578
        %v4633 = vadd.f32 %v4247, %v4581
        %v4634 = vadd.f32 %v4249, %v4583
        %v4635 = vadd.f32 %v4252, %v4586
        %v4636 = vadd.f32 %v4254, %v4588
        %v4637 = vadd.f32 %v4257, %v4591
        %v4638 = vadd.f32 %v4259, %v4593
        %v4639 = vadd.f32 %v4262, %v4596
        %v4640 = vadd.f32 %v4264, %v4598
        %v4641 = vadd.f32 %v4267, %v4601
        %v4642 = vadd.f32 %v4269, %v4603
        %v4643 = vadd.f32 %v4272, %v4606
        %v4644 = vadd.f32 %v4274, %v4608
        %v4645 = vadd.f32 %v4277, %v4611
        %v4646 = vadd.f32 %v4279, %v4613
        %s4647 = scalar_lea.vmem [#allocation7], 192
        %v4648 = vld [vmem:[%s4647] sm:$0xf]
        %v4649 = vld [vmem:[%s4647 + $0x4] sm:$0xf]
        %v4650 = vld [vmem:[%s4647 + $0x8] sm:$0xf]
        %v4651 = vld [vmem:[%s4647 + $0xc] sm:$0xf]
        %v4652 = vld [vmem:[%s4647 + $0x10] sm:$0xf]
        %v4653 = vld [vmem:[%s4647 + $0x14] sm:$0xf]
        %v4654 = vld [vmem:[%s4647 + $0x18] sm:$0xf]
        %v4655 = vld [vmem:[%s4647 + $0x1c] sm:$0xf]
        %v4656 = vld [vmem:[%s4647 + $0x20] sm:$0xf]
        %v4657 = vld [vmem:[%s4647 + $0x24] sm:$0xf]
        %v4658 = vld [vmem:[%s4647 + $0x28] sm:$0xf]
        %v4659 = vld [vmem:[%s4647 + $0x2c] sm:$0xf]
        %v4660 = vld [vmem:[%s4647 + $0x30] sm:$0xf]
        %v4661 = vld [vmem:[%s4647 + $0x34] sm:$0xf]
        %v4662 = vld [vmem:[%s4647 + $0x38] sm:$0xf]
        %v4663 = vld [vmem:[%s4647 + $0x3c] sm:$0xf]
        %v4666 = vunpack.c.l.b16 %v3461
        %v4667 = vunpack.c.l.b16 %v3462
        %v4668 = vpack.c.b16 %v4667, %v4666
        %v4686 = vunpack.c.l.b16 %v4648
        %v4687 = vunpack.c.l.b16 %v4649
        %v4688 = vunpack.c.l.b16 %v4650
        %v4689 = vunpack.c.l.b16 %v4651
        %v4690 = vunpack.c.l.b16 %v4652
        %v4691 = vunpack.c.l.b16 %v4653
        %v4692 = vunpack.c.l.b16 %v4654
        %v4693 = vunpack.c.l.b16 %v4655
        %v4694 = vunpack.c.l.b16 %v4656
        %v4695 = vunpack.c.l.b16 %v4657
        %v4696 = vunpack.c.l.b16 %v4658
        %v4697 = vunpack.c.l.b16 %v4659
        %v4698 = vunpack.c.l.b16 %v4660
        %v4699 = vunpack.c.l.b16 %v4661
        %v4700 = vunpack.c.l.b16 %v4662
        %v4701 = vunpack.c.l.b16 %v4663
        %v4702 = vpack.c.b16 %v4687, %v4686
        %v4703 = vpack.c.b16 %v4689, %v4688
        %v4704 = vpack.c.b16 %v4691, %v4690
        %v4705 = vpack.c.b16 %v4693, %v4692
        %v4706 = vpack.c.b16 %v4695, %v4694
        %v4707 = vpack.c.b16 %v4697, %v4696
        %v4708 = vpack.c.b16 %v4699, %v4698
        %v4709 = vpack.c.b16 %v4701, %v4700
        %4718 = vmatpush.bf16.msra.mxu0 %v4709
        %4719 = vmatpush.bf16.msra.mxu0 %v4708
        %4720 = vmatpush.bf16.msra.mxu0 %v4707
        %4721 = vmatpush.bf16.msra.mxu0 %v4706
        %4722 = vmatpush.bf16.msra.mxu0 %v4705
        %4723 = vmatpush.bf16.msra.mxu0 %v4704
        %4724 = vmatpush.bf16.msra.mxu0 %v4703
        %4725 = vmatpush.bf16.msra.mxu0 %v4702
        %4726 = vmatmul.bf16.gmra.mxu0 %v4115
        %v4727 = vpop.f32.mrf.mxu0
        %v4728 = vadd.f32 0.0, %v4727
        %v4729 = vpop.f32.mrf.mxu0
        %v4730 = vadd.f32 0.0, %v4729
        %4731 = vmatmul.bf16.gmra.mxu0 %v4114
        %v4732 = vpop.f32.mrf.mxu0
        %v4733 = vadd.f32 0.0, %v4732
        %v4734 = vpop.f32.mrf.mxu0
        %v4735 = vadd.f32 0.0, %v4734
        %4736 = vmatmul.bf16.gmra.mxu0 %v4116
        %v4737 = vpop.f32.mrf.mxu0
        %v4738 = vadd.f32 0.0, %v4737
        %v4739 = vpop.f32.mrf.mxu0
        %v4740 = vadd.f32 0.0, %v4739
        %4741 = vmatmul.bf16.gmra.mxu0 %v4117
        %v4742 = vpop.f32.mrf.mxu0
        %v4743 = vadd.f32 0.0, %v4742
        %v4744 = vpop.f32.mrf.mxu0
        %v4745 = vadd.f32 0.0, %v4744
        %4746 = vmatmul.bf16.gmra.mxu0 %v4118
        %v4747 = vpop.f32.mrf.mxu0
        %v4748 = vadd.f32 0.0, %v4747
        %v4749 = vpop.f32.mrf.mxu0
        %v4750 = vadd.f32 0.0, %v4749
        %4751 = vmatmul.bf16.gmra.mxu0 %v4119
        %v4752 = vpop.f32.mrf.mxu0
        %v4753 = vadd.f32 0.0, %v4752
        %v4754 = vpop.f32.mrf.mxu0
        %v4755 = vadd.f32 0.0, %v4754
        %4756 = vmatmul.bf16.gmra.mxu0 %v4120
        %v4757 = vpop.f32.mrf.mxu0
        %v4758 = vadd.f32 0.0, %v4757
        %v4759 = vpop.f32.mrf.mxu0
        %v4760 = vadd.f32 0.0, %v4759
        %4761 = vmatmul.bf16.gmra.mxu0 %v4121
        %v4762 = vpop.f32.mrf.mxu0
        %v4763 = vadd.f32 0.0, %v4762
        %v4764 = vpop.f32.mrf.mxu0
        %v4765 = vadd.f32 0.0, %v4764
        %4766 = vmatmul.bf16.gmra.mxu0 %v4122
        %v4767 = vpop.f32.mrf.mxu0
        %v4768 = vadd.f32 0.0, %v4767
        %v4769 = vpop.f32.mrf.mxu0
        %v4770 = vadd.f32 0.0, %v4769
        %4771 = vmatmul.bf16.gmra.mxu0 %v4123
        %v4772 = vpop.f32.mrf.mxu0
        %v4773 = vadd.f32 0.0, %v4772
        %v4774 = vpop.f32.mrf.mxu0
        %v4775 = vadd.f32 0.0, %v4774
        %4776 = vmatmul.bf16.gmra.mxu0 %v4124
        %v4777 = vpop.f32.mrf.mxu0
        %v4778 = vadd.f32 0.0, %v4777
        %v4779 = vpop.f32.mrf.mxu0
        %v4780 = vadd.f32 0.0, %v4779
        %4781 = vmatmul.bf16.gmra.mxu0 %v4125
        %v4782 = vpop.f32.mrf.mxu0
        %v4783 = vadd.f32 0.0, %v4782
        %v4784 = vpop.f32.mrf.mxu0
        %v4785 = vadd.f32 0.0, %v4784
        %4786 = vmatmul.bf16.gmra.mxu0 %v4126
        %v4787 = vpop.f32.mrf.mxu0
        %v4788 = vadd.f32 0.0, %v4787
        %v4789 = vpop.f32.mrf.mxu0
        %v4790 = vadd.f32 0.0, %v4789
        %4791 = vmatmul.bf16.gmra.mxu0 %v4127
        %v4792 = vpop.f32.mrf.mxu0
        %v4793 = vadd.f32 0.0, %v4792
        %v4794 = vpop.f32.mrf.mxu0
        %v4795 = vadd.f32 0.0, %v4794
        %4796 = vmatmul.bf16.gmra.mxu0 %v4128
        %v4797 = vpop.f32.mrf.mxu0
        %v4798 = vadd.f32 0.0, %v4797
        %v4799 = vpop.f32.mrf.mxu0
        %v4800 = vadd.f32 0.0, %v4799
        %4801 = vmatmul.bf16.gmra.mxu0 %v4668
        %v4802 = vpop.f32.mrf.mxu0
        %v4803 = vadd.f32 0.0, %v4802
        %v4804 = vpop.f32.mrf.mxu0
        %v4805 = vadd.f32 0.0, %v4804
        %4806 = vdwg.mxu0
        %v4807 = vadd.f32 %v4615, %v4728
        %v4808 = vadd.f32 %v4616, %v4730
        %v4809 = vadd.f32 %v4617, %v4733
        %v4810 = vadd.f32 %v4618, %v4735
        %v4811 = vadd.f32 %v4619, %v4738
        %v4812 = vadd.f32 %v4620, %v4740
        %v4813 = vadd.f32 %v4621, %v4743
        %v4814 = vadd.f32 %v4622, %v4745
        %v4815 = vadd.f32 %v4623, %v4748
        %v4816 = vadd.f32 %v4624, %v4750
        %v4817 = vadd.f32 %v4625, %v4753
        %v4818 = vadd.f32 %v4626, %v4755
        %v4819 = vadd.f32 %v4627, %v4758
        %v4820 = vadd.f32 %v4628, %v4760
        %v4821 = vadd.f32 %v4629, %v4763
        %v4822 = vadd.f32 %v4630, %v4765
        %v4823 = vadd.f32 %v4631, %v4768
        %v4824 = vadd.f32 %v4632, %v4770
        %v4825 = vadd.f32 %v4633, %v4773
        %v4826 = vadd.f32 %v4634, %v4775
        %v4827 = vadd.f32 %v4635, %v4778
        %v4828 = vadd.f32 %v4636, %v4780
        %v4829 = vadd.f32 %v4637, %v4783
        %v4830 = vadd.f32 %v4638, %v4785
        %v4831 = vadd.f32 %v4639, %v4788
        %v4832 = vadd.f32 %v4640, %v4790
        %v4833 = vadd.f32 %v4641, %v4793
        %v4834 = vadd.f32 %v4642, %v4795
        %v4835 = vadd.f32 %v4643, %v4798
        %v4836 = vadd.f32 %v4644, %v4800
        %v4837 = vadd.f32 %v4645, %v4803
        %v4838 = vadd.f32 %v4646, %v4805
        %v4840 = vshrl.u32 %v3461, 16
        %v4842 = vrot.slane %v4840, 4
        %v4843 = vshll.u32 %v3461, 16
        %v4845 = vrot.slane %v4843, 5
        %v4846 = vor.u32 %v4842, %v4845
        %v4847 = vrot.slane %v4846, 4
        %v4849 = vshll.u32 %v3462, 16
        %v4851 = vrot.slane %v4849, 5
        %v4852 = vsel %vm601, %v4847, %v4851
        %v4853 = vshrl.u32 %v3462, 16
        %v4855 = vrot.slane %v4853, 4
        %v4856 = vor.u32 %v4855, %v4851
        %v4857 = vrot.slane %v4856, 4
        %v4859 = vshll.u32 %v3463, 16
        %v4861 = vrot.slane %v4859, 5
        %v4862 = vsel %vm601, %v4857, %v4861
        %s4863 = scalar_lea.vmem [#allocation7], 256
        %v4864 = vld [vmem:[%s4863] sm:$0xf]
        %v4865 = vld [vmem:[%s4863 + $0x4] sm:$0xf]
        %v4866 = vld [vmem:[%s4863 + $0x8] sm:$0xf]
        %v4867 = vld [vmem:[%s4863 + $0xc] sm:$0xf]
        %v4868 = vld [vmem:[%s4863 + $0x10] sm:$0xf]
        %v4869 = vld [vmem:[%s4863 + $0x14] sm:$0xf]
        %v4870 = vld [vmem:[%s4863 + $0x18] sm:$0xf]
        %v4871 = vld [vmem:[%s4863 + $0x1c] sm:$0xf]
        %v4872 = vld [vmem:[%s4863 + $0x20] sm:$0xf]
        %v4873 = vld [vmem:[%s4863 + $0x24] sm:$0xf]
        %v4874 = vld [vmem:[%s4863 + $0x28] sm:$0xf]
        %v4875 = vld [vmem:[%s4863 + $0x2c] sm:$0xf]
        %v4876 = vld [vmem:[%s4863 + $0x30] sm:$0xf]
        %v4877 = vld [vmem:[%s4863 + $0x34] sm:$0xf]
        %v4878 = vld [vmem:[%s4863 + $0x38] sm:$0xf]
        %v4879 = vld [vmem:[%s4863 + $0x3c] sm:$0xf]
        %v4880 = vunpack.c.l.b16 %v4852
        %v4881 = vunpack.c.l.b16 %v4862
        %v4882 = vpack.c.b16 %v4881, %v4880
        %v4900 = vunpack.c.l.b16 %v4864
        %v4901 = vunpack.c.l.b16 %v4865
        %v4902 = vunpack.c.l.b16 %v4866
        %v4903 = vunpack.c.l.b16 %v4867
        %v4904 = vunpack.c.l.b16 %v4868
        %v4905 = vunpack.c.l.b16 %v4869
        %v4906 = vunpack.c.l.b16 %v4870
        %v4907 = vunpack.c.l.b16 %v4871
        %v4908 = vunpack.c.l.b16 %v4872
        %v4909 = vunpack.c.l.b16 %v4873
        %v4910 = vunpack.c.l.b16 %v4874
        %v4911 = vunpack.c.l.b16 %v4875
        %v4912 = vunpack.c.l.b16 %v4876
        %v4913 = vunpack.c.l.b16 %v4877
        %v4914 = vunpack.c.l.b16 %v4878
        %v4915 = vunpack.c.l.b16 %v4879
        %v4916 = vpack.c.b16 %v4901, %v4900
        %v4917 = vpack.c.b16 %v4903, %v4902
        %v4918 = vpack.c.b16 %v4905, %v4904
        %v4919 = vpack.c.b16 %v4907, %v4906
        %v4920 = vpack.c.b16 %v4909, %v4908
        %v4921 = vpack.c.b16 %v4911, %v4910
        %v4922 = vpack.c.b16 %v4913, %v4912
        %v4923 = vpack.c.b16 %v4915, %v4914
        %4932 = vmatpush.bf16.msra.mxu0 %v4923
        %4933 = vmatpush.bf16.msra.mxu0 %v4922
        %4934 = vmatpush.bf16.msra.mxu0 %v4921
        %4935 = vmatpush.bf16.msra.mxu0 %v4920
        %4936 = vmatpush.bf16.msra.mxu0 %v4919
        %4937 = vmatpush.bf16.msra.mxu0 %v4918
        %4938 = vmatpush.bf16.msra.mxu0 %v4917
        %4939 = vmatpush.bf16.msra.mxu0 %v4916
        %4940 = vmatmul.bf16.gmra.mxu0 %v3888
        %v4941 = vpop.f32.mrf.mxu0
        %v4942 = vadd.f32 0.0, %v4941
        %v4943 = vpop.f32.mrf.mxu0
        %v4944 = vadd.f32 0.0, %v4943
        %4945 = vmatmul.bf16.gmra.mxu0 %v3887
        %v4946 = vpop.f32.mrf.mxu0
        %v4947 = vadd.f32 0.0, %v4946
        %v4948 = vpop.f32.mrf.mxu0
        %v4949 = vadd.f32 0.0, %v4948
        %4950 = vmatmul.bf16.gmra.mxu0 %v3889
        %v4951 = vpop.f32.mrf.mxu0
        %v4952 = vadd.f32 0.0, %v4951
        %v4953 = vpop.f32.mrf.mxu0
        %v4954 = vadd.f32 0.0, %v4953
        %4955 = vmatmul.bf16.gmra.mxu0 %v3890
        %v4956 = vpop.f32.mrf.mxu0
        %v4957 = vadd.f32 0.0, %v4956
        %v4958 = vpop.f32.mrf.mxu0
        %v4959 = vadd.f32 0.0, %v4958
        %4960 = vmatmul.bf16.gmra.mxu0 %v3891
        %v4961 = vpop.f32.mrf.mxu0
        %v4962 = vadd.f32 0.0, %v4961
        %v4963 = vpop.f32.mrf.mxu0
        %v4964 = vadd.f32 0.0, %v4963
        %4965 = vmatmul.bf16.gmra.mxu0 %v3892
        %v4966 = vpop.f32.mrf.mxu0
        %v4967 = vadd.f32 0.0, %v4966
        %v4968 = vpop.f32.mrf.mxu0
        %v4969 = vadd.f32 0.0, %v4968
        %4970 = vmatmul.bf16.gmra.mxu0 %v3893
        %v4971 = vpop.f32.mrf.mxu0
        %v4972 = vadd.f32 0.0, %v4971
        %v4973 = vpop.f32.mrf.mxu0
        %v4974 = vadd.f32 0.0, %v4973
        %4975 = vmatmul.bf16.gmra.mxu0 %v3894
        %v4976 = vpop.f32.mrf.mxu0
        %v4977 = vadd.f32 0.0, %v4976
        %v4978 = vpop.f32.mrf.mxu0
        %v4979 = vadd.f32 0.0, %v4978
        %4980 = vmatmul.bf16.gmra.mxu0 %v3895
        %v4981 = vpop.f32.mrf.mxu0
        %v4982 = vadd.f32 0.0, %v4981
        %v4983 = vpop.f32.mrf.mxu0
        %v4984 = vadd.f32 0.0, %v4983
        %4985 = vmatmul.bf16.gmra.mxu0 %v3896
        %v4986 = vpop.f32.mrf.mxu0
        %v4987 = vadd.f32 0.0, %v4986
        %v4988 = vpop.f32.mrf.mxu0
        %v4989 = vadd.f32 0.0, %v4988
        %4990 = vmatmul.bf16.gmra.mxu0 %v3897
        %v4991 = vpop.f32.mrf.mxu0
        %v4992 = vadd.f32 0.0, %v4991
        %v4993 = vpop.f32.mrf.mxu0
        %v4994 = vadd.f32 0.0, %v4993
        %4995 = vmatmul.bf16.gmra.mxu0 %v3898
        %v4996 = vpop.f32.mrf.mxu0
        %v4997 = vadd.f32 0.0, %v4996
        %v4998 = vpop.f32.mrf.mxu0
        %v4999 = vadd.f32 0.0, %v4998
        %5000 = vmatmul.bf16.gmra.mxu0 %v3899
        %v5001 = vpop.f32.mrf.mxu0
        %v5002 = vadd.f32 0.0, %v5001
        %v5003 = vpop.f32.mrf.mxu0
        %v5004 = vadd.f32 0.0, %v5003
        %5005 = vmatmul.bf16.gmra.mxu0 %v3900
        %v5006 = vpop.f32.mrf.mxu0
        %v5007 = vadd.f32 0.0, %v5006
        %v5008 = vpop.f32.mrf.mxu0
        %v5009 = vadd.f32 0.0, %v5008
        %5010 = vmatmul.bf16.gmra.mxu0 %v3901
        %v5011 = vpop.f32.mrf.mxu0
        %v5012 = vadd.f32 0.0, %v5011
        %v5013 = vpop.f32.mrf.mxu0
        %v5014 = vadd.f32 0.0, %v5013
        %5015 = vmatmul.bf16.gmra.mxu0 %v4882
        %v5016 = vpop.f32.mrf.mxu0
        %v5017 = vadd.f32 0.0, %v5016
        %v5018 = vpop.f32.mrf.mxu0
        %v5019 = vadd.f32 0.0, %v5018
        %5020 = vdwg.mxu0
        %v5021 = vadd.f32 %v4807, %v4942
        %v5022 = vadd.f32 %v4808, %v4944
        %v5023 = vadd.f32 %v4809, %v4947
        %v5024 = vadd.f32 %v4810, %v4949
        %v5025 = vadd.f32 %v4811, %v4952
        %v5026 = vadd.f32 %v4812, %v4954
        %v5027 = vadd.f32 %v4813, %v4957
        %v5028 = vadd.f32 %v4814, %v4959
        %v5029 = vadd.f32 %v4815, %v4962
        %v5030 = vadd.f32 %v4816, %v4964
        %v5031 = vadd.f32 %v4817, %v4967
        %v5032 = vadd.f32 %v4818, %v4969
        %v5033 = vadd.f32 %v4819, %v4972
        %v5034 = vadd.f32 %v4820, %v4974
        %v5035 = vadd.f32 %v4821, %v4977
        %v5036 = vadd.f32 %v4822, %v4979
        %v5037 = vadd.f32 %v4823, %v4982
        %v5038 = vadd.f32 %v4824, %v4984
        %v5039 = vadd.f32 %v4825, %v4987
        %v5040 = vadd.f32 %v4826, %v4989
        %v5041 = vadd.f32 %v4827, %v4992
        %v5042 = vadd.f32 %v4828, %v4994
        %v5043 = vadd.f32 %v4829, %v4997
        %v5044 = vadd.f32 %v4830, %v4999
        %v5045 = vadd.f32 %v4831, %v5002
        %v5046 = vadd.f32 %v4832, %v5004
        %v5047 = vadd.f32 %v4833, %v5007
        %v5048 = vadd.f32 %v4834, %v5009
        %v5049 = vadd.f32 %v4835, %v5012
        %v5050 = vadd.f32 %v4836, %v5014
        %v5051 = vadd.f32 %v4837, %v5017
        %v5052 = vadd.f32 %v4838, %v5019
        %v5054 = vrot.slane %v3461, 5
        %v5055 = vrot.slane %v5054, 4
        %v5056 = vrot.slane %v3462, 5
        %v5057 = vsel %vm1420, %v5055, %v5056
        %v5058 = vrot.slane %v5056, 4
        %v5059 = vrot.slane %v3463, 5
        %v5060 = vsel %vm1420, %v5058, %v5059
        %s5061 = scalar_lea.vmem [#allocation7], 320
        %v5062 = vld [vmem:[%s5061] sm:$0xf]
        %v5063 = vld [vmem:[%s5061 + $0x4] sm:$0xf]
        %v5064 = vld [vmem:[%s5061 + $0x8] sm:$0xf]
        %v5065 = vld [vmem:[%s5061 + $0xc] sm:$0xf]
        %v5066 = vld [vmem:[%s5061 + $0x10] sm:$0xf]
        %v5067 = vld [vmem:[%s5061 + $0x14] sm:$0xf]
        %v5068 = vld [vmem:[%s5061 + $0x18] sm:$0xf]
        %v5069 = vld [vmem:[%s5061 + $0x1c] sm:$0xf]
        %v5070 = vld [vmem:[%s5061 + $0x20] sm:$0xf]
        %v5071 = vld [vmem:[%s5061 + $0x24] sm:$0xf]
        %v5072 = vld [vmem:[%s5061 + $0x28] sm:$0xf]
        %v5073 = vld [vmem:[%s5061 + $0x2c] sm:$0xf]
        %v5074 = vld [vmem:[%s5061 + $0x30] sm:$0xf]
        %v5075 = vld [vmem:[%s5061 + $0x34] sm:$0xf]
        %v5076 = vld [vmem:[%s5061 + $0x38] sm:$0xf]
        %v5077 = vld [vmem:[%s5061 + $0x3c] sm:$0xf]
        %v5078 = vunpack.c.l.b16 %v5057
        %v5079 = vunpack.c.l.b16 %v5060
        %v5080 = vpack.c.b16 %v5079, %v5078
        %v5098 = vunpack.c.l.b16 %v5062
        %v5099 = vunpack.c.l.b16 %v5063
        %v5100 = vunpack.c.l.b16 %v5064
        %v5101 = vunpack.c.l.b16 %v5065
        %v5102 = vunpack.c.l.b16 %v5066
        %v5103 = vunpack.c.l.b16 %v5067
        %v5104 = vunpack.c.l.b16 %v5068
        %v5105 = vunpack.c.l.b16 %v5069
        %v5106 = vunpack.c.l.b16 %v5070
        %v5107 = vunpack.c.l.b16 %v5071
        %v5108 = vunpack.c.l.b16 %v5072
        %v5109 = vunpack.c.l.b16 %v5073
        %v5110 = vunpack.c.l.b16 %v5074
        %v5111 = vunpack.c.l.b16 %v5075
        %v5112 = vunpack.c.l.b16 %v5076
        %v5113 = vunpack.c.l.b16 %v5077
        %v5114 = vpack.c.b16 %v5099, %v5098
        %v5115 = vpack.c.b16 %v5101, %v5100
        %v5116 = vpack.c.b16 %v5103, %v5102
        %v5117 = vpack.c.b16 %v5105, %v5104
        %v5118 = vpack.c.b16 %v5107, %v5106
        %v5119 = vpack.c.b16 %v5109, %v5108
        %v5120 = vpack.c.b16 %v5111, %v5110
        %v5121 = vpack.c.b16 %v5113, %v5112
        %5130 = vmatpush.bf16.msra.mxu0 %v5121
        %5131 = vmatpush.bf16.msra.mxu0 %v5120
        %5132 = vmatpush.bf16.msra.mxu0 %v5119
        %5133 = vmatpush.bf16.msra.mxu0 %v5118
        %5134 = vmatpush.bf16.msra.mxu0 %v5117
        %5135 = vmatpush.bf16.msra.mxu0 %v5116
        %5136 = vmatpush.bf16.msra.mxu0 %v5115
        %5137 = vmatpush.bf16.msra.mxu0 %v5114
        %5138 = vmatmul.bf16.gmra.mxu0 %v4449
        %v5139 = vpop.f32.mrf.mxu0
        %v5140 = vadd.f32 0.0, %v5139
        %v5141 = vpop.f32.mrf.mxu0
        %v5142 = vadd.f32 0.0, %v5141
        %5143 = vmatmul.bf16.gmra.mxu0 %v4448
        %v5144 = vpop.f32.mrf.mxu0
        %v5145 = vadd.f32 0.0, %v5144
        %v5146 = vpop.f32.mrf.mxu0
        %v5147 = vadd.f32 0.0, %v5146
        %5148 = vmatmul.bf16.gmra.mxu0 %v4450
        %v5149 = vpop.f32.mrf.mxu0
        %v5150 = vadd.f32 0.0, %v5149
        %v5151 = vpop.f32.mrf.mxu0
        %v5152 = vadd.f32 0.0, %v5151
        %5153 = vmatmul.bf16.gmra.mxu0 %v4451
        %v5154 = vpop.f32.mrf.mxu0
        %v5155 = vadd.f32 0.0, %v5154
        %v5156 = vpop.f32.mrf.mxu0
        %v5157 = vadd.f32 0.0, %v5156
        %5158 = vmatmul.bf16.gmra.mxu0 %v4452
        %v5159 = vpop.f32.mrf.mxu0
        %v5160 = vadd.f32 0.0, %v5159
        %v5161 = vpop.f32.mrf.mxu0
        %v5162 = vadd.f32 0.0, %v5161
        %5163 = vmatmul.bf16.gmra.mxu0 %v4453
        %v5164 = vpop.f32.mrf.mxu0
        %v5165 = vadd.f32 0.0, %v5164
        %v5166 = vpop.f32.mrf.mxu0
        %v5167 = vadd.f32 0.0, %v5166
        %5168 = vmatmul.bf16.gmra.mxu0 %v4454
        %v5169 = vpop.f32.mrf.mxu0
        %v5170 = vadd.f32 0.0, %v5169
        %v5171 = vpop.f32.mrf.mxu0
        %v5172 = vadd.f32 0.0, %v5171
        %5173 = vmatmul.bf16.gmra.mxu0 %v4455
        %v5174 = vpop.f32.mrf.mxu0
        %v5175 = vadd.f32 0.0, %v5174
        %v5176 = vpop.f32.mrf.mxu0
        %v5177 = vadd.f32 0.0, %v5176
        %5178 = vmatmul.bf16.gmra.mxu0 %v4456
        %v5179 = vpop.f32.mrf.mxu0
        %v5180 = vadd.f32 0.0, %v5179
        %v5181 = vpop.f32.mrf.mxu0
        %v5182 = vadd.f32 0.0, %v5181
        %5183 = vmatmul.bf16.gmra.mxu0 %v4457
        %v5184 = vpop.f32.mrf.mxu0
        %v5185 = vadd.f32 0.0, %v5184
        %v5186 = vpop.f32.mrf.mxu0
        %v5187 = vadd.f32 0.0, %v5186
        %5188 = vmatmul.bf16.gmra.mxu0 %v4458
        %v5189 = vpop.f32.mrf.mxu0
        %v5190 = vadd.f32 0.0, %v5189
        %v5191 = vpop.f32.mrf.mxu0
        %v5192 = vadd.f32 0.0, %v5191
        %5193 = vmatmul.bf16.gmra.mxu0 %v4459
        %v5194 = vpop.f32.mrf.mxu0
        %v5195 = vadd.f32 0.0, %v5194
        %v5196 = vpop.f32.mrf.mxu0
        %v5197 = vadd.f32 0.0, %v5196
        %5198 = vmatmul.bf16.gmra.mxu0 %v4460
        %v5199 = vpop.f32.mrf.mxu0
        %v5200 = vadd.f32 0.0, %v5199
        %v5201 = vpop.f32.mrf.mxu0
        %v5202 = vadd.f32 0.0, %v5201
        %5203 = vmatmul.bf16.gmra.mxu0 %v4461
        %v5204 = vpop.f32.mrf.mxu0
        %v5205 = vadd.f32 0.0, %v5204
        %v5206 = vpop.f32.mrf.mxu0
        %v5207 = vadd.f32 0.0, %v5206
        %5208 = vmatmul.bf16.gmra.mxu0 %v4462
        %v5209 = vpop.f32.mrf.mxu0
        %v5210 = vadd.f32 0.0, %v5209
        %v5211 = vpop.f32.mrf.mxu0
        %v5212 = vadd.f32 0.0, %v5211
        %5213 = vmatmul.bf16.gmra.mxu0 %v5080
        %v5214 = vpop.f32.mrf.mxu0
        %v5215 = vadd.f32 0.0, %v5214
        %v5216 = vpop.f32.mrf.mxu0
        %v5217 = vadd.f32 0.0, %v5216
        %5218 = vdwg.mxu0
        %v5219 = vadd.f32 %v5021, %v5140
        %v5220 = vadd.f32 %v5022, %v5142
        %v5221 = vadd.f32 %v5023, %v5145
        %v5222 = vadd.f32 %v5024, %v5147
        %v5223 = vadd.f32 %v5025, %v5150
        %v5224 = vadd.f32 %v5026, %v5152
        %v5225 = vadd.f32 %v5027, %v5155
        %v5226 = vadd.f32 %v5028, %v5157
        %v5227 = vadd.f32 %v5029, %v5160
        %v5228 = vadd.f32 %v5030, %v5162
        %v5229 = vadd.f32 %v5031, %v5165
        %v5230 = vadd.f32 %v5032, %v5167
        %v5231 = vadd.f32 %v5033, %v5170
        %v5232 = vadd.f32 %v5034, %v5172
        %v5233 = vadd.f32 %v5035, %v5175
        %v5234 = vadd.f32 %v5036, %v5177
        %v5235 = vadd.f32 %v5037, %v5180
        %v5236 = vadd.f32 %v5038, %v5182
        %v5237 = vadd.f32 %v5039, %v5185
        %v5238 = vadd.f32 %v5040, %v5187
        %v5239 = vadd.f32 %v5041, %v5190
        %v5240 = vadd.f32 %v5042, %v5192
        %v5241 = vadd.f32 %v5043, %v5195
        %v5242 = vadd.f32 %v5044, %v5197
        %v5243 = vadd.f32 %v5045, %v5200
        %v5244 = vadd.f32 %v5046, %v5202
        %v5245 = vadd.f32 %v5047, %v5205
        %v5246 = vadd.f32 %v5048, %v5207
        %v5247 = vadd.f32 %v5049, %v5210
        %v5248 = vadd.f32 %v5050, %v5212
        %v5249 = vadd.f32 %v5051, %v5215
        %v5250 = vadd.f32 %v5052, %v5217
        %s5251 = scalar_lea.vmem [#allocation7], 384
        %v5252 = vld [vmem:[%s5251] sm:$0xf]
        %v5253 = vld [vmem:[%s5251 + $0x4] sm:$0xf]
        %v5254 = vld [vmem:[%s5251 + $0x8] sm:$0xf]
        %v5255 = vld [vmem:[%s5251 + $0xc] sm:$0xf]
        %v5256 = vld [vmem:[%s5251 + $0x10] sm:$0xf]
        %v5257 = vld [vmem:[%s5251 + $0x14] sm:$0xf]
        %v5258 = vld [vmem:[%s5251 + $0x18] sm:$0xf]
        %v5259 = vld [vmem:[%s5251 + $0x1c] sm:$0xf]
        %v5260 = vld [vmem:[%s5251 + $0x20] sm:$0xf]
        %v5261 = vld [vmem:[%s5251 + $0x24] sm:$0xf]
        %v5262 = vld [vmem:[%s5251 + $0x28] sm:$0xf]
        %v5263 = vld [vmem:[%s5251 + $0x2c] sm:$0xf]
        %v5264 = vld [vmem:[%s5251 + $0x30] sm:$0xf]
        %v5265 = vld [vmem:[%s5251 + $0x34] sm:$0xf]
        %v5266 = vld [vmem:[%s5251 + $0x38] sm:$0xf]
        %v5267 = vld [vmem:[%s5251 + $0x3c] sm:$0xf]
        %v5284 = vunpack.c.l.b16 %v5252
        %v5285 = vunpack.c.l.b16 %v5253
        %v5286 = vunpack.c.l.b16 %v5254
        %v5287 = vunpack.c.l.b16 %v5255
        %v5288 = vunpack.c.l.b16 %v5256
        %v5289 = vunpack.c.l.b16 %v5257
        %v5290 = vunpack.c.l.b16 %v5258
        %v5291 = vunpack.c.l.b16 %v5259
        %v5292 = vunpack.c.l.b16 %v5260
        %v5293 = vunpack.c.l.b16 %v5261
        %v5294 = vunpack.c.l.b16 %v5262
        %v5295 = vunpack.c.l.b16 %v5263
        %v5296 = vunpack.c.l.b16 %v5264
        %v5297 = vunpack.c.l.b16 %v5265
        %v5298 = vunpack.c.l.b16 %v5266
        %v5299 = vunpack.c.l.b16 %v5267
        %v5300 = vpack.c.b16 %v5285, %v5284
        %v5301 = vpack.c.b16 %v5287, %v5286
        %v5302 = vpack.c.b16 %v5289, %v5288
        %v5303 = vpack.c.b16 %v5291, %v5290
        %v5304 = vpack.c.b16 %v5293, %v5292
        %v5305 = vpack.c.b16 %v5295, %v5294
        %v5306 = vpack.c.b16 %v5297, %v5296
        %v5307 = vpack.c.b16 %v5299, %v5298
        %5316 = vmatpush.bf16.msra.mxu0 %v5307
        %5317 = vmatpush.bf16.msra.mxu0 %v5306
        %5318 = vmatpush.bf16.msra.mxu0 %v5305
        %5319 = vmatpush.bf16.msra.mxu0 %v5304
        %5320 = vmatpush.bf16.msra.mxu0 %v5303
        %5321 = vmatpush.bf16.msra.mxu0 %v5302
        %5322 = vmatpush.bf16.msra.mxu0 %v5301
        %5323 = vmatpush.bf16.msra.mxu0 %v5300
        %5324 = vmatmul.bf16.gmra.mxu0 %v4114
        %v5325 = vpop.f32.mrf.mxu0
        %v5326 = vadd.f32 0.0, %v5325
        %v5327 = vpop.f32.mrf.mxu0
        %v5328 = vadd.f32 0.0, %v5327
        %5329 = vmatmul.bf16.gmra.mxu0 %v4116
        %v5330 = vpop.f32.mrf.mxu0
        %v5331 = vadd.f32 0.0, %v5330
        %v5332 = vpop.f32.mrf.mxu0
        %v5333 = vadd.f32 0.0, %v5332
        %5334 = vmatmul.bf16.gmra.mxu0 %v4117
        %v5335 = vpop.f32.mrf.mxu0
        %v5336 = vadd.f32 0.0, %v5335
        %v5337 = vpop.f32.mrf.mxu0
        %v5338 = vadd.f32 0.0, %v5337
        %5339 = vmatmul.bf16.gmra.mxu0 %v4118
        %v5340 = vpop.f32.mrf.mxu0
        %v5341 = vadd.f32 0.0, %v5340
        %v5342 = vpop.f32.mrf.mxu0
        %v5343 = vadd.f32 0.0, %v5342
        %5344 = vmatmul.bf16.gmra.mxu0 %v4119
        %v5345 = vpop.f32.mrf.mxu0
        %v5346 = vadd.f32 0.0, %v5345
        %v5347 = vpop.f32.mrf.mxu0
        %v5348 = vadd.f32 0.0, %v5347
        %5349 = vmatmul.bf16.gmra.mxu0 %v4120
        %v5350 = vpop.f32.mrf.mxu0
        %v5351 = vadd.f32 0.0, %v5350
        %v5352 = vpop.f32.mrf.mxu0
        %v5353 = vadd.f32 0.0, %v5352
        %5354 = vmatmul.bf16.gmra.mxu0 %v4121
        %v5355 = vpop.f32.mrf.mxu0
        %v5356 = vadd.f32 0.0, %v5355
        %v5357 = vpop.f32.mrf.mxu0
        %v5358 = vadd.f32 0.0, %v5357
        %5359 = vmatmul.bf16.gmra.mxu0 %v4122
        %v5360 = vpop.f32.mrf.mxu0
        %v5361 = vadd.f32 0.0, %v5360
        %v5362 = vpop.f32.mrf.mxu0
        %v5363 = vadd.f32 0.0, %v5362
        %5364 = vmatmul.bf16.gmra.mxu0 %v4123
        %v5365 = vpop.f32.mrf.mxu0
        %v5366 = vadd.f32 0.0, %v5365
        %v5367 = vpop.f32.mrf.mxu0
        %v5368 = vadd.f32 0.0, %v5367
        %5369 = vmatmul.bf16.gmra.mxu0 %v4124
        %v5370 = vpop.f32.mrf.mxu0
        %v5371 = vadd.f32 0.0, %v5370
        %v5372 = vpop.f32.mrf.mxu0
        %v5373 = vadd.f32 0.0, %v5372
        %5374 = vmatmul.bf16.gmra.mxu0 %v4125
        %v5375 = vpop.f32.mrf.mxu0
        %v5376 = vadd.f32 0.0, %v5375
        %v5377 = vpop.f32.mrf.mxu0
        %v5378 = vadd.f32 0.0, %v5377
        %5379 = vmatmul.bf16.gmra.mxu0 %v4126
        %v5380 = vpop.f32.mrf.mxu0
        %v5381 = vadd.f32 0.0, %v5380
        %v5382 = vpop.f32.mrf.mxu0
        %v5383 = vadd.f32 0.0, %v5382
        %5384 = vmatmul.bf16.gmra.mxu0 %v4127
        %v5385 = vpop.f32.mrf.mxu0
        %v5386 = vadd.f32 0.0, %v5385
        %v5387 = vpop.f32.mrf.mxu0
        %v5388 = vadd.f32 0.0, %v5387
        %5389 = vmatmul.bf16.gmra.mxu0 %v4128
        %v5390 = vpop.f32.mrf.mxu0
        %v5391 = vadd.f32 0.0, %v5390
        %v5392 = vpop.f32.mrf.mxu0
        %v5393 = vadd.f32 0.0, %v5392
        %5394 = vmatmul.bf16.gmra.mxu0 %v4668
        %v5395 = vpop.f32.mrf.mxu0
        %v5396 = vadd.f32 0.0, %v5395
        %v5397 = vpop.f32.mrf.mxu0
        %v5398 = vadd.f32 0.0, %v5397
        %5399 = vmatmul.bf16.gmra.mxu0 %v4128
        %v5400 = vpop.f32.mrf.mxu0
        %v5401 = vadd.f32 0.0, %v5400
        %v5402 = vpop.f32.mrf.mxu0
        %v5403 = vadd.f32 0.0, %v5402
        %5404 = vdwg.mxu0
        %v5405 = vadd.f32 %v5219, %v5326
        %v5406 = vadd.f32 %v5220, %v5328
        %v5407 = vadd.f32 %v5221, %v5331
        %v5408 = vadd.f32 %v5222, %v5333
        %v5409 = vadd.f32 %v5223, %v5336
        %v5410 = vadd.f32 %v5224, %v5338
        %v5411 = vadd.f32 %v5225, %v5341
        %v5412 = vadd.f32 %v5226, %v5343
        %v5413 = vadd.f32 %v5227, %v5346
        %v5414 = vadd.f32 %v5228, %v5348
        %v5415 = vadd.f32 %v5229, %v5351
        %v5416 = vadd.f32 %v5230, %v5353
        %v5417 = vadd.f32 %v5231, %v5356
        %v5418 = vadd.f32 %v5232, %v5358
        %v5419 = vadd.f32 %v5233, %v5361
        %v5420 = vadd.f32 %v5234, %v5363
        %v5421 = vadd.f32 %v5235, %v5366
        %v5422 = vadd.f32 %v5236, %v5368
        %v5423 = vadd.f32 %v5237, %v5371
        %v5424 = vadd.f32 %v5238, %v5373
        %v5425 = vadd.f32 %v5239, %v5376
        %v5426 = vadd.f32 %v5240, %v5378
        %v5427 = vadd.f32 %v5241, %v5381
        %v5428 = vadd.f32 %v5242, %v5383
        %v5429 = vadd.f32 %v5243, %v5386
        %v5430 = vadd.f32 %v5244, %v5388
        %v5431 = vadd.f32 %v5245, %v5391
        %v5432 = vadd.f32 %v5246, %v5393
        %v5433 = vadd.f32 %v5247, %v5396
        %v5434 = vadd.f32 %v5248, %v5398
        %v5435 = vadd.f32 %v5249, %v5401
        %v5436 = vadd.f32 %v5250, %v5403
        %s5437 = scalar_lea.vmem [#allocation7], 448
        %v5438 = vld [vmem:[%s5437] sm:$0xf]
        %v5439 = vld [vmem:[%s5437 + $0x4] sm:$0xf]
        %v5440 = vld [vmem:[%s5437 + $0x8] sm:$0xf]
        %v5441 = vld [vmem:[%s5437 + $0xc] sm:$0xf]
        %v5442 = vld [vmem:[%s5437 + $0x10] sm:$0xf]
        %v5443 = vld [vmem:[%s5437 + $0x14] sm:$0xf]
        %v5444 = vld [vmem:[%s5437 + $0x18] sm:$0xf]
        %v5445 = vld [vmem:[%s5437 + $0x1c] sm:$0xf]
        %v5446 = vld [vmem:[%s5437 + $0x20] sm:$0xf]
        %v5447 = vld [vmem:[%s5437 + $0x24] sm:$0xf]
        %v5448 = vld [vmem:[%s5437 + $0x28] sm:$0xf]
        %v5449 = vld [vmem:[%s5437 + $0x2c] sm:$0xf]
        %v5450 = vld [vmem:[%s5437 + $0x30] sm:$0xf]
        %v5451 = vld [vmem:[%s5437 + $0x34] sm:$0xf]
        %v5452 = vld [vmem:[%s5437 + $0x38] sm:$0xf]
        %v5453 = vld [vmem:[%s5437 + $0x3c] sm:$0xf]
        %v5470 = vunpack.c.l.b16 %v5438
        %v5471 = vunpack.c.l.b16 %v5439
        %v5472 = vunpack.c.l.b16 %v5440
        %v5473 = vunpack.c.l.b16 %v5441
        %v5474 = vunpack.c.l.b16 %v5442
        %v5475 = vunpack.c.l.b16 %v5443
        %v5476 = vunpack.c.l.b16 %v5444
        %v5477 = vunpack.c.l.b16 %v5445
        %v5478 = vunpack.c.l.b16 %v5446
        %v5479 = vunpack.c.l.b16 %v5447
        %v5480 = vunpack.c.l.b16 %v5448
        %v5481 = vunpack.c.l.b16 %v5449
        %v5482 = vunpack.c.l.b16 %v5450
        %v5483 = vunpack.c.l.b16 %v5451
        %v5484 = vunpack.c.l.b16 %v5452
        %v5485 = vunpack.c.l.b16 %v5453
        %v5486 = vpack.c.b16 %v5471, %v5470
        %v5487 = vpack.c.b16 %v5473, %v5472
        %v5488 = vpack.c.b16 %v5475, %v5474
        %v5489 = vpack.c.b16 %v5477, %v5476
        %v5490 = vpack.c.b16 %v5479, %v5478
        %v5491 = vpack.c.b16 %v5481, %v5480
        %v5492 = vpack.c.b16 %v5483, %v5482
        %v5493 = vpack.c.b16 %v5485, %v5484
        %5502 = vmatpush.bf16.msra.mxu0 %v5493
        %5503 = vmatpush.bf16.msra.mxu0 %v5492
        %5504 = vmatpush.bf16.msra.mxu0 %v5491
        %5505 = vmatpush.bf16.msra.mxu0 %v5490
        %5506 = vmatpush.bf16.msra.mxu0 %v5489
        %5507 = vmatpush.bf16.msra.mxu0 %v5488
        %5508 = vmatpush.bf16.msra.mxu0 %v5487
        %5509 = vmatpush.bf16.msra.mxu0 %v5486
        %5510 = vmatmul.bf16.gmra.mxu0 %v3887
        %v5511 = vpop.f32.mrf.mxu0
        %v5512 = vadd.f32 0.0, %v5511
        %v5513 = vpop.f32.mrf.mxu0
        %v5514 = vadd.f32 0.0, %v5513
        %5515 = vmatmul.bf16.gmra.mxu0 %v3889
        %v5516 = vpop.f32.mrf.mxu0
        %v5517 = vadd.f32 0.0, %v5516
        %v5518 = vpop.f32.mrf.mxu0
        %v5519 = vadd.f32 0.0, %v5518
        %5520 = vmatmul.bf16.gmra.mxu0 %v3890
        %v5521 = vpop.f32.mrf.mxu0
        %v5522 = vadd.f32 0.0, %v5521
        %v5523 = vpop.f32.mrf.mxu0
        %v5524 = vadd.f32 0.0, %v5523
        %5525 = vmatmul.bf16.gmra.mxu0 %v3891
        %v5526 = vpop.f32.mrf.mxu0
        %v5527 = vadd.f32 0.0, %v5526
        %v5528 = vpop.f32.mrf.mxu0
        %v5529 = vadd.f32 0.0, %v5528
        %5530 = vmatmul.bf16.gmra.mxu0 %v3892
        %v5531 = vpop.f32.mrf.mxu0
        %v5532 = vadd.f32 0.0, %v5531
        %v5533 = vpop.f32.mrf.mxu0
        %v5534 = vadd.f32 0.0, %v5533
        %5535 = vmatmul.bf16.gmra.mxu0 %v3893
        %v5536 = vpop.f32.mrf.mxu0
        %v5537 = vadd.f32 0.0, %v5536
        %v5538 = vpop.f32.mrf.mxu0
        %v5539 = vadd.f32 0.0, %v5538
        %5540 = vmatmul.bf16.gmra.mxu0 %v3894
        %v5541 = vpop.f32.mrf.mxu0
        %v5542 = vadd.f32 0.0, %v5541
        %v5543 = vpop.f32.mrf.mxu0
        %v5544 = vadd.f32 0.0, %v5543
        %5545 = vmatmul.bf16.gmra.mxu0 %v3895
        %v5546 = vpop.f32.mrf.mxu0
        %v5547 = vadd.f32 0.0, %v5546
        %v5548 = vpop.f32.mrf.mxu0
        %v5549 = vadd.f32 0.0, %v5548
        %5550 = vmatmul.bf16.gmra.mxu0 %v3896
        %v5551 = vpop.f32.mrf.mxu0
        %v5552 = vadd.f32 0.0, %v5551
        %v5553 = vpop.f32.mrf.mxu0
        %v5554 = vadd.f32 0.0, %v5553
        %5555 = vmatmul.bf16.gmra.mxu0 %v3897
        %v5556 = vpop.f32.mrf.mxu0
        %v5557 = vadd.f32 0.0, %v5556
        %v5558 = vpop.f32.mrf.mxu0
        %v5559 = vadd.f32 0.0, %v5558
        %5560 = vmatmul.bf16.gmra.mxu0 %v3898
        %v5561 = vpop.f32.mrf.mxu0
        %v5562 = vadd.f32 0.0, %v5561
        %v5563 = vpop.f32.mrf.mxu0
        %v5564 = vadd.f32 0.0, %v5563
        %5565 = vmatmul.bf16.gmra.mxu0 %v3899
        %v5566 = vpop.f32.mrf.mxu0
        %v5567 = vadd.f32 0.0, %v5566
        %v5568 = vpop.f32.mrf.mxu0
        %v5569 = vadd.f32 0.0, %v5568
        %5570 = vmatmul.bf16.gmra.mxu0 %v3900
        %v5571 = vpop.f32.mrf.mxu0
        %v5572 = vadd.f32 0.0, %v5571
        %v5573 = vpop.f32.mrf.mxu0
        %v5574 = vadd.f32 0.0, %v5573
        %5575 = vmatmul.bf16.gmra.mxu0 %v3901
        %v5576 = vpop.f32.mrf.mxu0
        %v5577 = vadd.f32 0.0, %v5576
        %v5578 = vpop.f32.mrf.mxu0
        %v5579 = vadd.f32 0.0, %v5578
        %5580 = vmatmul.bf16.gmra.mxu0 %v4882
        %v5581 = vpop.f32.mrf.mxu0
        %v5582 = vadd.f32 0.0, %v5581
        %v5583 = vpop.f32.mrf.mxu0
        %v5584 = vadd.f32 0.0, %v5583
        %5585 = vmatmul.bf16.gmra.mxu0 %v3901
        %v5586 = vpop.f32.mrf.mxu0
        %v5587 = vadd.f32 0.0, %v5586
        %v5588 = vpop.f32.mrf.mxu0
        %v5589 = vadd.f32 0.0, %v5588
        %5590 = vdwg.mxu0
        %v5591 = vadd.f32 %v5405, %v5512
        %v5592 = vadd.f32 %v5406, %v5514
        %v5593 = vadd.f32 %v5407, %v5517
        %v5594 = vadd.f32 %v5408, %v5519
        %v5595 = vadd.f32 %v5409, %v5522
        %v5596 = vadd.f32 %v5410, %v5524
        %v5597 = vadd.f32 %v5411, %v5527
        %v5598 = vadd.f32 %v5412, %v5529
        %v5599 = vadd.f32 %v5413, %v5532
        %v5600 = vadd.f32 %v5414, %v5534
        %v5601 = vadd.f32 %v5415, %v5537
        %v5602 = vadd.f32 %v5416, %v5539
        %v5603 = vadd.f32 %v5417, %v5542
        %v5604 = vadd.f32 %v5418, %v5544
        %v5605 = vadd.f32 %v5419, %v5547
        %v5606 = vadd.f32 %v5420, %v5549
        %v5607 = vadd.f32 %v5421, %v5552
        %v5608 = vadd.f32 %v5422, %v5554
        %v5609 = vadd.f32 %v5423, %v5557
        %v5610 = vadd.f32 %v5424, %v5559
        %v5611 = vadd.f32 %v5425, %v5562
        %v5612 = vadd.f32 %v5426, %v5564
        %v5613 = vadd.f32 %v5427, %v5567
        %v5614 = vadd.f32 %v5428, %v5569
        %v5615 = vadd.f32 %v5429, %v5572
        %v5616 = vadd.f32 %v5430, %v5574
        %v5617 = vadd.f32 %v5431, %v5577
        %v5618 = vadd.f32 %v5432, %v5579
        %v5619 = vadd.f32 %v5433, %v5582
        %v5620 = vadd.f32 %v5434, %v5584
        %v5621 = vadd.f32 %v5435, %v5587
        %v5622 = vadd.f32 %v5436, %v5589
        %s5623 = scalar_lea.vmem [#allocation7], 512
        %v5624 = vld [vmem:[%s5623] sm:$0xf]
        %v5625 = vld [vmem:[%s5623 + $0x4] sm:$0xf]
        %v5626 = vld [vmem:[%s5623 + $0x8] sm:$0xf]
        %v5627 = vld [vmem:[%s5623 + $0xc] sm:$0xf]
        %v5628 = vld [vmem:[%s5623 + $0x10] sm:$0xf]
        %v5629 = vld [vmem:[%s5623 + $0x14] sm:$0xf]
        %v5630 = vld [vmem:[%s5623 + $0x18] sm:$0xf]
        %v5631 = vld [vmem:[%s5623 + $0x1c] sm:$0xf]
        %v5632 = vld [vmem:[%s5623 + $0x20] sm:$0xf]
        %v5633 = vld [vmem:[%s5623 + $0x24] sm:$0xf]
        %v5634 = vld [vmem:[%s5623 + $0x28] sm:$0xf]
        %v5635 = vld [vmem:[%s5623 + $0x2c] sm:$0xf]
        %v5636 = vld [vmem:[%s5623 + $0x30] sm:$0xf]
        %v5637 = vld [vmem:[%s5623 + $0x34] sm:$0xf]
        %v5638 = vld [vmem:[%s5623 + $0x38] sm:$0xf]
        %v5639 = vld [vmem:[%s5623 + $0x3c] sm:$0xf]
        %v5656 = vunpack.c.l.b16 %v5624
        %v5657 = vunpack.c.l.b16 %v5625
        %v5658 = vunpack.c.l.b16 %v5626
        %v5659 = vunpack.c.l.b16 %v5627
        %v5660 = vunpack.c.l.b16 %v5628
        %v5661 = vunpack.c.l.b16 %v5629
        %v5662 = vunpack.c.l.b16 %v5630
        %v5663 = vunpack.c.l.b16 %v5631
        %v5664 = vunpack.c.l.b16 %v5632
        %v5665 = vunpack.c.l.b16 %v5633
        %v5666 = vunpack.c.l.b16 %v5634
        %v5667 = vunpack.c.l.b16 %v5635
        %v5668 = vunpack.c.l.b16 %v5636
        %v5669 = vunpack.c.l.b16 %v5637
        %v5670 = vunpack.c.l.b16 %v5638
        %v5671 = vunpack.c.l.b16 %v5639
        %v5672 = vpack.c.b16 %v5657, %v5656
        %v5673 = vpack.c.b16 %v5659, %v5658
        %v5674 = vpack.c.b16 %v5661, %v5660
        %v5675 = vpack.c.b16 %v5663, %v5662
        %v5676 = vpack.c.b16 %v5665, %v5664
        %v5677 = vpack.c.b16 %v5667, %v5666
        %v5678 = vpack.c.b16 %v5669, %v5668
        %v5679 = vpack.c.b16 %v5671, %v5670
        %5688 = vmatpush.bf16.msra.mxu0 %v5679
        %5689 = vmatpush.bf16.msra.mxu0 %v5678
        %5690 = vmatpush.bf16.msra.mxu0 %v5677
        %5691 = vmatpush.bf16.msra.mxu0 %v5676
        %5692 = vmatpush.bf16.msra.mxu0 %v5675
        %5693 = vmatpush.bf16.msra.mxu0 %v5674
        %5694 = vmatpush.bf16.msra.mxu0 %v5673
        %5695 = vmatpush.bf16.msra.mxu0 %v5672
        %5696 = vmatmul.bf16.gmra.mxu0 %v4448
        %v5697 = vpop.f32.mrf.mxu0
        %v5698 = vadd.f32 0.0, %v5697
        %v5699 = vpop.f32.mrf.mxu0
        %v5700 = vadd.f32 0.0, %v5699
        %5701 = vmatmul.bf16.gmra.mxu0 %v4450
        %v5702 = vpop.f32.mrf.mxu0
        %v5703 = vadd.f32 0.0, %v5702
        %v5704 = vpop.f32.mrf.mxu0
        %v5705 = vadd.f32 0.0, %v5704
        %5706 = vmatmul.bf16.gmra.mxu0 %v4451
        %v5707 = vpop.f32.mrf.mxu0
        %v5708 = vadd.f32 0.0, %v5707
        %v5709 = vpop.f32.mrf.mxu0
        %v5710 = vadd.f32 0.0, %v5709
        %5711 = vmatmul.bf16.gmra.mxu0 %v4452
        %v5712 = vpop.f32.mrf.mxu0
        %v5713 = vadd.f32 0.0, %v5712
        %v5714 = vpop.f32.mrf.mxu0
        %v5715 = vadd.f32 0.0, %v5714
        %5716 = vmatmul.bf16.gmra.mxu0 %v4453
        %v5717 = vpop.f32.mrf.mxu0
        %v5718 = vadd.f32 0.0, %v5717
        %v5719 = vpop.f32.mrf.mxu0
        %v5720 = vadd.f32 0.0, %v5719
        %5721 = vmatmul.bf16.gmra.mxu0 %v4454
        %v5722 = vpop.f32.mrf.mxu0
        %v5723 = vadd.f32 0.0, %v5722
        %v5724 = vpop.f32.mrf.mxu0
        %v5725 = vadd.f32 0.0, %v5724
        %5726 = vmatmul.bf16.gmra.mxu0 %v4455
        %v5727 = vpop.f32.mrf.mxu0
        %v5728 = vadd.f32 0.0, %v5727
        %v5729 = vpop.f32.mrf.mxu0
        %v5730 = vadd.f32 0.0, %v5729
        %5731 = vmatmul.bf16.gmra.mxu0 %v4456
        %v5732 = vpop.f32.mrf.mxu0
        %v5733 = vadd.f32 0.0, %v5732
        %v5734 = vpop.f32.mrf.mxu0
        %v5735 = vadd.f32 0.0, %v5734
        %5736 = vmatmul.bf16.gmra.mxu0 %v4457
        %v5737 = vpop.f32.mrf.mxu0
        %v5738 = vadd.f32 0.0, %v5737
        %v5739 = vpop.f32.mrf.mxu0
        %v5740 = vadd.f32 0.0, %v5739
        %5741 = vmatmul.bf16.gmra.mxu0 %v4458
        %v5742 = vpop.f32.mrf.mxu0
        %v5743 = vadd.f32 0.0, %v5742
        %v5744 = vpop.f32.mrf.mxu0
        %v5745 = vadd.f32 0.0, %v5744
        %5746 = vmatmul.bf16.gmra.mxu0 %v4459
        %v5747 = vpop.f32.mrf.mxu0
        %v5748 = vadd.f32 0.0, %v5747
        %v5749 = vpop.f32.mrf.mxu0
        %v5750 = vadd.f32 0.0, %v5749
        %5751 = vmatmul.bf16.gmra.mxu0 %v4460
        %v5752 = vpop.f32.mrf.mxu0
        %v5753 = vadd.f32 0.0, %v5752
        %v5754 = vpop.f32.mrf.mxu0
        %v5755 = vadd.f32 0.0, %v5754
        %5756 = vmatmul.bf16.gmra.mxu0 %v4461
        %v5757 = vpop.f32.mrf.mxu0
        %v5758 = vadd.f32 0.0, %v5757
        %v5759 = vpop.f32.mrf.mxu0
        %v5760 = vadd.f32 0.0, %v5759
        %5761 = vmatmul.bf16.gmra.mxu0 %v4462
        %v5762 = vpop.f32.mrf.mxu0
        %v5763 = vadd.f32 0.0, %v5762
        %v5764 = vpop.f32.mrf.mxu0
        %v5765 = vadd.f32 0.0, %v5764
        %5766 = vmatmul.bf16.gmra.mxu0 %v5080
        %v5767 = vpop.f32.mrf.mxu0
        %v5768 = vadd.f32 0.0, %v5767
        %v5769 = vpop.f32.mrf.mxu0
        %v5770 = vadd.f32 0.0, %v5769
        %5771 = vmatmul.bf16.gmra.mxu0 %v4462
        %v5772 = vpop.f32.mrf.mxu0
        %v5773 = vadd.f32 0.0, %v5772
        %v5774 = vpop.f32.mrf.mxu0
        %v5775 = vadd.f32 0.0, %v5774
        %5776 = vdwg.mxu0
        %v5777 = vadd.f32 %v5591, %v5698
        %v5778 = vadd.f32 %v5592, %v5700
        %v5779 = vadd.f32 %v5593, %v5703
        %v5780 = vadd.f32 %v5594, %v5705
        %v5781 = vadd.f32 %v5595, %v5708
        %v5782 = vadd.f32 %v5596, %v5710
        %v5783 = vadd.f32 %v5597, %v5713
        %v5784 = vadd.f32 %v5598, %v5715
        %v5785 = vadd.f32 %v5599, %v5718
        %v5786 = vadd.f32 %v5600, %v5720
        %v5787 = vadd.f32 %v5601, %v5723
        %v5788 = vadd.f32 %v5602, %v5725
        %v5789 = vadd.f32 %v5603, %v5728
        %v5790 = vadd.f32 %v5604, %v5730
        %v5791 = vadd.f32 %v5605, %v5733
        %v5792 = vadd.f32 %v5606, %v5735
        %v5793 = vadd.f32 %v5607, %v5738
        %v5794 = vadd.f32 %v5608, %v5740
        %v5795 = vadd.f32 %v5609, %v5743
        %v5796 = vadd.f32 %v5610, %v5745
        %v5797 = vadd.f32 %v5611, %v5748
        %v5798 = vadd.f32 %v5612, %v5750
        %v5799 = vadd.f32 %v5613, %v5753
        %v5800 = vadd.f32 %v5614, %v5755
        %v5801 = vadd.f32 %v5615, %v5758
        %v5802 = vadd.f32 %v5616, %v5760
        %v5803 = vadd.f32 %v5617, %v5763
        %v5804 = vadd.f32 %v5618, %v5765
        %v5805 = vadd.f32 %v5619, %v5768
        %v5806 = vadd.f32 %v5620, %v5770
        %v5807 = vadd.f32 %v5621, %v5773
        %v5808 = vadd.f32 %v5622, %v5775
        %v5809 = vld [vmem:[%s4] sm:$0x1]
        %v5811 = vperm.slane %v5809, 0
        %v5813 = vadd.f32 %v5777, %v5811
        %v5814 = vadd.f32 %v5778, %v5811
        %v5815 = vadd.f32 %v5779, %v5811
        %v5816 = vadd.f32 %v5780, %v5811
        %v5817 = vadd.f32 %v5781, %v5811
        %v5818 = vadd.f32 %v5782, %v5811
        %v5819 = vadd.f32 %v5783, %v5811
        %v5820 = vadd.f32 %v5784, %v5811
        %v5821 = vadd.f32 %v5785, %v5811
        %v5822 = vadd.f32 %v5786, %v5811
        %v5823 = vadd.f32 %v5787, %v5811
        %v5824 = vadd.f32 %v5788, %v5811
        %v5825 = vadd.f32 %v5789, %v5811
        %v5826 = vadd.f32 %v5790, %v5811
        %v5827 = vadd.f32 %v5791, %v5811
        %v5828 = vadd.f32 %v5792, %v5811
        %v5829 = vadd.f32 %v5793, %v5811
        %v5830 = vadd.f32 %v5794, %v5811
        %v5831 = vadd.f32 %v5795, %v5811
        %v5832 = vadd.f32 %v5796, %v5811
        %v5833 = vadd.f32 %v5797, %v5811
        %v5834 = vadd.f32 %v5798, %v5811
        %v5835 = vadd.f32 %v5799, %v5811
        %v5836 = vadd.f32 %v5800, %v5811
        %v5837 = vadd.f32 %v5801, %v5811
        %v5838 = vadd.f32 %v5802, %v5811
        %v5839 = vadd.f32 %v5803, %v5811
        %v5840 = vadd.f32 %v5804, %v5811
        %v5841 = vadd.f32 %v5805, %v5811
        %v5842 = vadd.f32 %v5806, %v5811
        %v5843 = vadd.f32 %v5807, %v5811
        %v5844 = vadd.f32 %v5808, %v5811
        %v5845 = vadd.f32 %v5813, %v5814
        %v5846 = vadd.f32 %v5845, %v5815
        %v5847 = vadd.f32 %v5846, %v5816
        %v5848 = vadd.f32 %v5847, %v5817
        %v5849 = vadd.f32 %v5848, %v5818
        %v5850 = vadd.f32 %v5849, %v5819
        %v5851 = vadd.f32 %v5850, %v5820
        %v5852 = vadd.f32 %v5851, %v5821
        %v5853 = vadd.f32 %v5852, %v5822
        %v5854 = vadd.f32 %v5853, %v5823
        %v5855 = vadd.f32 %v5854, %v5824
        %v5856 = vadd.f32 %v5855, %v5825
        %v5857 = vadd.f32 %v5856, %v5826
        %v5858 = vadd.f32 %v5857, %v5827
        %v5859 = vadd.f32 %v5858, %v5828
        %v5860 = vadd.f32 %v5859, %v5829
        %v5861 = vadd.f32 %v5860, %v5830
        %v5862 = vadd.f32 %v5861, %v5831
        %v5863 = vadd.f32 %v5862, %v5832
        %v5864 = vadd.f32 %v5863, %v5833
        %v5865 = vadd.f32 %v5864, %v5834
        %v5866 = vadd.f32 %v5865, %v5835
        %v5867 = vadd.f32 %v5866, %v5836
        %v5868 = vadd.f32 %v5867, %v5837
        %v5869 = vadd.f32 %v5868, %v5838
        %v5870 = vadd.f32 %v5869, %v5839
        %v5871 = vadd.f32 %v5870, %v5840
        %v5872 = vadd.f32 %v5871, %v5841
        %v5873 = vadd.f32 %v5872, %v5842
        %v5874 = vadd.f32 %v5873, %v5843
        %v5875 = vadd.f32 %v5874, %v5844
        %v5876 = vrot.slane %v5875, 4
        %v5877 = vadd.f32 %v5875, %v5876
        %v5878 = vrot.slane %v5877, 2
        %v5879 = vadd.f32 %v5877, %v5878
        %v5880 = vrot.slane %v5879, 1
        %v5881 = vadd.f32 %v5879, %v5880
        %v5882 = vmul.f32 %v5881, %v3013
        %v5883 = vsub.f32 %v5813, %v5882
        %v5884 = vsub.f32 %v5814, %v5882
        %v5885 = vsub.f32 %v5815, %v5882
        %v5886 = vsub.f32 %v5816, %v5882
        %v5887 = vsub.f32 %v5817, %v5882
        %v5888 = vsub.f32 %v5818, %v5882
        %v5889 = vsub.f32 %v5819, %v5882
        %v5890 = vsub.f32 %v5820, %v5882
        %v5891 = vsub.f32 %v5821, %v5882
        %v5892 = vsub.f32 %v5822, %v5882
        %v5893 = vsub.f32 %v5823, %v5882
        %v5894 = vsub.f32 %v5824, %v5882
        %v5895 = vsub.f32 %v5825, %v5882
        %v5896 = vsub.f32 %v5826, %v5882
        %v5897 = vsub.f32 %v5827, %v5882
        %v5898 = vsub.f32 %v5828, %v5882
        %v5899 = vsub.f32 %v5829, %v5882
        %v5900 = vsub.f32 %v5830, %v5882
        %v5901 = vsub.f32 %v5831, %v5882
        %v5902 = vsub.f32 %v5832, %v5882
        %v5903 = vsub.f32 %v5833, %v5882
        %v5904 = vsub.f32 %v5834, %v5882
        %v5905 = vsub.f32 %v5835, %v5882
        %v5906 = vsub.f32 %v5836, %v5882
        %v5907 = vsub.f32 %v5837, %v5882
        %v5908 = vsub.f32 %v5838, %v5882
        %v5909 = vsub.f32 %v5839, %v5882
        %v5910 = vsub.f32 %v5840, %v5882
        %v5911 = vsub.f32 %v5841, %v5882
        %v5912 = vsub.f32 %v5842, %v5882
        %v5913 = vsub.f32 %v5843, %v5882
        %v5914 = vsub.f32 %v5844, %v5882
        %v5915 = vmul.f32 %v5883, %v5883
        %v5916 = vmul.f32 %v5884, %v5884
        %v5917 = vmul.f32 %v5885, %v5885
        %v5918 = vmul.f32 %v5886, %v5886
        %v5919 = vmul.f32 %v5887, %v5887
        %v5920 = vmul.f32 %v5888, %v5888
        %v5921 = vmul.f32 %v5889, %v5889
        %v5922 = vmul.f32 %v5890, %v5890
        %v5923 = vmul.f32 %v5891, %v5891
        %v5924 = vmul.f32 %v5892, %v5892
        %v5925 = vmul.f32 %v5893, %v5893
        %v5926 = vmul.f32 %v5894, %v5894
        %v5927 = vmul.f32 %v5895, %v5895
        %v5928 = vmul.f32 %v5896, %v5896
        %v5929 = vmul.f32 %v5897, %v5897
        %v5930 = vmul.f32 %v5898, %v5898
        %v5931 = vmul.f32 %v5899, %v5899
        %v5932 = vmul.f32 %v5900, %v5900
        %v5933 = vmul.f32 %v5901, %v5901
        %v5934 = vmul.f32 %v5902, %v5902
        %v5935 = vmul.f32 %v5903, %v5903
        %v5936 = vmul.f32 %v5904, %v5904
        %v5937 = vmul.f32 %v5905, %v5905
        %v5938 = vmul.f32 %v5906, %v5906
        %v5939 = vmul.f32 %v5907, %v5907
        %v5940 = vmul.f32 %v5908, %v5908
        %v5941 = vmul.f32 %v5909, %v5909
        %v5942 = vmul.f32 %v5910, %v5910
        %v5943 = vmul.f32 %v5911, %v5911
        %v5944 = vmul.f32 %v5912, %v5912
        %v5945 = vmul.f32 %v5913, %v5913
        %v5946 = vmul.f32 %v5914, %v5914
        %v5947 = vadd.f32 %v5915, %v5916
        %v5948 = vadd.f32 %v5947, %v5917
        %v5949 = vadd.f32 %v5948, %v5918
        %v5950 = vadd.f32 %v5949, %v5919
        %v5951 = vadd.f32 %v5950, %v5920
        %v5952 = vadd.f32 %v5951, %v5921
        %v5953 = vadd.f32 %v5952, %v5922
        %v5954 = vadd.f32 %v5953, %v5923
        %v5955 = vadd.f32 %v5954, %v5924
        %v5956 = vadd.f32 %v5955, %v5925
        %v5957 = vadd.f32 %v5956, %v5926
        %v5958 = vadd.f32 %v5957, %v5927
        %v5959 = vadd.f32 %v5958, %v5928
        %v5960 = vadd.f32 %v5959, %v5929
        %v5961 = vadd.f32 %v5960, %v5930
        %v5962 = vadd.f32 %v5961, %v5931
        %v5963 = vadd.f32 %v5962, %v5932
        %v5964 = vadd.f32 %v5963, %v5933
        %v5965 = vadd.f32 %v5964, %v5934
        %v5966 = vadd.f32 %v5965, %v5935
        %v5967 = vadd.f32 %v5966, %v5936
        %v5968 = vadd.f32 %v5967, %v5937
        %v5969 = vadd.f32 %v5968, %v5938
        %v5970 = vadd.f32 %v5969, %v5939
        %v5971 = vadd.f32 %v5970, %v5940
        %v5972 = vadd.f32 %v5971, %v5941
        %v5973 = vadd.f32 %v5972, %v5942
        %v5974 = vadd.f32 %v5973, %v5943
        %v5975 = vadd.f32 %v5974, %v5944
        %v5976 = vadd.f32 %v5975, %v5945
        %v5977 = vadd.f32 %v5976, %v5946
        %v5978 = vrot.slane %v5977, 4
        %v5979 = vadd.f32 %v5977, %v5978
        %v5980 = vrot.slane %v5979, 2
        %v5981 = vadd.f32 %v5979, %v5980
        %v5982 = vrot.slane %v5981, 1
        %v5983 = vadd.f32 %v5981, %v5982
        %v5984 = vmul.f32 %v5983, %v3013
        %v5985 = vadd.f32 %v5984, 1e-05
        %v5986 = vrsqrt.pop %v5985
        %v5987 = vmul.f32 %v5986, %v5985
        %v5988 = vmul.f32 %v5987, %v5986
        %v5989 = vmul.f32 0.5, %v5988
        %v5990 = vsub.f32 1.5, %v5989
        %v5991 = vmul.f32 %v5986, %v5990
        %vm5992 = vweird.f32 %v5985
        %vm5993 = vweird.f32 %v5986
        %vm5994 = vmor %vm5992, %vm5993
        %v5995 = vsel %vm5994, %v5986, %v5991
        %v5996 = vmul.f32 %v5883, %v5995
        %v5997 = vmul.f32 %v5884, %v5995
        %v5998 = vmul.f32 %v5885, %v5995
        %v5999 = vmul.f32 %v5886, %v5995
        %v6000 = vmul.f32 %v5887, %v5995
        %v6001 = vmul.f32 %v5888, %v5995
        %v6002 = vmul.f32 %v5889, %v5995
        %v6003 = vmul.f32 %v5890, %v5995
        %v6004 = vmul.f32 %v5891, %v5995
        %v6005 = vmul.f32 %v5892, %v5995
        %v6006 = vmul.f32 %v5893, %v5995
        %v6007 = vmul.f32 %v5894, %v5995
        %v6008 = vmul.f32 %v5895, %v5995
        %v6009 = vmul.f32 %v5896, %v5995
        %v6010 = vmul.f32 %v5897, %v5995
        %v6011 = vmul.f32 %v5898, %v5995
        %v6012 = vmul.f32 %v5899, %v5995
        %v6013 = vmul.f32 %v5900, %v5995
        %v6014 = vmul.f32 %v5901, %v5995
        %v6015 = vmul.f32 %v5902, %v5995
        %v6016 = vmul.f32 %v5903, %v5995
        %v6017 = vmul.f32 %v5904, %v5995
        %v6018 = vmul.f32 %v5905, %v5995
        %v6019 = vmul.f32 %v5906, %v5995
        %v6020 = vmul.f32 %v5907, %v5995
        %v6021 = vmul.f32 %v5908, %v5995
        %v6022 = vmul.f32 %v5909, %v5995
        %v6023 = vmul.f32 %v5910, %v5995
        %v6024 = vmul.f32 %v5911, %v5995
        %v6025 = vmul.f32 %v5912, %v5995
        %v6026 = vmul.f32 %v5913, %v5995
        %v6027 = vmul.f32 %v5914, %v5995
        %v6028 = vadd.f32 %v278, %v5996
        %v6029 = vadd.f32 %v279, %v5997
        %v6030 = vadd.f32 %v280, %v5998
        %v6031 = vadd.f32 %v281, %v5999
        %v6032 = vadd.f32 %v282, %v6000
        %v6033 = vadd.f32 %v283, %v6001
        %v6034 = vadd.f32 %v284, %v6002
        %v6035 = vadd.f32 %v285, %v6003
        %v6036 = vadd.f32 %v286, %v6004
        %v6037 = vadd.f32 %v287, %v6005
        %v6038 = vadd.f32 %v288, %v6006
        %v6039 = vadd.f32 %v289, %v6007
        %v6040 = vadd.f32 %v290, %v6008
        %v6041 = vadd.f32 %v291, %v6009
        %v6042 = vadd.f32 %v292, %v6010
        %v6043 = vadd.f32 %v293, %v6011
        %v6044 = vadd.f32 %v294, %v6012
        %v6045 = vadd.f32 %v295, %v6013
        %v6046 = vadd.f32 %v296, %v6014
        %v6047 = vadd.f32 %v297, %v6015
        %v6048 = vadd.f32 %v298, %v6016
        %v6049 = vadd.f32 %v299, %v6017
        %v6050 = vadd.f32 %v300, %v6018
        %v6051 = vadd.f32 %v301, %v6019
        %v6052 = vadd.f32 %v302, %v6020
        %v6053 = vadd.f32 %v303, %v6021
        %v6054 = vadd.f32 %v304, %v6022
        %v6055 = vadd.f32 %v305, %v6023
        %v6056 = vadd.f32 %v306, %v6024
        %v6057 = vadd.f32 %v307, %v6025
        %v6058 = vadd.f32 %v308, %v6026
        %v6059 = vadd.f32 %v309, %v6027
        %6060 = vst [vmem:[%s277] sm:$0xff] %v6028
        %6061 = vst [vmem:[%s277 + $0x8] sm:$0xff] %v6029
        %6062 = vst [vmem:[%s277 + $0x10] sm:$0xff] %v6030
        %6063 = vst [vmem:[%s277 + $0x18] sm:$0xff] %v6031
        %6064 = vst [vmem:[%s277 + $0x20] sm:$0xff] %v6032
        %6065 = vst [vmem:[%s277 + $0x28] sm:$0xff] %v6033
        %6066 = vst [vmem:[%s277 + $0x30] sm:$0xff] %v6034
        %6067 = vst [vmem:[%s277 + $0x38] sm:$0xff] %v6035
        %6068 = vst [vmem:[%s277 + $0x40] sm:$0xff] %v6036
        %6069 = vst [vmem:[%s277 + $0x48] sm:$0xff] %v6037
        %6070 = vst [vmem:[%s277 + $0x50] sm:$0xff] %v6038
        %6071 = vst [vmem:[%s277 + $0x58] sm:$0xff] %v6039
        %6072 = vst [vmem:[%s277 + $0x60] sm:$0xff] %v6040
        %6073 = vst [vmem:[%s277 + $0x68] sm:$0xff] %v6041
        %6074 = vst [vmem:[%s277 + $0x70] sm:$0xff] %v6042
        %6075 = vst [vmem:[%s277 + $0x78] sm:$0xff] %v6043
        %6076 = vst [vmem:[%s277 + $0x80] sm:$0xff] %v6044
        %6077 = vst [vmem:[%s277 + $0x88] sm:$0xff] %v6045
        %6078 = vst [vmem:[%s277 + $0x90] sm:$0xff] %v6046
        %6079 = vst [vmem:[%s277 + $0x98] sm:$0xff] %v6047
        %6080 = vst [vmem:[%s277 + $0xa0] sm:$0xff] %v6048
        %6081 = vst [vmem:[%s277 + $0xa8] sm:$0xff] %v6049
        %6082 = vst [vmem:[%s277 + $0xb0] sm:$0xff] %v6050
        %6083 = vst [vmem:[%s277 + $0xb8] sm:$0xff] %v6051
        %6084 = vst [vmem:[%s277 + $0xc0] sm:$0xff] %v6052
        %6085 = vst [vmem:[%s277 + $0xc8] sm:$0xff] %v6053
        %6086 = vst [vmem:[%s277 + $0xd0] sm:$0xff] %v6054
        %6087 = vst [vmem:[%s277 + $0xd8] sm:$0xff] %v6055
        %6088 = vst [vmem:[%s277 + $0xe0] sm:$0xff] %v6056
        %6089 = vst [vmem:[%s277 + $0xe8] sm:$0xff] %v6057
        %6090 = vst [vmem:[%s277 + $0xf0] sm:$0xff] %v6058
        %6091 = vst [vmem:[%s277 + $0xf8] sm:$0xff] %v6059
        %s6092 = sand.u32 %s141, 1
        %s6093 = scalar_lea.sflag [#allocation4], %s6092
        %s6094 = sand.u32 %s141, 1
        %s6095 = smul.addr %s6094, 256
        %s6096 = scalar_lea.vmem [#allocation8], %s6095
        // Predicated region
        $region53: #{residual_block_forward.1} parent=39 // pred_check
          %p6097 = pneg %p151
        $region54: #{residual_block_forward.1} parent=39 // pred_check_branch
          %6099 = sbr.rel (%p6097) target = $region56
        $region55: #{residual_block_forward.1} parent=39 // pred_region
          %6101 = vsyncadd %s6093, 0
          %s6102 = smul.addr %s23, 32
          %s6103 = smul.addr %s6102, 8
          %s6104 = scalar_lea.hbm %s5, %s6103
          %s6105 = sshll.u32 %s6096, 4
          %s6106 = int_to_ptr.vmem [resolvable:$true] %s6105
          %s6107 = sshll.u32 %s6104, 4
          %s6108 = int_to_ptr.hbm [resolvable:$true] %s6107
          %6113 = dma.vmem_to_hbm [thread:$0]  %s6106, 4096, %s6108, %s6093, 128, 128, 8
        $region56: #{residual_block_forward.1} parent=39 // pred_fallthru
          _
      $region40: #{residual_block_forward.1} parent=5 // pred_fallthru
        _
      %p6114 = scmp.le.s32.totalorder 2, %s18
      // Predicated region
      $region57: #{residual_block_forward.1} parent=5 // pred_check
        %p6115 = pneg %p6114
      $region58: #{residual_block_forward.1} parent=5 // pred_check_branch
        %6117 = sbr.rel (%p6115) target = $region60
      $region59: #{residual_block_forward.1} parent=5 // pred_region
        %s6118 = ssub.s32 %s18, 2
        // Predicated region
        $region61: #{residual_block_forward.1} parent=59 // pred_check
          %p6119 = pneg %p157
        $region62: #{residual_block_forward.1} parent=59 // pred_check_branch
          %6121 = sbr.rel (%p6119) target = $region64
        $region63: #{residual_block_forward.1} parent=59 // pred_region
          %s6122 = sand.u32 %s142, 1
          %s6123 = scalar_lea.sflag [#allocation4], %s6122
          %s6124 = sand.u32 %s142, 1
          %s6125 = smul.addr %s6124, 256
          %s6126 = scalar_lea.vmem [#allocation8], %s6125
          %6128 = dma.done %s6123, 4096
        $region64: #{residual_block_forward.1} parent=59 // pred_fallthru
          _
      $region60: #{residual_block_forward.1} parent=5 // pred_fallthru
        _
    $region6: #{residual_block_forward.1} parent=1 // loop_footer
      %s22 = sadd.s32 1, %s18
    $region7: #{residual_block_forward.1} parent=1 // loop_footer_branch
      %17 = sbr.rel target = $region3
    $region8: #{residual_block_forward.1} parent=1 // loop_exit
      _
    %6129 = vsyncpa [#allocation3], 1
    %s6130 = scalar_lea.sflag [#allocation3], 1
    %6131 = vsyncpa %s6130, 1
    %6132 = vsyncpa [#allocation6], 1
    %6133 = vsyncpa [#allocation4], 1
    %s6134 = scalar_lea.sflag [#allocation4], 1
    %6135 = vsyncpa %s6134, 1

</llo_original>
